<compile_context>
chip_gen: v5e
topology: v5e:2x2
jax: 0.10.0
libtpu: 0.0.40
codegen_flags: <defaults>
</compile_context>

<pallas_src>
import functools

import jax
import jax.numpy as jnp
from jax.experimental import pallas as pl
from jax.experimental.pallas import tpu as pltpu


def _round_up(x, m):
    return ((x + m - 1) // m) * m


@functools.lru_cache(maxsize=1)
def _chip_defaults():
    """Returns (cout_tile, vmem_limit_bytes) for the local TPU generation."""
    try:
        kind = jax.devices()[0].device_kind.lower()
    except Exception:  # pragma: no cover - no device visible
        kind = ""
    if "v7" in kind:
        return 256, 48 * 1024 * 1024          # v7x: 64 MiB physical VMEM -> headroom
    if "v5 lite" in kind or "v5e" in kind or "v5lite" in kind:
        return 128, 100 * 1024 * 1024         # v5e: 128-wide MXU, 128 MiB VMEM
    if "v6" in kind or "trillium" in kind:
        return 256, 100 * 1024 * 1024         # v6e: 256-wide MXU, 128 MiB VMEM
    return 256, 64 * 1024 * 1024              # unknown: conservative middle ground


def _pick_batch_block(N, H, W):
    """Fold batch into the matmul M dim when the spatial area is small."""
    if H * W >= 128:
        return 1
    cap = min(N, max(1, 256 // (H * W)))
    for cand in range(cap, 0, -1):
        if N % cand == 0:
            return cand
    return 1


# ----------------------------- Pallas kernel ------------------------------- #

def _conv3x3_kernel(x_ref, w_ref, b_ref, o_ref, xp_ref, patch_ref, *, pool):
    """3x3 same-conv + bias + ReLU (+ fused 2x2 maxpool) for a block of images.

    x_ref:     (Nb, H, W, Cin)        input activations (bf16, unpadded)
    w_ref:     (9*seg, TCout)         packed conv taps, tap = dh*3+dw (bf16)
    b_ref:     (1, TCout)             bias (f32)
    o_ref:     (Nb, Ho, Wo, TCout)    output (bf16); Ho,Wo = H//2,W//2 if pool
    xp_ref:    (Nb, H+2, W+2, Cin)    VMEM scratch, zero halo built in-kernel
    patch_ref: (Nb*H*W, 9*seg)        VMEM scratch, im2col slab
    """
    nb, H, W, cin = x_ref.shape
    seg = w_ref.shape[0] // 9
    tco = w_ref.shape[1]
    m = nb * H * W

    # In-kernel zero halo: no HBM-side pad round trip.
    xp_ref[...] = jnp.zeros_like(xp_ref)
    xp_ref[:, 1:H + 1, 1:W + 1, :] = x_ref[...]

    # Only the first conv (Cin=3 -> seg=128) has lane-padded tap segments;
    # zero the slab once so the padded columns contribute exact zeros.
    if seg != cin:
        patch_ref[...] = jnp.zeros_like(patch_ref)

    # Build the im2col slab: one copy per tap, lane-aligned column offsets.
    for dh in range(3):
        for dw in range(3):
            tap = dh * 3 + dw
            patch_ref[:, tap * seg:tap * seg + cin] = (
                xp_ref[:, dh:dh + H, dw:dw + W, :].reshape(m, cin))

    # Single MXU matmul with K = 9*seg; accumulation stays inside the MXU.
    acc = jnp.dot(patch_ref[...], w_ref[...], preferred_element_type=jnp.float32)
    acc = jnp.maximum(acc + b_ref[...], 0.0)          # bias + ReLU in f32

    if pool:
        # 2x2 max-pool as two small axis-1 maxes (no big 5-D regroup).
        y = jnp.max(acc.reshape(nb * H * (W // 2), 2, tco), axis=1)     # pool W
        y = jnp.max(y.reshape(nb * (H // 2), 2, W // 2, tco), axis=1)   # pool H
        y = y.reshape(nb, H // 2, W // 2, tco)
    else:
        y = acc.reshape(nb, H, W, tco)
    o_ref[...] = y.astype(o_ref.dtype)


# ------------------------------ op wrapper --------------------------------- #

def conv3x3_relu(x, w_mat, b_row, pool):
    """x: (N,H,W,Cin) bf16; w_mat: (9*seg,Cout_pad) bf16; b_row: (1,Cout_pad) f32.

    Returns (N, Ho, Wo, Cout_pad) bf16 with ReLU applied; 2x2-pooled if `pool`.
    """
    N, H, W, Cin = x.shape
    seg = w_mat.shape[0] // 9
    Cout = w_mat.shape[1]
    assert w_mat.shape[0] == 9 * seg and seg >= Cin
    if pool:
        assert H % 2 == 0 and W % 2 == 0, "maxpool2x2 requires even spatial dims"
    Ho, Wo = (H // 2, W // 2) if pool else (H, W)

    cout_tile, vmem_limit = _chip_defaults()
    tco = min(Cout, cout_tile)
    assert Cout % tco == 0, f"Cout {Cout} not divisible by tile {tco}"
    n_co = Cout // tco

    nb = _pick_batch_block(N, H, W)
    n_grp = N // nb

    kernel = functools.partial(_conv3x3_kernel, pool=pool)
    # TODO(synk): for very large spatial maps a halo-ed row-band grid axis would
    # further grow the grid; unnecessary at these VGG feature-map sizes.
    out = pl.pallas_call(
        kernel,
        out_shape=jax.ShapeDtypeStruct((N, Ho, Wo, Cout), jnp.bfloat16),
        grid=(n_grp, n_co),
        in_specs=[
            pl.BlockSpec((nb, H, W, Cin), lambda g, co: (g, 0, 0, 0)),
            pl.BlockSpec((9 * seg, tco), lambda g, co: (0, co)),
            pl.BlockSpec((1, tco), lambda g, co: (0, co)),
        ],
        out_specs=pl.BlockSpec((nb, Ho, Wo, tco), lambda g, co: (g, 0, 0, co)),
        scratch_shapes=[
            pltpu.VMEM((nb, H + 2, W + 2, Cin), jnp.bfloat16),
            pltpu.VMEM((nb * H * W, 9 * seg), jnp.bfloat16),
        ],
        compiler_params=pltpu.CompilerParams(
            dimension_semantics=("parallel", "parallel"),
            vmem_limit_bytes=vmem_limit),
    )(x, w_mat, b_row)
    return out


# ------------------------------ VGG_16 model -------------------------------- #

class VGG16Pallas:
    LAYERS = ['conv1_1', 'conv1_2', 'maxpool1', 'conv2_1', 'conv2_2', 'maxpool2',
              'conv3_1', 'conv3_2', 'conv3_3', 'maxpool3', 'conv4_1', 'conv4_2',
              'conv4_3', 'maxpool4', 'conv5_1', 'conv5_2', 'conv5_3']
    FILTERS = [64, 64, 64, 128, 128, 128, 256, 256, 256, 256, 512, 512, 512,
               512, 512, 512, 512]

    def __init__(self, key, n_layers=17):
        # TODO(synk): weight-file loading / layer freezing (autograd flags) have no
        # Pallas equivalent; parameters are initialized deterministically instead.
        self.layers = self.LAYERS[:n_layers]
        self.filters = self.FILTERS[:n_layers]
        self.params = {}
        self.out_channels = 3
        prev_fan = 3        # logical channels of incoming activation
        act_ch = 3          # lane-padded channels the previous layer emits
        for l, f in zip(self.layers, self.filters):
            if 'conv' in l:
                key, kw, kb = jax.random.split(key, 3)
                bound = (prev_fan * 9) ** -0.5          # kaiming-uniform-like bound
                w = jax.random.uniform(kw, (f, prev_fan, 3, 3), jnp.float32,
                                       -bound, bound)
                b = jax.random.uniform(kb, (f,), jnp.float32, -bound, bound)
                self.params[l] = self._pack(w, b, act_ch)
                self.out_channels = f
                act_ch = _round_up(f, 128)
            prev_fan = f

    @staticmethod
    def _pack(w, b, cin_act):
        """Pre-pack torch-layout weights once: (Cout,Cin,3,3) -> (9*seg, Cout_pad)."""
        cout, cin = w.shape[0], w.shape[1]
        seg = _round_up(cin_act, 128)          # lane-aligned tap segment width
        cout_pad = _round_up(cout, 128)
        wt = jnp.transpose(w, (2, 3, 1, 0)).reshape(9, cin, cout)   # tap, cin, cout
        w_full = jnp.zeros((9, seg, cout_pad), jnp.float32)
        w_full = w_full.at[:, :cin, :cout].set(wt)
        w_mat = w_full.reshape(9 * seg, cout_pad).astype(jnp.bfloat16)
        b_row = jnp.zeros((1, cout_pad), jnp.float32).at[0, :cout].set(b)
        return w_mat, b_row

    def __call__(self, x_nchw):
        # Accept NCHW like the PyTorch module, compute in NHWC bf16, return NCHW f32.
        # Every maxpool is fused into the preceding conv's epilogue.
        x = jnp.transpose(x_nchw, (0, 2, 3, 1)).astype(jnp.bfloat16)
        i = 0
        while i < len(self.layers):
            l = self.layers[i]
            assert 'conv' in l, f"unexpected standalone layer {l}"
            w_mat, b_row = self.params[l]
            fuse_pool = (i + 1 < len(self.layers)
                         and 'maxpool' in self.layers[i + 1])
            x = conv3x3_relu(x, w_mat, b_row, pool=fuse_pool)
            i += 2 if fuse_pool else 1
        x = x[..., :self.out_channels]          # drop lane padding (conv1 block only)
        return jnp.transpose(x, (0, 3, 1, 2)).astype(jnp.float32)


# ---------------------------------- main ------------------------------------ #

if __name__ == "__main__":
    key = jax.random.PRNGKey(0)
    key, k_in = jax.random.split(key)
    # small but consistent with the module: batch=2, RGB input, 16x16 spatial
    x = jax.random.normal(k_in, (2, 3, 16, 16), dtype=jnp.float32)

    model = VGG16Pallas(key, n_layers=17)
    out = model(x)
    out = jax.block_until_ready(out)

    assert out.shape == (2, 512, 1, 1), out.shape   # 16 -> 8 -> 4 -> 2 -> 1 spatial
    assert bool(jnp.all(jnp.isfinite(out)))
    assert bool(jnp.all(out >= 0.0))                # final op is ReLU
    print("KERNEL_OK")
</pallas_src>

<mosaic_0001>
module attributes {stable_mosaic.version = 11 : i64} {
  func.func @_conv3x3_kernel(%arg0: i32, %arg1: i32, %arg2: memref<1x16x16x3xbf16, #tpu.memory_space<vmem>>, %arg3: memref<1152x128xbf16, #tpu.memory_space<vmem>>, %arg4: memref<1x128xf32, #tpu.memory_space<vmem>>, %arg5: memref<1x16x16x128xbf16, #tpu.memory_space<vmem>>, %arg6: memref<1x18x18x3xbf16, #tpu.memory_space<vmem>>, %arg7: memref<256x1152xbf16, #tpu.memory_space<vmem>>) attributes {dimension_semantics = [#tpu.dimension_semantics<parallel>, #tpu.dimension_semantics<parallel>], iteration_bounds = array<i64: 2, 1>, scalar_prefetch = 0 : i64, scratch_operands = 2 : i64, tpu.core_type = #tpu.core_type<tc>, window_params = [{transform_indices = @transform_0, window_bounds = array<i64: 1, 16, 16, 3>}, {transform_indices = @transform_1, window_bounds = array<i64: 1152, 128>}, {transform_indices = @transform_2, window_bounds = array<i64: 1, 128>}, {transform_indices = @transform_3, window_bounds = array<i64: 1, 16, 16, 128>}]} {
    %cst = arith.constant 0.000000e+00 : bf16
    %0 = vector.broadcast %cst : bf16 to vector<1x18x18x3xbf16>
    %c0 = arith.constant 0 : index
    %c0_0 = arith.constant 0 : index
    %c0_1 = arith.constant 0 : index
    %c0_2 = arith.constant 0 : index
    %1 = vector.load %arg6[%c0, %c0_0, %c0_1, %c0_2] : memref<1x18x18x3xbf16, #tpu.memory_space<vmem>>, vector<1x18x18x3xbf16>
    tpu.vector_store %arg6[%c0, %c0_0, %c0_1, %c0_2], %0 {strides = array<i32>} : memref<1x18x18x3xbf16, #tpu.memory_space<vmem>>, vector<1x18x18x3xbf16>,
    %c0_3 = arith.constant 0 : index
    %c0_4 = arith.constant 0 : index
    %c0_5 = arith.constant 0 : index
    %c0_6 = arith.constant 0 : index
    %2 = vector.load %arg2[%c0_3, %c0_4, %c0_5, %c0_6] : memref<1x16x16x3xbf16, #tpu.memory_space<vmem>>, vector<1x16x16x3xbf16>
    %c0_7 = arith.constant 0 : index
    %c1 = arith.constant 1 : index
    %c1_8 = arith.constant 1 : index
    %c0_9 = arith.constant 0 : index
    %3 = vector.load %arg6[%c0_7, %c1, %c1_8, %c0_9] : memref<1x18x18x3xbf16, #tpu.memory_space<vmem>>, vector<1x16x16x3xbf16>
    tpu.vector_store %arg6[%c0_7, %c1, %c1_8, %c0_9], %2 {strides = array<i32>} : memref<1x18x18x3xbf16, #tpu.memory_space<vmem>>, vector<1x16x16x3xbf16>,
    %cst_10 = arith.constant 0.000000e+00 : bf16
    %4 = vector.broadcast %cst_10 : bf16 to vector<256x1152xbf16>
    %c0_11 = arith.constant 0 : index
    %c0_12 = arith.constant 0 : index
    %5 = vector.load %arg7[%c0_11, %c0_12] : memref<256x1152xbf16, #tpu.memory_space<vmem>>, vector<256x1152xbf16>
    tpu.vector_store %arg7[%c0_11, %c0_12], %4 {strides = array<i32>} : memref<256x1152xbf16, #tpu.memory_space<vmem>>, vector<256x1152xbf16>,
    %c0_13 = arith.constant 0 : index
    %c0_14 = arith.constant 0 : index
    %c0_15 = arith.constant 0 : index
    %c0_16 = arith.constant 0 : index
    %6 = vector.load %arg6[%c0_13, %c0_14, %c0_15, %c0_16] : memref<1x18x18x3xbf16, #tpu.memory_space<vmem>>, vector<1x16x16x3xbf16>
    %7 = vector.shape_cast %6 : vector<1x16x16x3xbf16> to vector<256x3xbf16>
    %c0_17 = arith.constant 0 : index
    %c0_18 = arith.constant 0 : index
    %8 = vector.load %arg7[%c0_17, %c0_18] : memref<256x1152xbf16, #tpu.memory_space<vmem>>, vector<256x3xbf16>
    tpu.vector_store %arg7[%c0_17, %c0_18], %7 {strides = array<i32>} : memref<256x1152xbf16, #tpu.memory_space<vmem>>, vector<256x3xbf16>,
    %c0_19 = arith.constant 0 : index
    %c0_20 = arith.constant 0 : index
    %c1_21 = arith.constant 1 : index
    %c0_22 = arith.constant 0 : index
    %9 = vector.load %arg6[%c0_19, %c0_20, %c1_21, %c0_22] : memref<1x18x18x3xbf16, #tpu.memory_space<vmem>>, vector<1x16x16x3xbf16>
    %10 = vector.shape_cast %9 : vector<1x16x16x3xbf16> to vector<256x3xbf16>
    %c0_23 = arith.constant 0 : index
    %c128 = arith.constant 128 : index
    %11 = vector.load %arg7[%c0_23, %c128] : memref<256x1152xbf16, #tpu.memory_space<vmem>>, vector<256x3xbf16>
    tpu.vector_store %arg7[%c0_23, %c128], %10 {strides = array<i32>} : memref<256x1152xbf16, #tpu.memory_space<vmem>>, vector<256x3xbf16>,
    %c0_24 = arith.constant 0 : index
    %c0_25 = arith.constant 0 : index
    %c2 = arith.constant 2 : index
    %c0_26 = arith.constant 0 : index
    %12 = vector.load %arg6[%c0_24, %c0_25, %c2, %c0_26] : memref<1x18x18x3xbf16, #tpu.memory_space<vmem>>, vector<1x16x16x3xbf16>
    %13 = vector.shape_cast %12 : vector<1x16x16x3xbf16> to vector<256x3xbf16>
    %c0_27 = arith.constant 0 : index
    %c256 = arith.constant 256 : index
    %14 = vector.load %arg7[%c0_27, %c256] : memref<256x1152xbf16, #tpu.memory_space<vmem>>, vector<256x3xbf16>
    tpu.vector_store %arg7[%c0_27, %c256], %13 {strides = array<i32>} : memref<256x1152xbf16, #tpu.memory_space<vmem>>, vector<256x3xbf16>,
    %c0_28 = arith.constant 0 : index
    %c1_29 = arith.constant 1 : index
    %c0_30 = arith.constant 0 : index
    %c0_31 = arith.constant 0 : index
    %15 = vector.load %arg6[%c0_28, %c1_29, %c0_30, %c0_31] : memref<1x18x18x3xbf16, #tpu.memory_space<vmem>>, vector<1x16x16x3xbf16>
    %16 = vector.shape_cast %15 : vector<1x16x16x3xbf16> to vector<256x3xbf16>
    %c0_32 = arith.constant 0 : index
    %c384 = arith.constant 384 : index
    %17 = vector.load %arg7[%c0_32, %c384] : memref<256x1152xbf16, #tpu.memory_space<vmem>>, vector<256x3xbf16>
    tpu.vector_store %arg7[%c0_32, %c384], %16 {strides = array<i32>} : memref<256x1152xbf16, #tpu.memory_space<vmem>>, vector<256x3xbf16>,
    %c0_33 = arith.constant 0 : index
    %c1_34 = arith.constant 1 : index
    %c1_35 = arith.constant 1 : index
    %c0_36 = arith.constant 0 : index
    %18 = vector.load %arg6[%c0_33, %c1_34, %c1_35, %c0_36] : memref<1x18x18x3xbf16, #tpu.memory_space<vmem>>, vector<1x16x16x3xbf16>
    %19 = vector.shape_cast %18 : vector<1x16x16x3xbf16> to vector<256x3xbf16>
    %c0_37 = arith.constant 0 : index
    %c512 = arith.constant 512 : index
    %20 = vector.load %arg7[%c0_37, %c512] : memref<256x1152xbf16, #tpu.memory_space<vmem>>, vector<256x3xbf16>
    tpu.vector_store %arg7[%c0_37, %c512], %19 {strides = array<i32>} : memref<256x1152xbf16, #tpu.memory_space<vmem>>, vector<256x3xbf16>,
    %c0_38 = arith.constant 0 : index
    %c1_39 = arith.constant 1 : index
    %c2_40 = arith.constant 2 : index
    %c0_41 = arith.constant 0 : index
    %21 = vector.load %arg6[%c0_38, %c1_39, %c2_40, %c0_41] : memref<1x18x18x3xbf16, #tpu.memory_space<vmem>>, vector<1x16x16x3xbf16>
    %22 = vector.shape_cast %21 : vector<1x16x16x3xbf16> to vector<256x3xbf16>
    %c0_42 = arith.constant 0 : index
    %c640 = arith.constant 640 : index
    %23 = vector.load %arg7[%c0_42, %c640] : memref<256x1152xbf16, #tpu.memory_space<vmem>>, vector<256x3xbf16>
    tpu.vector_store %arg7[%c0_42, %c640], %22 {strides = array<i32>} : memref<256x1152xbf16, #tpu.memory_space<vmem>>, vector<256x3xbf16>,
    %c0_43 = arith.constant 0 : index
    %c2_44 = arith.constant 2 : index
    %c0_45 = arith.constant 0 : index
    %c0_46 = arith.constant 0 : index
    %24 = vector.load %arg6[%c0_43, %c2_44, %c0_45, %c0_46] : memref<1x18x18x3xbf16, #tpu.memory_space<vmem>>, vector<1x16x16x3xbf16>
    %25 = vector.shape_cast %24 : vector<1x16x16x3xbf16> to vector<256x3xbf16>
    %c0_47 = arith.constant 0 : index
    %c768 = arith.constant 768 : index
    %26 = vector.load %arg7[%c0_47, %c768] : memref<256x1152xbf16, #tpu.memory_space<vmem>>, vector<256x3xbf16>
    tpu.vector_store %arg7[%c0_47, %c768], %25 {strides = array<i32>} : memref<256x1152xbf16, #tpu.memory_space<vmem>>, vector<256x3xbf16>,
    %c0_48 = arith.constant 0 : index
    %c2_49 = arith.constant 2 : index
    %c1_50 = arith.constant 1 : index
    %c0_51 = arith.constant 0 : index
    %27 = vector.load %arg6[%c0_48, %c2_49, %c1_50, %c0_51] : memref<1x18x18x3xbf16, #tpu.memory_space<vmem>>, vector<1x16x16x3xbf16>
    %28 = vector.shape_cast %27 : vector<1x16x16x3xbf16> to vector<256x3xbf16>
    %c0_52 = arith.constant 0 : index
    %c896 = arith.constant 896 : index
    %29 = vector.load %arg7[%c0_52, %c896] : memref<256x1152xbf16, #tpu.memory_space<vmem>>, vector<256x3xbf16>
    tpu.vector_store %arg7[%c0_52, %c896], %28 {strides = array<i32>} : memref<256x1152xbf16, #tpu.memory_space<vmem>>, vector<256x3xbf16>,
    %c0_53 = arith.constant 0 : index
    %c2_54 = arith.constant 2 : index
    %c2_55 = arith.constant 2 : index
    %c0_56 = arith.constant 0 : index
    %30 = vector.load %arg6[%c0_53, %c2_54, %c2_55, %c0_56] : memref<1x18x18x3xbf16, #tpu.memory_space<vmem>>, vector<1x16x16x3xbf16>
    %31 = vector.shape_cast %30 : vector<1x16x16x3xbf16> to vector<256x3xbf16>
    %c0_57 = arith.constant 0 : index
    %c1024 = arith.constant 1024 : index
    %32 = vector.load %arg7[%c0_57, %c1024] : memref<256x1152xbf16, #tpu.memory_space<vmem>>, vector<256x3xbf16>
    tpu.vector_store %arg7[%c0_57, %c1024], %31 {strides = array<i32>} : memref<256x1152xbf16, #tpu.memory_space<vmem>>, vector<256x3xbf16>,
    %c0_58 = arith.constant 0 : index
    %c0_59 = arith.constant 0 : index
    %33 = vector.load %arg7[%c0_58, %c0_59] : memref<256x1152xbf16, #tpu.memory_space<vmem>>, vector<256x1152xbf16>
    %c0_60 = arith.constant 0 : index
    %c0_61 = arith.constant 0 : index
    %34 = vector.load %arg3[%c0_60, %c0_61] : memref<1152x128xbf16, #tpu.memory_space<vmem>>, vector<1152x128xbf16>
    %cst_62 = arith.constant dense<0.000000e+00> : vector<256x128xf32>
    %35 = tpu.matmul %33, %34, %cst_62 {dimension_numbers = #tpu.dot_dimension_numbers<[1], [0], [0], [1], [0, 0, 1, 1], [], []>} : vector<256x1152xbf16>, vector<1152x128xbf16>, vector<256x128xf32> -> vector<256x128xf32>
    %c0_63 = arith.constant 0 : index
    %c0_64 = arith.constant 0 : index
    %36 = vector.load %arg4[%c0_63, %c0_64] : memref<1x128xf32, #tpu.memory_space<vmem>>, vector<1x128xf32>
    %37 = vector.broadcast %36 : vector<1x128xf32> to vector<256x128xf32>
    %38 = arith.addf %35, %37 : vector<256x128xf32>
    %cst_65 = arith.constant 0.000000e+00 : f32
    %39 = vector.broadcast %cst_65 : f32 to vector<256x128xf32>
    %40 = arith.maximumf %38, %39 : vector<256x128xf32>
    %41 = vector.shape_cast %40 : vector<256x128xf32> to vector<1x16x16x128xf32>
    %42 = arith.truncf %41 : vector<1x16x16x128xf32> to vector<1x16x16x128xbf16>
    %c0_66 = arith.constant 0 : index
    %c0_67 = arith.constant 0 : index
    %c0_68 = arith.constant 0 : index
    %c0_69 = arith.constant 0 : index
    %43 = vector.load %arg5[%c0_66, %c0_67, %c0_68, %c0_69] : memref<1x16x16x128xbf16, #tpu.memory_space<vmem>>, vector<1x16x16x128xbf16>
    tpu.vector_store %arg5[%c0_66, %c0_67, %c0_68, %c0_69], %42 {strides = array<i32>} : memref<1x16x16x128xbf16, #tpu.memory_space<vmem>>, vector<1x16x16x128xbf16>,
    return
  }
  func.func @transform_0(%arg0: i32, %arg1: i32) -> (i32, i32, i32, i32) {
    %c0_i32 = arith.constant 0 : i32
    %c0_i32_0 = arith.constant 0 : i32
    %c0_i32_1 = arith.constant 0 : i32
    %c0_i32_2 = arith.constant 0 : i32
    return %arg0, %c0_i32, %c0_i32_0, %c0_i32_1 : i32, i32, i32, i32
  }
  func.func @transform_1(%arg0: i32, %arg1: i32) -> (i32, i32) {
    %c0_i32 = arith.constant 0 : i32
    %c0_i32_0 = arith.constant 0 : i32
    return %c0_i32, %arg1 : i32, i32
  }
  func.func @transform_2(%arg0: i32, %arg1: i32) -> (i32, i32) {
    %c0_i32 = arith.constant 0 : i32
    %c0_i32_0 = arith.constant 0 : i32
    return %c0_i32, %arg1 : i32, i32
  }
  func.func @transform_3(%arg0: i32, %arg1: i32) -> (i32, i32, i32, i32) {
    %c0_i32 = arith.constant 0 : i32
    %c0_i32_0 = arith.constant 0 : i32
    %c0_i32_1 = arith.constant 0 : i32
    return %arg0, %c0_i32, %c0_i32_0, %arg1 : i32, i32, i32, i32
  }
}

</mosaic_0001>

<llo_original>
// kernel: tpu_custom_call.1
$region0: #{tpu_custom_call.1}
  #allocation0 [shape = 'u32[]', space=smem, size = 0x4, offset = 0x4, fixed_abs, tag = 'smem constant byte address 0x4 - core index']
  #allocation1 [shape = 'u32[72,128]{1,0:T(1,128)}', space=vmem, size = 0x9000, scoped, tag = 'internal scratch']
  #allocation2 [shape = 'bf16[1,18,18,3]{3,2,1,0:T(8,128)(2,1)}', space=vmem, size = 0x1b000, scoped, tag = 'scratch operand']
  #allocation3 [shape = 'bf16[256,1152]{1,0:T(8,128)(2,1)}', space=vmem, size = 0x90000, scoped, tag = 'scratch operand']
  %s0 = inlined_call_operand.vmem [shape: bf16[2,16,16,3], index: 0, kind: input, shape index: {}]
  %s1 = inlined_call_operand.hbm [shape: bf16[1152,128], index: 1, kind: input, shape index: {}]
  %s2 = inlined_call_operand.vmem [shape: f32[1,128], index: 2, kind: input, shape index: {}]
  %s3 = inlined_call_operand.hbm [shape: bf16[2,16,16,128], index: 3, kind: output, shape index: {}]
  %s4 = sld [smem:[#allocation0]]
  $region49: #{tpu_custom_call.1} parent=0
    _
  %s6 = ssub.s32 1, %s4
  %s7 = scalar_select 0, %s6, %s4
  $region1: #{tpu_custom_call.1} parent=0
    #allocation4 [shape = 'u8[294912]{0}', space=vmem, size = 0x48000, scoped, tag = 'input window, operand 1, single buffered']
    #allocation5 [shape = 's32[2]{0}', space=sflag, size = 0x8, scoped, tag = 'scoped memory for tpu_custom_call.1']
    #allocation6 [shape = 's32[2]{0}', space=sflag, size = 0x8, scoped, tag = 'scoped memory for tpu_custom_call.1']
    #allocation7 [shape = 'u8[131072]{0}', space=vmem, size = 0x20000, scoped, tag = 'output window, operand 0']
    %8 = vsyncpa [#allocation5], 0
    %9 = vsyncpa [#allocation6], 0
    %s10 = scalar_lea.sflag [#allocation6], 1
    %11 = vsyncpa %s10, 0
    loop: start=0, step=1, limit=4
    $region2: #{tpu_custom_call.1} parent=1 // loop_pre_header
      _
    $region3: #{tpu_custom_call.1} parent=1 // loop_header
      %s13 = sphi 0, %s17
      %p14 = scmp.ge.s32.totalorder %s13, 4
      %s20 = sphi 0, %s32
      %s21 = sphi 0, %s28
      %s22 = sphi 0, %s20
      %s23 = sphi 0, %s21
      %s24 = sphi 0, %s22
      %s25 = sphi 0, %s23
      %s35 = sphi 0, %s37
      %s38 = sphi 0, %s35
      %s39 = sphi 0, %s38
      %s55 = sphi 0, %s39
      %s61 = sphi 0, %s63
      %s64 = sphi 0, %s61
      %s65 = sphi 0, %s64
      %s81 = sphi 0, %s65
      %s87 = sphi 0, %s89
      %s90 = sphi 0, %s87
      %s91 = sphi 0, %s90
      %s107 = sphi 0, %s91
      %s115 = sphi 0, %s117
      %s118 = sphi 0, %s115
      %s119 = sphi 0, %s118
      %s135 = sphi 0, %s119
    $region4: #{tpu_custom_call.1} parent=1 // loop_header_branch
      %16 = sbr.rel (%p14) target = $region8
    $region5: #{tpu_custom_call.1} parent=1 // loop_body
      %s18 = ssub.s32 %s13, 1
      %s19 = ssub.s32 %s13, 2
      %s26 = sadd.s32 1, %s21
      %p27 = scmp.ge.s32.totalorder %s26, 1
      %s28 = scalar_select %p27, 0, %s26
      %s29 = sadd.s32 1, %s20
      %s30 = scalar_select %p27, %s29, %s20
      %p31 = scmp.ge.s32.totalorder %s30, 2
      %s32 = scalar_select %p31, 0, %s30
      %s33 = ssub.s32 %s20, %s32
      %p34 = scmp.eq.s32.totalorder %s33, 0
      %s36 = sadd.s32 %s35, 1
      %s37 = scalar_select %p34, %s35, %s36
      %p40 = pneg %p34
      %p41 = scmp.eq.s32.totalorder %s13, 1
      %p42 = por %p40, %p41
      %p43 = scmp.ne.s32.totalorder %s35, %s38
      %p44 = scmp.eq.s32.totalorder %s13, 0
      %p45 = por %p43, %p44
      %p46 = scmp.ne.s32.totalorder %s35, %s38
      %p47 = scmp.eq.s32.totalorder %s18, 1
      %p48 = por %p46, %p47
      %p49 = scmp.ne.s32.totalorder %s38, %s39
      %p50 = scmp.eq.s32.totalorder %s18, 0
      %p51 = por %p49, %p50
      %p52 = scmp.ne.s32.totalorder %s38, %s39
      %p53 = scmp.eq.s32.totalorder %s19, 1
      %p54 = por %p52, %p53
      %p56 = scmp.ne.s32.totalorder %s39, %s55
      %p57 = scmp.eq.s32.totalorder %s19, 0
      %p58 = por %p56, %p57
      %s59 = ssub.s32 %s21, %s28
      %p60 = scmp.eq.s32.totalorder %s59, 0
      %s62 = sadd.s32 %s61, 1
      %s63 = scalar_select %p60, %s61, %s62
      %p66 = pneg %p60
      %p67 = scmp.eq.s32.totalorder %s13, 1
      %p68 = por %p66, %p67
      %p69 = scmp.ne.s32.totalorder %s61, %s64
      %p70 = scmp.eq.s32.totalorder %s13, 0
      %p71 = por %p69, %p70
      %p72 = scmp.ne.s32.totalorder %s61, %s64
      %p73 = scmp.eq.s32.totalorder %s18, 1
      %p74 = por %p72, %p73
      %p75 = scmp.ne.s32.totalorder %s64, %s65
      %p76 = scmp.eq.s32.totalorder %s18, 0
      %p77 = por %p75, %p76
      %p78 = scmp.ne.s32.totalorder %s64, %s65
      %p79 = scmp.eq.s32.totalorder %s19, 1
      %p80 = por %p78, %p79
      %p82 = scmp.ne.s32.totalorder %s65, %s81
      %p83 = scmp.eq.s32.totalorder %s19, 0
      %p84 = por %p82, %p83
      %s85 = ssub.s32 %s21, %s28
      %p86 = scmp.eq.s32.totalorder %s85, 0
      %s88 = sadd.s32 %s87, 1
      %s89 = scalar_select %p86, %s87, %s88
      %p92 = pneg %p86
      %p93 = scmp.eq.s32.totalorder %s13, 1
      %p94 = por %p92, %p93
      %p95 = scmp.ne.s32.totalorder %s87, %s90
      %p96 = scmp.eq.s32.totalorder %s13, 0
      %p97 = por %p95, %p96
      %p98 = scmp.ne.s32.totalorder %s87, %s90
      %p99 = scmp.eq.s32.totalorder %s18, 1
      %p100 = por %p98, %p99
      %p101 = scmp.ne.s32.totalorder %s90, %s91
      %p102 = scmp.eq.s32.totalorder %s18, 0
      %p103 = por %p101, %p102
      %p104 = scmp.ne.s32.totalorder %s90, %s91
      %p105 = scmp.eq.s32.totalorder %s19, 1
      %p106 = por %p104, %p105
      %p108 = scmp.ne.s32.totalorder %s91, %s107
      %p109 = scmp.eq.s32.totalorder %s19, 0
      %p110 = por %p108, %p109
      %s111 = ssub.s32 %s20, %s32
      %s112 = ssub.s32 %s21, %s28
      %s113 = sor.u32 %s111, %s112
      %p114 = scmp.eq.s32.totalorder %s113, 0
      %s116 = sadd.s32 %s115, 1
      %s117 = scalar_select %p114, %s115, %s116
      %p120 = pneg %p114
      %p121 = scmp.eq.s32.totalorder %s13, 1
      %p122 = por %p120, %p121
      %p123 = scmp.ne.s32.totalorder %s115, %s118
      %p124 = scmp.eq.s32.totalorder %s13, 0
      %p125 = por %p123, %p124
      %p126 = scmp.ne.s32.totalorder %s115, %s118
      %p127 = scmp.eq.s32.totalorder %s18, 1
      %p128 = por %p126, %p127
      %p129 = scmp.ne.s32.totalorder %s118, %s119
      %p130 = scmp.eq.s32.totalorder %s18, 0
      %p131 = por %p129, %p130
      %p132 = scmp.ne.s32.totalorder %s118, %s119
      %p133 = scmp.eq.s32.totalorder %s19, 1
      %p134 = por %p132, %p133
      %p136 = scmp.ne.s32.totalorder %s119, %s135
      %p137 = scmp.eq.s32.totalorder %s19, 0
      %p138 = por %p136, %p137
      %p139 = scmp.le.s32.totalorder 1, %s13
      %p140 = scmp.lt.s32.totalorder %s13, 3
      %p141 = pnand %p139, %p140
      %p142 = pneg %p141
      // Predicated region
      $region9: #{tpu_custom_call.1} parent=5 // pred_check
        _
      $region10: #{tpu_custom_call.1} parent=5 // pred_check_branch
        %144 = sbr.rel (%p141) target = $region12
      $region11: #{tpu_custom_call.1} parent=5 // pred_region
        %s145 = ssub.s32 %s13, 1
        // Predicated region
        $region13: #{tpu_custom_call.1} parent=11 // pred_check
          %p146 = pneg %p77
        $region14: #{tpu_custom_call.1} parent=11 // pred_check_branch
          %148 = sbr.rel (%p146) target = $region16
        $region15: #{tpu_custom_call.1} parent=11 // pred_region
          %150 = vsyncadd [#allocation5], 0
          %s151 = smul.addr %s23, 4
          %s152 = scalar_lea.hbm %s1, %s151
          %s153 = sshll.u32 %s152, 4
          %s154 = int_to_ptr.hbm [resolvable:$true] %s153
          %s155 = sshll.u32 [#allocation4], 4
          %s156 = int_to_ptr.vmem [resolvable:$true] %s155
          %161 = dma.hbm_to_vmem [thread:$0]  %s154, 9216, %s156, [#allocation5], 64, 64, 4
        $region16: #{tpu_custom_call.1} parent=11 // pred_fallthru
          _
        // Predicated region
        $region17: #{tpu_custom_call.1} parent=11 // pred_check
          %p162 = pneg %p103
        $region18: #{tpu_custom_call.1} parent=11 // pred_check_branch
          %164 = sbr.rel (%p162) target = $region20
        $region19: #{tpu_custom_call.1} parent=11 // pred_region
          %p165 = scmp.lt.s32.totalorder %s23, 0
          %s166 = scalar_select %p165, %s23, 0
          %s167 = scalar_lea.vmem %s2, %s166
        $region20: #{tpu_custom_call.1} parent=11 // pred_fallthru
          _
      $region12: #{tpu_custom_call.1} parent=5 // pred_fallthru
        _
      %p168 = scmp.lt.s32.totalorder %s13, 2
      // Predicated region
      $region21: #{tpu_custom_call.1} parent=5 // pred_check
        %p169 = pneg %p168
      $region22: #{tpu_custom_call.1} parent=5 // pred_check_branch
        %171 = sbr.rel (%p169) target = $region24
      $region23: #{tpu_custom_call.1} parent=5 // pred_region
        // Predicated region
        $region25: #{tpu_custom_call.1} parent=23 // pred_check
          %p172 = pneg %p45
        $region26: #{tpu_custom_call.1} parent=23 // pred_check_branch
          %174 = sbr.rel (%p172) target = $region28
        $region27: #{tpu_custom_call.1} parent=23 // pred_region
          %p175 = scmp.lt.s32.totalorder %s20, 1
          %s176 = scalar_select %p175, %s20, 1
          %s177 = smul.addr %s176, 32
          %s178 = smul.addr %s177, 4
          %s179 = scalar_lea.vmem %s0, %s178
        $region28: #{tpu_custom_call.1} parent=23 // pred_fallthru
          _
      $region24: #{tpu_custom_call.1} parent=5 // pred_fallthru
        _
      %p180 = scmp.le.s32.totalorder 1, %s13
      %p181 = scmp.lt.s32.totalorder %s13, 3
      %p182 = pnand %p180, %p181
      %p183 = pneg %p182
      // Predicated region
      $region29: #{tpu_custom_call.1} parent=5 // pred_check
        _
      $region30: #{tpu_custom_call.1} parent=5 // pred_check_branch
        %185 = sbr.rel (%p182) target = $region32
      $region31: #{tpu_custom_call.1} parent=5 // pred_region
        %s186 = ssub.s32 %s13, 1
        // Predicated region
        $region33: #{tpu_custom_call.1} parent=31 // pred_check
          %p187 = pneg %p77
        $region34: #{tpu_custom_call.1} parent=31 // pred_check_branch
          %189 = sbr.rel (%p187) target = $region36
        $region35: #{tpu_custom_call.1} parent=31 // pred_region
          %191 = dma.done [#allocation5], 9216
        $region36: #{tpu_custom_call.1} parent=31 // pred_fallthru
          _
        %p192 = scmp.lt.s32.totalorder %s22, 1
        %s193 = scalar_select %p192, %s22, 1
        %s194 = smul.addr %s193, 32
        %s195 = smul.addr %s194, 4
        %s196 = scalar_lea.vmem %s0, %s195
        %p197 = pneg %p51
        %p198 = pneg %p48
        %p199 = pneg %p77
        %p200 = pneg %p74
        %p201 = scmp.lt.s32.totalorder %s23, 0
        %s202 = scalar_select %p201, %s23, 0
        %s203 = scalar_lea.vmem %s2, %s202
        %p204 = pneg %p103
        %p205 = pneg %p100
        %p206 = pneg %p131
        %p207 = pneg %p128
        %s208 = sand.u32 %s118, 1
        %s209 = scalar_lea.sflag [#allocation6], %s208
        %s210 = sand.u32 %s118, 1
        %s211 = smul.addr %s210, 128
        %s212 = scalar_lea.vmem [#allocation7], %s211
        %p213 = scmp.lt.s32.totalorder %s22, 1
        %s214 = scalar_select %p213, %s22, 1
        %s215 = smul.addr %s214, 32
        %s216 = smul.addr %s215, 4
        %s217 = scalar_lea.vmem %s0, %s216
        %p218 = scmp.lt.s32.totalorder %s23, 0
        %s219 = scalar_select %p218, %s23, 0
        %s220 = scalar_lea.vmem %s2, %s219
        %vm222 = vcmask 19456
        %223 = vst.msk [vmem:[#allocation2] sm:$0xf] %vm222, 0
        %224 = vst.msk [vmem:[#allocation2 + $0x4] sm:$0xf] %vm222, 0
        %vm225 = vcmask 16384
        %226 = vst.msk [vmem:[#allocation2 + $0x8] sm:$0x1] %vm225, 0
        %227 = vst.msk [vmem:[#allocation2 + $0xc] sm:$0xf] %vm222, 0
        %228 = vst.msk [vmem:[#allocation2 + $0x10] sm:$0xf] %vm222, 0
        %229 = vst.msk [vmem:[#allocation2 + $0x14] sm:$0x1] %vm225, 0
        %230 = vst.msk [vmem:[#allocation2 + $0x18] sm:$0xf] %vm222, 0
        %231 = vst.msk [vmem:[#allocation2 + $0x1c] sm:$0xf] %vm222, 0
        %232 = vst.msk [vmem:[#allocation2 + $0x20] sm:$0x1] %vm225, 0
        %233 = vst.msk [vmem:[#allocation2 + $0x24] sm:$0xf] %vm222, 0
        %234 = vst.msk [vmem:[#allocation2 + $0x28] sm:$0xf] %vm222, 0
        %235 = vst.msk [vmem:[#allocation2 + $0x2c] sm:$0x1] %vm225, 0
        %236 = vst.msk [vmem:[#allocation2 + $0x30] sm:$0xf] %vm222, 0
        %237 = vst.msk [vmem:[#allocation2 + $0x34] sm:$0xf] %vm222, 0
        %238 = vst.msk [vmem:[#allocation2 + $0x38] sm:$0x1] %vm225, 0
        %239 = vst.msk [vmem:[#allocation2 + $0x3c] sm:$0xf] %vm222, 0
        %240 = vst.msk [vmem:[#allocation2 + $0x40] sm:$0xf] %vm222, 0
        %241 = vst.msk [vmem:[#allocation2 + $0x44] sm:$0x1] %vm225, 0
        %242 = vst.msk [vmem:[#allocation2 + $0x48] sm:$0xf] %vm222, 0
        %243 = vst.msk [vmem:[#allocation2 + $0x4c] sm:$0xf] %vm222, 0
        %244 = vst.msk [vmem:[#allocation2 + $0x50] sm:$0x1] %vm225, 0
        %245 = vst.msk [vmem:[#allocation2 + $0x54] sm:$0xf] %vm222, 0
        %246 = vst.msk [vmem:[#allocation2 + $0x58] sm:$0xf] %vm222, 0
        %247 = vst.msk [vmem:[#allocation2 + $0x5c] sm:$0x1] %vm225, 0
        %248 = vst.msk [vmem:[#allocation2 + $0x60] sm:$0xf] %vm222, 0
        %249 = vst.msk [vmem:[#allocation2 + $0x64] sm:$0xf] %vm222, 0
        %250 = vst.msk [vmem:[#allocation2 + $0x68] sm:$0x1] %vm225, 0
        %251 = vst.msk [vmem:[#allocation2 + $0x6c] sm:$0xf] %vm222, 0
        %252 = vst.msk [vmem:[#allocation2 + $0x70] sm:$0xf] %vm222, 0
        %253 = vst.msk [vmem:[#allocation2 + $0x74] sm:$0x1] %vm225, 0
        %254 = vst.msk [vmem:[#allocation2 + $0x78] sm:$0xf] %vm222, 0
        %255 = vst.msk [vmem:[#allocation2 + $0x7c] sm:$0xf] %vm222, 0
        %256 = vst.msk [vmem:[#allocation2 + $0x80] sm:$0x1] %vm225, 0
        %257 = vst.msk [vmem:[#allocation2 + $0x84] sm:$0xf] %vm222, 0
        %258 = vst.msk [vmem:[#allocation2 + $0x88] sm:$0xf] %vm222, 0
        %259 = vst.msk [vmem:[#allocation2 + $0x8c] sm:$0x1] %vm225, 0
        %260 = vst.msk [vmem:[#allocation2 + $0x90] sm:$0xf] %vm222, 0
        %261 = vst.msk [vmem:[#allocation2 + $0x94] sm:$0xf] %vm222, 0
        %262 = vst.msk [vmem:[#allocation2 + $0x98] sm:$0x1] %vm225, 0
        %263 = vst.msk [vmem:[#allocation2 + $0x9c] sm:$0xf] %vm222, 0
        %264 = vst.msk [vmem:[#allocation2 + $0xa0] sm:$0xf] %vm222, 0
        %265 = vst.msk [vmem:[#allocation2 + $0xa4] sm:$0x1] %vm225, 0
        %266 = vst.msk [vmem:[#allocation2 + $0xa8] sm:$0xf] %vm222, 0
        %267 = vst.msk [vmem:[#allocation2 + $0xac] sm:$0xf] %vm222, 0
        %268 = vst.msk [vmem:[#allocation2 + $0xb0] sm:$0x1] %vm225, 0
        %269 = vst.msk [vmem:[#allocation2 + $0xb4] sm:$0xf] %vm222, 0
        %270 = vst.msk [vmem:[#allocation2 + $0xb8] sm:$0xf] %vm222, 0
        %271 = vst.msk [vmem:[#allocation2 + $0xbc] sm:$0x1] %vm225, 0
        %272 = vst.msk [vmem:[#allocation2 + $0xc0] sm:$0xf] %vm222, 0
        %273 = vst.msk [vmem:[#allocation2 + $0xc4] sm:$0xf] %vm222, 0
        %274 = vst.msk [vmem:[#allocation2 + $0xc8] sm:$0x1] %vm225, 0
        %275 = vst.msk [vmem:[#allocation2 + $0xcc] sm:$0xf] %vm222, 0
        %276 = vst.msk [vmem:[#allocation2 + $0xd0] sm:$0xf] %vm222, 0
        %277 = vst.msk [vmem:[#allocation2 + $0xd4] sm:$0x1] %vm225, 0
        %v278 = vld [vmem:[%s217] sm:$0xf]
        %v279 = vld [vmem:[%s217 + $0x4] sm:$0xf]
        %v280 = vld [vmem:[%s217 + $0x8] sm:$0xf]
        %v281 = vld [vmem:[%s217 + $0xc] sm:$0xf]
        %v282 = vld [vmem:[%s217 + $0x10] sm:$0xf]
        %v283 = vld [vmem:[%s217 + $0x14] sm:$0xf]
        %v284 = vld [vmem:[%s217 + $0x18] sm:$0xf]
        %v285 = vld [vmem:[%s217 + $0x1c] sm:$0xf]
        %v286 = vld [vmem:[%s217 + $0x20] sm:$0xf]
        %v287 = vld [vmem:[%s217 + $0x24] sm:$0xf]
        %v288 = vld [vmem:[%s217 + $0x28] sm:$0xf]
        %v289 = vld [vmem:[%s217 + $0x2c] sm:$0xf]
        %v290 = vld [vmem:[%s217 + $0x30] sm:$0xf]
        %v291 = vld [vmem:[%s217 + $0x34] sm:$0xf]
        %v292 = vld [vmem:[%s217 + $0x38] sm:$0xf]
        %v293 = vld [vmem:[%s217 + $0x3c] sm:$0xf]
        %v294 = vld [vmem:[%s217 + $0x40] sm:$0xf]
        %v295 = vld [vmem:[%s217 + $0x44] sm:$0xf]
        %v296 = vld [vmem:[%s217 + $0x48] sm:$0xf]
        %v297 = vld [vmem:[%s217 + $0x4c] sm:$0xf]
        %v298 = vld [vmem:[%s217 + $0x50] sm:$0xf]
        %v299 = vld [vmem:[%s217 + $0x54] sm:$0xf]
        %v300 = vld [vmem:[%s217 + $0x58] sm:$0xf]
        %v301 = vld [vmem:[%s217 + $0x5c] sm:$0xf]
        %v302 = vld [vmem:[%s217 + $0x60] sm:$0xf]
        %v303 = vld [vmem:[%s217 + $0x64] sm:$0xf]
        %v304 = vld [vmem:[%s217 + $0x68] sm:$0xf]
        %v305 = vld [vmem:[%s217 + $0x6c] sm:$0xf]
        %v306 = vld [vmem:[%s217 + $0x70] sm:$0xf]
        %v307 = vld [vmem:[%s217 + $0x74] sm:$0xf]
        %v308 = vld [vmem:[%s217 + $0x78] sm:$0xf]
        %v309 = vld [vmem:[%s217 + $0x7c] sm:$0xf]
        %vm310 = vsmask.f32 256
        %vm311 = vsmask.f32 4368
        %vm312 = vmor %vm310, %vm311
        %v314 = vshrl.u32 %v278, 16
        %v316 = vrot.slane %v314, 7
        %v317 = vshll.u32 %v278, 16
        %v319 = vor.u32 %v316, %v317
        %v320 = vrot.slane %v316, 4
        %v322 = vshrl.u32 %v279, 16
        %v324 = vrot.slane %v322, 7
        %v325 = vshll.u32 %v279, 16
        %v327 = vor.u32 %v324, %v325
        %v328 = vsel %vm312, %v320, %v327
        %v329 = vrot.slane %v324, 4
        %v331 = vshrl.u32 %v280, 16
        %v333 = vrot.slane %v331, 7
        %v334 = vshll.u32 %v280, 16
        %v336 = vor.u32 %v333, %v334
        %v337 = vrot.slane %v333, 4
        %v339 = vshrl.u32 %v281, 16
        %v341 = vrot.slane %v339, 7
        %v342 = vshll.u32 %v281, 16
        %v344 = vor.u32 %v341, %v342
        %v345 = vsel %vm312, %v337, %v344
        %v346 = vrot.slane %v341, 4
        %v348 = vshrl.u32 %v282, 16
        %v350 = vrot.slane %v348, 7
        %v351 = vshll.u32 %v282, 16
        %v353 = vor.u32 %v350, %v351
        %v354 = vrot.slane %v350, 4
        %v356 = vshrl.u32 %v283, 16
        %v358 = vrot.slane %v356, 7
        %v359 = vshll.u32 %v283, 16
        %v361 = vor.u32 %v358, %v359
        %v362 = vsel %vm312, %v354, %v361
        %v363 = vrot.slane %v358, 4
        %v365 = vshrl.u32 %v284, 16
        %v367 = vrot.slane %v365, 7
        %v368 = vshll.u32 %v284, 16
        %v370 = vor.u32 %v367, %v368
        %v371 = vrot.slane %v367, 4
        %v373 = vshrl.u32 %v285, 16
        %v375 = vrot.slane %v373, 7
        %v376 = vshll.u32 %v285, 16
        %v378 = vor.u32 %v375, %v376
        %v379 = vsel %vm312, %v371, %v378
        %v380 = vrot.slane %v375, 4
        %v382 = vshrl.u32 %v286, 16
        %v384 = vrot.slane %v382, 7
        %v385 = vshll.u32 %v286, 16
        %v387 = vor.u32 %v384, %v385
        %v388 = vrot.slane %v384, 4
        %v390 = vshrl.u32 %v287, 16
        %v392 = vrot.slane %v390, 7
        %v393 = vshll.u32 %v287, 16
        %v395 = vor.u32 %v392, %v393
        %v396 = vsel %vm312, %v388, %v395
        %v397 = vrot.slane %v392, 4
        %v399 = vshrl.u32 %v288, 16
        %v401 = vrot.slane %v399, 7
        %v402 = vshll.u32 %v288, 16
        %v404 = vor.u32 %v401, %v402
        %v405 = vrot.slane %v401, 4
        %v407 = vshrl.u32 %v289, 16
        %v409 = vrot.slane %v407, 7
        %v410 = vshll.u32 %v289, 16
        %v412 = vor.u32 %v409, %v410
        %v413 = vsel %vm312, %v405, %v412
        %v414 = vrot.slane %v409, 4
        %v416 = vshrl.u32 %v290, 16
        %v418 = vrot.slane %v416, 7
        %v419 = vshll.u32 %v290, 16
        %v421 = vor.u32 %v418, %v419
        %v422 = vrot.slane %v418, 4
        %v424 = vshrl.u32 %v291, 16
        %v426 = vrot.slane %v424, 7
        %v427 = vshll.u32 %v291, 16
        %v429 = vor.u32 %v426, %v427
        %v430 = vsel %vm312, %v422, %v429
        %v431 = vrot.slane %v426, 4
        %v433 = vshrl.u32 %v292, 16
        %v435 = vrot.slane %v433, 7
        %v436 = vshll.u32 %v292, 16
        %v438 = vor.u32 %v435, %v436
        %v439 = vrot.slane %v435, 4
        %v441 = vshrl.u32 %v293, 16
        %v443 = vrot.slane %v441, 7
        %v444 = vshll.u32 %v293, 16
        %v446 = vor.u32 %v443, %v444
        %v447 = vsel %vm312, %v439, %v446
        %v448 = vrot.slane %v443, 4
        %v450 = vshrl.u32 %v294, 16
        %v452 = vrot.slane %v450, 7
        %v453 = vshll.u32 %v294, 16
        %v455 = vor.u32 %v452, %v453
        %v456 = vrot.slane %v452, 4
        %v458 = vshrl.u32 %v295, 16
        %v460 = vrot.slane %v458, 7
        %v461 = vshll.u32 %v295, 16
        %v463 = vor.u32 %v460, %v461
        %v464 = vsel %vm312, %v456, %v463
        %v465 = vrot.slane %v460, 4
        %v467 = vshrl.u32 %v296, 16
        %v469 = vrot.slane %v467, 7
        %v470 = vshll.u32 %v296, 16
        %v472 = vor.u32 %v469, %v470
        %v473 = vrot.slane %v469, 4
        %v475 = vshrl.u32 %v297, 16
        %v477 = vrot.slane %v475, 7
        %v478 = vshll.u32 %v297, 16
        %v480 = vor.u32 %v477, %v478
        %v481 = vsel %vm312, %v473, %v480
        %v482 = vrot.slane %v477, 4
        %v484 = vshrl.u32 %v298, 16
        %v486 = vrot.slane %v484, 7
        %v487 = vshll.u32 %v298, 16
        %v489 = vor.u32 %v486, %v487
        %v490 = vrot.slane %v486, 4
        %v492 = vshrl.u32 %v299, 16
        %v494 = vrot.slane %v492, 7
        %v495 = vshll.u32 %v299, 16
        %v497 = vor.u32 %v494, %v495
        %v498 = vsel %vm312, %v490, %v497
        %v499 = vrot.slane %v494, 4
        %v501 = vshrl.u32 %v300, 16
        %v503 = vrot.slane %v501, 7
        %v504 = vshll.u32 %v300, 16
        %v506 = vor.u32 %v503, %v504
        %v507 = vrot.slane %v503, 4
        %v509 = vshrl.u32 %v301, 16
        %v511 = vrot.slane %v509, 7
        %v512 = vshll.u32 %v301, 16
        %v514 = vor.u32 %v511, %v512
        %v515 = vsel %vm312, %v507, %v514
        %v516 = vrot.slane %v511, 4
        %v518 = vshrl.u32 %v302, 16
        %v520 = vrot.slane %v518, 7
        %v521 = vshll.u32 %v302, 16
        %v523 = vor.u32 %v520, %v521
        %v524 = vrot.slane %v520, 4
        %v526 = vshrl.u32 %v303, 16
        %v528 = vrot.slane %v526, 7
        %v529 = vshll.u32 %v303, 16
        %v531 = vor.u32 %v528, %v529
        %v532 = vsel %vm312, %v524, %v531
        %v533 = vrot.slane %v528, 4
        %v535 = vshrl.u32 %v304, 16
        %v537 = vrot.slane %v535, 7
        %v538 = vshll.u32 %v304, 16
        %v540 = vor.u32 %v537, %v538
        %v541 = vrot.slane %v537, 4
        %v543 = vshrl.u32 %v305, 16
        %v545 = vrot.slane %v543, 7
        %v546 = vshll.u32 %v305, 16
        %v548 = vor.u32 %v545, %v546
        %v549 = vsel %vm312, %v541, %v548
        %v550 = vrot.slane %v545, 4
        %v552 = vshrl.u32 %v306, 16
        %v554 = vrot.slane %v552, 7
        %v555 = vshll.u32 %v306, 16
        %v557 = vor.u32 %v554, %v555
        %v558 = vrot.slane %v554, 4
        %v560 = vshrl.u32 %v307, 16
        %v562 = vrot.slane %v560, 7
        %v563 = vshll.u32 %v307, 16
        %v565 = vor.u32 %v562, %v563
        %v566 = vsel %vm312, %v558, %v565
        %v567 = vrot.slane %v562, 4
        %v569 = vshrl.u32 %v308, 16
        %v571 = vrot.slane %v569, 7
        %v572 = vshll.u32 %v308, 16
        %v574 = vor.u32 %v571, %v572
        %v575 = vrot.slane %v571, 4
        %v577 = vshrl.u32 %v309, 16
        %v579 = vrot.slane %v577, 7
        %v580 = vshll.u32 %v309, 16
        %v582 = vor.u32 %v579, %v580
        %v583 = vsel %vm312, %v575, %v582
        %v584 = vrot.slane %v579, 4
        %s633 = scalar_lea.vmem [#allocation2], 12
        %vm634 = vcmask 19456
        %vm635 = vsmask.f32 7938
        %vm636 = vmand %vm634, %vm635
        %v637 = vld [vmem:[%s633] sm:$0xf]
        %v638 = vsel %vm636, %v319, %v637
        %639 = vst [vmem:[%s633] sm:$0xf] %v638
        %640 = vst.msk [vmem:[%s633 + $0x4] sm:$0xf] %vm222, %v328
        %vm641 = vcmask 16384
        %vm642 = vmand %vm641, %vm310
        %v643 = vld [vmem:[%s633 + $0x8] sm:$0x1]
        %v644 = vsel %vm642, %v329, %v643
        %645 = vst [vmem:[%s633 + $0x8] sm:$0x1] %v644
        %v646 = vld [vmem:[%s633 + $0xc] sm:$0xf]
        %v647 = vsel %vm636, %v336, %v646
        %648 = vst [vmem:[%s633 + $0xc] sm:$0xf] %v647
        %649 = vst.msk [vmem:[%s633 + $0x10] sm:$0xf] %vm222, %v345
        %v650 = vld [vmem:[%s633 + $0x14] sm:$0x1]
        %v651 = vsel %vm642, %v346, %v650
        %652 = vst [vmem:[%s633 + $0x14] sm:$0x1] %v651
        %v653 = vld [vmem:[%s633 + $0x18] sm:$0xf]
        %v654 = vsel %vm636, %v353, %v653
        %655 = vst [vmem:[%s633 + $0x18] sm:$0xf] %v654
        %656 = vst.msk [vmem:[%s633 + $0x1c] sm:$0xf] %vm222, %v362
        %v657 = vld [vmem:[%s633 + $0x20] sm:$0x1]
        %v658 = vsel %vm642, %v363, %v657
        %659 = vst [vmem:[%s633 + $0x20] sm:$0x1] %v658
        %v660 = vld [vmem:[%s633 + $0x24] sm:$0xf]
        %v661 = vsel %vm636, %v370, %v660
        %662 = vst [vmem:[%s633 + $0x24] sm:$0xf] %v661
        %663 = vst.msk [vmem:[%s633 + $0x28] sm:$0xf] %vm222, %v379
        %v664 = vld [vmem:[%s633 + $0x2c] sm:$0x1]
        %v665 = vsel %vm642, %v380, %v664
        %666 = vst [vmem:[%s633 + $0x2c] sm:$0x1] %v665
        %v667 = vld [vmem:[%s633 + $0x30] sm:$0xf]
        %v668 = vsel %vm636, %v387, %v667
        %669 = vst [vmem:[%s633 + $0x30] sm:$0xf] %v668
        %670 = vst.msk [vmem:[%s633 + $0x34] sm:$0xf] %vm222, %v396
        %v671 = vld [vmem:[%s633 + $0x38] sm:$0x1]
        %v672 = vsel %vm642, %v397, %v671
        %673 = vst [vmem:[%s633 + $0x38] sm:$0x1] %v672
        %v674 = vld [vmem:[%s633 + $0x3c] sm:$0xf]
        %v675 = vsel %vm636, %v404, %v674
        %676 = vst [vmem:[%s633 + $0x3c] sm:$0xf] %v675
        %677 = vst.msk [vmem:[%s633 + $0x40] sm:$0xf] %vm222, %v413
        %v678 = vld [vmem:[%s633 + $0x44] sm:$0x1]
        %v679 = vsel %vm642, %v414, %v678
        %680 = vst [vmem:[%s633 + $0x44] sm:$0x1] %v679
        %v681 = vld [vmem:[%s633 + $0x48] sm:$0xf]
        %v682 = vsel %vm636, %v421, %v681
        %683 = vst [vmem:[%s633 + $0x48] sm:$0xf] %v682
        %684 = vst.msk [vmem:[%s633 + $0x4c] sm:$0xf] %vm222, %v430
        %v685 = vld [vmem:[%s633 + $0x50] sm:$0x1]
        %v686 = vsel %vm642, %v431, %v685
        %687 = vst [vmem:[%s633 + $0x50] sm:$0x1] %v686
        %v688 = vld [vmem:[%s633 + $0x54] sm:$0xf]
        %v689 = vsel %vm636, %v438, %v688
        %690 = vst [vmem:[%s633 + $0x54] sm:$0xf] %v689
        %691 = vst.msk [vmem:[%s633 + $0x58] sm:$0xf] %vm222, %v447
        %v692 = vld [vmem:[%s633 + $0x5c] sm:$0x1]
        %v693 = vsel %vm642, %v448, %v692
        %694 = vst [vmem:[%s633 + $0x5c] sm:$0x1] %v693
        %v695 = vld [vmem:[%s633 + $0x60] sm:$0xf]
        %v696 = vsel %vm636, %v455, %v695
        %697 = vst [vmem:[%s633 + $0x60] sm:$0xf] %v696
        %698 = vst.msk [vmem:[%s633 + $0x64] sm:$0xf] %vm222, %v464
        %v699 = vld [vmem:[%s633 + $0x68] sm:$0x1]
        %v700 = vsel %vm642, %v465, %v699
        %701 = vst [vmem:[%s633 + $0x68] sm:$0x1] %v700
        %v702 = vld [vmem:[%s633 + $0x6c] sm:$0xf]
        %v703 = vsel %vm636, %v472, %v702
        %704 = vst [vmem:[%s633 + $0x6c] sm:$0xf] %v703
        %705 = vst.msk [vmem:[%s633 + $0x70] sm:$0xf] %vm222, %v481
        %v706 = vld [vmem:[%s633 + $0x74] sm:$0x1]
        %v707 = vsel %vm642, %v482, %v706
        %708 = vst [vmem:[%s633 + $0x74] sm:$0x1] %v707
        %v709 = vld [vmem:[%s633 + $0x78] sm:$0xf]
        %v710 = vsel %vm636, %v489, %v709
        %711 = vst [vmem:[%s633 + $0x78] sm:$0xf] %v710
        %712 = vst.msk [vmem:[%s633 + $0x7c] sm:$0xf] %vm222, %v498
        %v713 = vld [vmem:[%s633 + $0x80] sm:$0x1]
        %v714 = vsel %vm642, %v499, %v713
        %715 = vst [vmem:[%s633 + $0x80] sm:$0x1] %v714
        %v716 = vld [vmem:[%s633 + $0x84] sm:$0xf]
        %v717 = vsel %vm636, %v506, %v716
        %718 = vst [vmem:[%s633 + $0x84] sm:$0xf] %v717
        %719 = vst.msk [vmem:[%s633 + $0x88] sm:$0xf] %vm222, %v515
        %v720 = vld [vmem:[%s633 + $0x8c] sm:$0x1]
        %v721 = vsel %vm642, %v516, %v720
        %722 = vst [vmem:[%s633 + $0x8c] sm:$0x1] %v721
        %v723 = vld [vmem:[%s633 + $0x90] sm:$0xf]
        %v724 = vsel %vm636, %v523, %v723
        %725 = vst [vmem:[%s633 + $0x90] sm:$0xf] %v724
        %726 = vst.msk [vmem:[%s633 + $0x94] sm:$0xf] %vm222, %v532
        %v727 = vld [vmem:[%s633 + $0x98] sm:$0x1]
        %v728 = vsel %vm642, %v533, %v727
        %729 = vst [vmem:[%s633 + $0x98] sm:$0x1] %v728
        %v730 = vld [vmem:[%s633 + $0x9c] sm:$0xf]
        %v731 = vsel %vm636, %v540, %v730
        %732 = vst [vmem:[%s633 + $0x9c] sm:$0xf] %v731
        %733 = vst.msk [vmem:[%s633 + $0xa0] sm:$0xf] %vm222, %v549
        %v734 = vld [vmem:[%s633 + $0xa4] sm:$0x1]
        %v735 = vsel %vm642, %v550, %v734
        %736 = vst [vmem:[%s633 + $0xa4] sm:$0x1] %v735
        %v737 = vld [vmem:[%s633 + $0xa8] sm:$0xf]
        %v738 = vsel %vm636, %v557, %v737
        %739 = vst [vmem:[%s633 + $0xa8] sm:$0xf] %v738
        %740 = vst.msk [vmem:[%s633 + $0xac] sm:$0xf] %vm222, %v566
        %v741 = vld [vmem:[%s633 + $0xb0] sm:$0x1]
        %v742 = vsel %vm642, %v567, %v741
        %743 = vst [vmem:[%s633 + $0xb0] sm:$0x1] %v742
        %v744 = vld [vmem:[%s633 + $0xb4] sm:$0xf]
        %v745 = vsel %vm636, %v574, %v744
        %746 = vst [vmem:[%s633 + $0xb4] sm:$0xf] %v745
        %747 = vst.msk [vmem:[%s633 + $0xb8] sm:$0xf] %vm222, %v583
        %v748 = vld [vmem:[%s633 + $0xbc] sm:$0x1]
        %v749 = vsel %vm642, %v584, %v748
        %750 = vst [vmem:[%s633 + $0xbc] sm:$0x1] %v749
        %751 = vst [vmem:[#allocation3] sm:$0xff] 0
        %752 = vst [vmem:[#allocation3 + $0x8] sm:$0xff] 0
        %753 = vst [vmem:[#allocation3 + $0x10] sm:$0xff] 0
        %754 = vst [vmem:[#allocation3 + $0x18] sm:$0xff] 0
        %755 = vst [vmem:[#allocation3 + $0x20] sm:$0xf] 0
        %756 = vst [vmem:[#allocation3 + $0x24] sm:$0xff] 0
        %757 = vst [vmem:[#allocation3 + $0x2c] sm:$0xff] 0
        %758 = vst [vmem:[#allocation3 + $0x34] sm:$0xff] 0
        %759 = vst [vmem:[#allocation3 + $0x3c] sm:$0xff] 0
        %760 = vst [vmem:[#allocation3 + $0x44] sm:$0xf] 0
        %761 = vst [vmem:[#allocation3 + $0x48] sm:$0xff] 0
        %762 = vst [vmem:[#allocation3 + $0x50] sm:$0xff] 0
        %763 = vst [vmem:[#allocation3 + $0x58] sm:$0xff] 0
        %764 = vst [vmem:[#allocation3 + $0x60] sm:$0xff] 0
        %765 = vst [vmem:[#allocation3 + $0x68] sm:$0xf] 0
        %766 = vst [vmem:[#allocation3 + $0x6c] sm:$0xff] 0
        %767 = vst [vmem:[#allocation3 + $0x74] sm:$0xff] 0
        %768 = vst [vmem:[#allocation3 + $0x7c] sm:$0xff] 0
        %769 = vst [vmem:[#allocation3 + $0x84] sm:$0xff] 0
        %770 = vst [vmem:[#allocation3 + $0x8c] sm:$0xf] 0
        %771 = vst [vmem:[#allocation3 + $0x90] sm:$0xff] 0
        %772 = vst [vmem:[#allocation3 + $0x98] sm:$0xff] 0
        %773 = vst [vmem:[#allocation3 + $0xa0] sm:$0xff] 0
        %774 = vst [vmem:[#allocation3 + $0xa8] sm:$0xff] 0
        %775 = vst [vmem:[#allocation3 + $0xb0] sm:$0xf] 0
        %776 = vst [vmem:[#allocation3 + $0xb4] sm:$0xff] 0
        %777 = vst [vmem:[#allocation3 + $0xbc] sm:$0xff] 0
        %778 = vst [vmem:[#allocation3 + $0xc4] sm:$0xff] 0
        %779 = vst [vmem:[#allocation3 + $0xcc] sm:$0xff] 0
        %780 = vst [vmem:[#allocation3 + $0xd4] sm:$0xf] 0
        %781 = vst [vmem:[#allocation3 + $0xd8] sm:$0xff] 0
        %782 = vst [vmem:[#allocation3 + $0xe0] sm:$0xff] 0
        %783 = vst [vmem:[#allocation3 + $0xe8] sm:$0xff] 0
        %784 = vst [vmem:[#allocation3 + $0xf0] sm:$0xff] 0
        %785 = vst [vmem:[#allocation3 + $0xf8] sm:$0xf] 0
        %786 = vst [vmem:[#allocation3 + $0xfc] sm:$0xff] 0
        %787 = vst [vmem:[#allocation3 + $0x104] sm:$0xff] 0
        %788 = vst [vmem:[#allocation3 + $0x10c] sm:$0xff] 0
        %789 = vst [vmem:[#allocation3 + $0x114] sm:$0xff] 0
        %790 = vst [vmem:[#allocation3 + $0x11c] sm:$0xf] 0
        %791 = vst [vmem:[#allocation3 + $0x120] sm:$0xff] 0
        %792 = vst [vmem:[#allocation3 + $0x128] sm:$0xff] 0
        %793 = vst [vmem:[#allocation3 + $0x130] sm:$0xff] 0
        %794 = vst [vmem:[#allocation3 + $0x138] sm:$0xff] 0
        %795 = vst [vmem:[#allocation3 + $0x140] sm:$0xf] 0
        %796 = vst [vmem:[#allocation3 + $0x144] sm:$0xff] 0
        %797 = vst [vmem:[#allocation3 + $0x14c] sm:$0xff] 0
        %798 = vst [vmem:[#allocation3 + $0x154] sm:$0xff] 0
        %799 = vst [vmem:[#allocation3 + $0x15c] sm:$0xff] 0
        %800 = vst [vmem:[#allocation3 + $0x164] sm:$0xf] 0
        %801 = vst [vmem:[#allocation3 + $0x168] sm:$0xff] 0
        %802 = vst [vmem:[#allocation3 + $0x170] sm:$0xff] 0
        %803 = vst [vmem:[#allocation3 + $0x178] sm:$0xff] 0
        %804 = vst [vmem:[#allocation3 + $0x180] sm:$0xff] 0
        %805 = vst [vmem:[#allocation3 + $0x188] sm:$0xf] 0
        %806 = vst [vmem:[#allocation3 + $0x18c] sm:$0xff] 0
        %807 = vst [vmem:[#allocation3 + $0x194] sm:$0xff] 0
        %808 = vst [vmem:[#allocation3 + $0x19c] sm:$0xff] 0
        %809 = vst [vmem:[#allocation3 + $0x1a4] sm:$0xff] 0
        %810 = vst [vmem:[#allocation3 + $0x1ac] sm:$0xf] 0
        %811 = vst [vmem:[#allocation3 + $0x1b0] sm:$0xff] 0
        %812 = vst [vmem:[#allocation3 + $0x1b8] sm:$0xff] 0
        %813 = vst [vmem:[#allocation3 + $0x1c0] sm:$0xff] 0
        %814 = vst [vmem:[#allocation3 + $0x1c8] sm:$0xff] 0
        %815 = vst [vmem:[#allocation3 + $0x1d0] sm:$0xf] 0
        %816 = vst [vmem:[#allocation3 + $0x1d4] sm:$0xff] 0
        %817 = vst [vmem:[#allocation3 + $0x1dc] sm:$0xff] 0
        %818 = vst [vmem:[#allocation3 + $0x1e4] sm:$0xff] 0
        %819 = vst [vmem:[#allocation3 + $0x1ec] sm:$0xff] 0
        %820 = vst [vmem:[#allocation3 + $0x1f4] sm:$0xf] 0
        %821 = vst [vmem:[#allocation3 + $0x1f8] sm:$0xff] 0
        %822 = vst [vmem:[#allocation3 + $0x200] sm:$0xff] 0
        %823 = vst [vmem:[#allocation3 + $0x208] sm:$0xff] 0
        %824 = vst [vmem:[#allocation3 + $0x210] sm:$0xff] 0
        %825 = vst [vmem:[#allocation3 + $0x218] sm:$0xf] 0
        %826 = vst [vmem:[#allocation3 + $0x21c] sm:$0xff] 0
        %827 = vst [vmem:[#allocation3 + $0x224] sm:$0xff] 0
        %828 = vst [vmem:[#allocation3 + $0x22c] sm:$0xff] 0
        %829 = vst [vmem:[#allocation3 + $0x234] sm:$0xff] 0
        %830 = vst [vmem:[#allocation3 + $0x23c] sm:$0xf] 0
        %831 = vst [vmem:[#allocation3 + $0x240] sm:$0xff] 0
        %832 = vst [vmem:[#allocation3 + $0x248] sm:$0xff] 0
        %833 = vst [vmem:[#allocation3 + $0x250] sm:$0xff] 0
        %834 = vst [vmem:[#allocation3 + $0x258] sm:$0xff] 0
        %835 = vst [vmem:[#allocation3 + $0x260] sm:$0xf] 0
        %836 = vst [vmem:[#allocation3 + $0x264] sm:$0xff] 0
        %837 = vst [vmem:[#allocation3 + $0x26c] sm:$0xff] 0
        %838 = vst [vmem:[#allocation3 + $0x274] sm:$0xff] 0
        %839 = vst [vmem:[#allocation3 + $0x27c] sm:$0xff] 0
        %840 = vst [vmem:[#allocation3 + $0x284] sm:$0xf] 0
        %841 = vst [vmem:[#allocation3 + $0x288] sm:$0xff] 0
        %842 = vst [vmem:[#allocation3 + $0x290] sm:$0xff] 0
        %843 = vst [vmem:[#allocation3 + $0x298] sm:$0xff] 0
        %844 = vst [vmem:[#allocation3 + $0x2a0] sm:$0xff] 0
        %845 = vst [vmem:[#allocation3 + $0x2a8] sm:$0xf] 0
        %846 = vst [vmem:[#allocation3 + $0x2ac] sm:$0xff] 0
        %847 = vst [vmem:[#allocation3 + $0x2b4] sm:$0xff] 0
        %848 = vst [vmem:[#allocation3 + $0x2bc] sm:$0xff] 0
        %849 = vst [vmem:[#allocation3 + $0x2c4] sm:$0xff] 0
        %850 = vst [vmem:[#allocation3 + $0x2cc] sm:$0xf] 0
        %851 = vst [vmem:[#allocation3 + $0x2d0] sm:$0xff] 0
        %852 = vst [vmem:[#allocation3 + $0x2d8] sm:$0xff] 0
        %853 = vst [vmem:[#allocation3 + $0x2e0] sm:$0xff] 0
        %854 = vst [vmem:[#allocation3 + $0x2e8] sm:$0xff] 0
        %855 = vst [vmem:[#allocation3 + $0x2f0] sm:$0xf] 0
        %856 = vst [vmem:[#allocation3 + $0x2f4] sm:$0xff] 0
        %857 = vst [vmem:[#allocation3 + $0x2fc] sm:$0xff] 0
        %858 = vst [vmem:[#allocation3 + $0x304] sm:$0xff] 0
        %859 = vst [vmem:[#allocation3 + $0x30c] sm:$0xff] 0
        %860 = vst [vmem:[#allocation3 + $0x314] sm:$0xf] 0
        %861 = vst [vmem:[#allocation3 + $0x318] sm:$0xff] 0
        %862 = vst [vmem:[#allocation3 + $0x320] sm:$0xff] 0
        %863 = vst [vmem:[#allocation3 + $0x328] sm:$0xff] 0
        %864 = vst [vmem:[#allocation3 + $0x330] sm:$0xff] 0
        %865 = vst [vmem:[#allocation3 + $0x338] sm:$0xf] 0
        %866 = vst [vmem:[#allocation3 + $0x33c] sm:$0xff] 0
        %867 = vst [vmem:[#allocation3 + $0x344] sm:$0xff] 0
        %868 = vst [vmem:[#allocation3 + $0x34c] sm:$0xff] 0
        %869 = vst [vmem:[#allocation3 + $0x354] sm:$0xff] 0
        %870 = vst [vmem:[#allocation3 + $0x35c] sm:$0xf] 0
        %871 = vst [vmem:[#allocation3 + $0x360] sm:$0xff] 0
        %872 = vst [vmem:[#allocation3 + $0x368] sm:$0xff] 0
        %873 = vst [vmem:[#allocation3 + $0x370] sm:$0xff] 0
        %874 = vst [vmem:[#allocation3 + $0x378] sm:$0xff] 0
        %875 = vst [vmem:[#allocation3 + $0x380] sm:$0xf] 0
        %876 = vst [vmem:[#allocation3 + $0x384] sm:$0xff] 0
        %877 = vst [vmem:[#allocation3 + $0x38c] sm:$0xff] 0
        %878 = vst [vmem:[#allocation3 + $0x394] sm:$0xff] 0
        %879 = vst [vmem:[#allocation3 + $0x39c] sm:$0xff] 0
        %880 = vst [vmem:[#allocation3 + $0x3a4] sm:$0xf] 0
        %881 = vst [vmem:[#allocation3 + $0x3a8] sm:$0xff] 0
        %882 = vst [vmem:[#allocation3 + $0x3b0] sm:$0xff] 0
        %883 = vst [vmem:[#allocation3 + $0x3b8] sm:$0xff] 0
        %884 = vst [vmem:[#allocation3 + $0x3c0] sm:$0xff] 0
        %885 = vst [vmem:[#allocation3 + $0x3c8] sm:$0xf] 0
        %886 = vst [vmem:[#allocation3 + $0x3cc] sm:$0xff] 0
        %887 = vst [vmem:[#allocation3 + $0x3d4] sm:$0xff] 0
        %888 = vst [vmem:[#allocation3 + $0x3dc] sm:$0xff] 0
        %889 = vst [vmem:[#allocation3 + $0x3e4] sm:$0xff] 0
        %890 = vst [vmem:[#allocation3 + $0x3ec] sm:$0xf] 0
        %891 = vst [vmem:[#allocation3 + $0x3f0] sm:$0xff] 0
        %892 = vst [vmem:[#allocation3 + $0x3f8] sm:$0xff] 0
        %893 = vst [vmem:[#allocation3 + $0x400] sm:$0xff] 0
        %894 = vst [vmem:[#allocation3 + $0x408] sm:$0xff] 0
        %895 = vst [vmem:[#allocation3 + $0x410] sm:$0xf] 0
        %896 = vst [vmem:[#allocation3 + $0x414] sm:$0xff] 0
        %897 = vst [vmem:[#allocation3 + $0x41c] sm:$0xff] 0
        %898 = vst [vmem:[#allocation3 + $0x424] sm:$0xff] 0
        %899 = vst [vmem:[#allocation3 + $0x42c] sm:$0xff] 0
        %900 = vst [vmem:[#allocation3 + $0x434] sm:$0xf] 0
        %901 = vst [vmem:[#allocation3 + $0x438] sm:$0xff] 0
        %902 = vst [vmem:[#allocation3 + $0x440] sm:$0xff] 0
        %903 = vst [vmem:[#allocation3 + $0x448] sm:$0xff] 0
        %904 = vst [vmem:[#allocation3 + $0x450] sm:$0xff] 0
        %905 = vst [vmem:[#allocation3 + $0x458] sm:$0xf] 0
        %906 = vst [vmem:[#allocation3 + $0x45c] sm:$0xff] 0
        %907 = vst [vmem:[#allocation3 + $0x464] sm:$0xff] 0
        %908 = vst [vmem:[#allocation3 + $0x46c] sm:$0xff] 0
        %909 = vst [vmem:[#allocation3 + $0x474] sm:$0xff] 0
        %910 = vst [vmem:[#allocation3 + $0x47c] sm:$0xf] 0
        %v911 = vld [vmem:[#allocation2] sm:$0xf]
        %v912 = vld [vmem:[#allocation2 + $0x4] sm:$0xf]
        %v913 = vld [vmem:[#allocation2 + $0xc] sm:$0xf]
        %v914 = vld [vmem:[#allocation2 + $0x10] sm:$0xf]
        %v915 = vld [vmem:[#allocation2 + $0x18] sm:$0xf]
        %v916 = vld [vmem:[#allocation2 + $0x1c] sm:$0xf]
        %v917 = vld [vmem:[#allocation2 + $0x24] sm:$0xf]
        %v918 = vld [vmem:[#allocation2 + $0x28] sm:$0xf]
        %v919 = vld [vmem:[#allocation2 + $0x30] sm:$0xf]
        %v920 = vld [vmem:[#allocation2 + $0x34] sm:$0xf]
        %v921 = vld [vmem:[#allocation2 + $0x3c] sm:$0xf]
        %v922 = vld [vmem:[#allocation2 + $0x40] sm:$0xf]
        %v923 = vld [vmem:[#allocation2 + $0x48] sm:$0xf]
        %v924 = vld [vmem:[#allocation2 + $0x4c] sm:$0xf]
        %v925 = vld [vmem:[#allocation2 + $0x54] sm:$0xf]
        %v926 = vld [vmem:[#allocation2 + $0x58] sm:$0xf]
        %v927 = vld [vmem:[#allocation2 + $0x60] sm:$0xf]
        %v928 = vld [vmem:[#allocation2 + $0x64] sm:$0xf]
        %v929 = vld [vmem:[#allocation2 + $0x6c] sm:$0xf]
        %v930 = vld [vmem:[#allocation2 + $0x70] sm:$0xf]
        %v931 = vld [vmem:[#allocation2 + $0x78] sm:$0xf]
        %v932 = vld [vmem:[#allocation2 + $0x7c] sm:$0xf]
        %v933 = vld [vmem:[#allocation2 + $0x84] sm:$0xf]
        %v934 = vld [vmem:[#allocation2 + $0x88] sm:$0xf]
        %v935 = vld [vmem:[#allocation2 + $0x90] sm:$0xf]
        %v936 = vld [vmem:[#allocation2 + $0x94] sm:$0xf]
        %v937 = vld [vmem:[#allocation2 + $0x9c] sm:$0xf]
        %v938 = vld [vmem:[#allocation2 + $0xa0] sm:$0xf]
        %v939 = vld [vmem:[#allocation2 + $0xa8] sm:$0xf]
        %v940 = vld [vmem:[#allocation2 + $0xac] sm:$0xf]
        %v941 = vld [vmem:[#allocation2 + $0xb4] sm:$0xf]
        %v942 = vld [vmem:[#allocation2 + $0xb8] sm:$0xf]
        %943 = vst.msk [vmem:[#allocation3] sm:$0xf] %vm222, %v911
        %944 = vst.msk [vmem:[#allocation3 + $0x24] sm:$0xf] %vm222, %v912
        %945 = vst.msk [vmem:[#allocation3 + $0x48] sm:$0xf] %vm222, %v913
        %946 = vst.msk [vmem:[#allocation3 + $0x6c] sm:$0xf] %vm222, %v914
        %947 = vst.msk [vmem:[#allocation3 + $0x90] sm:$0xf] %vm222, %v915
        %948 = vst.msk [vmem:[#allocation3 + $0xb4] sm:$0xf] %vm222, %v916
        %949 = vst.msk [vmem:[#allocation3 + $0xd8] sm:$0xf] %vm222, %v917
        %950 = vst.msk [vmem:[#allocation3 + $0xfc] sm:$0xf] %vm222, %v918
        %951 = vst.msk [vmem:[#allocation3 + $0x120] sm:$0xf] %vm222, %v919
        %952 = vst.msk [vmem:[#allocation3 + $0x144] sm:$0xf] %vm222, %v920
        %953 = vst.msk [vmem:[#allocation3 + $0x168] sm:$0xf] %vm222, %v921
        %954 = vst.msk [vmem:[#allocation3 + $0x18c] sm:$0xf] %vm222, %v922
        %955 = vst.msk [vmem:[#allocation3 + $0x1b0] sm:$0xf] %vm222, %v923
        %956 = vst.msk [vmem:[#allocation3 + $0x1d4] sm:$0xf] %vm222, %v924
        %957 = vst.msk [vmem:[#allocation3 + $0x1f8] sm:$0xf] %vm222, %v925
        %958 = vst.msk [vmem:[#allocation3 + $0x21c] sm:$0xf] %vm222, %v926
        %959 = vst.msk [vmem:[#allocation3 + $0x240] sm:$0xf] %vm222, %v927
        %960 = vst.msk [vmem:[#allocation3 + $0x264] sm:$0xf] %vm222, %v928
        %961 = vst.msk [vmem:[#allocation3 + $0x288] sm:$0xf] %vm222, %v929
        %962 = vst.msk [vmem:[#allocation3 + $0x2ac] sm:$0xf] %vm222, %v930
        %963 = vst.msk [vmem:[#allocation3 + $0x2d0] sm:$0xf] %vm222, %v931
        %964 = vst.msk [vmem:[#allocation3 + $0x2f4] sm:$0xf] %vm222, %v932
        %965 = vst.msk [vmem:[#allocation3 + $0x318] sm:$0xf] %vm222, %v933
        %966 = vst.msk [vmem:[#allocation3 + $0x33c] sm:$0xf] %vm222, %v934
        %967 = vst.msk [vmem:[#allocation3 + $0x360] sm:$0xf] %vm222, %v935
        %968 = vst.msk [vmem:[#allocation3 + $0x384] sm:$0xf] %vm222, %v936
        %969 = vst.msk [vmem:[#allocation3 + $0x3a8] sm:$0xf] %vm222, %v937
        %970 = vst.msk [vmem:[#allocation3 + $0x3cc] sm:$0xf] %vm222, %v938
        %971 = vst.msk [vmem:[#allocation3 + $0x3f0] sm:$0xf] %vm222, %v939
        %972 = vst.msk [vmem:[#allocation3 + $0x414] sm:$0xf] %vm222, %v940
        %973 = vst.msk [vmem:[#allocation3 + $0x438] sm:$0xf] %vm222, %v941
        %974 = vst.msk [vmem:[#allocation3 + $0x45c] sm:$0xf] %vm222, %v942
        %v975 = vld [vmem:[#allocation2] sm:$0xf]
        %v976 = vld [vmem:[#allocation2 + $0x4] sm:$0xf]
        %v977 = vld [vmem:[#allocation2 + $0x8] sm:$0x1]
        %v978 = vld [vmem:[#allocation2 + $0xc] sm:$0xf]
        %v979 = vld [vmem:[#allocation2 + $0x10] sm:$0xf]
        %v980 = vld [vmem:[#allocation2 + $0x14] sm:$0x1]
        %v981 = vld [vmem:[#allocation2 + $0x18] sm:$0xf]
        %v982 = vld [vmem:[#allocation2 + $0x1c] sm:$0xf]
        %v983 = vld [vmem:[#allocation2 + $0x20] sm:$0x1]
        %v984 = vld [vmem:[#allocation2 + $0x24] sm:$0xf]
        %v985 = vld [vmem:[#allocation2 + $0x28] sm:$0xf]
        %v986 = vld [vmem:[#allocation2 + $0x2c] sm:$0x1]
        %v987 = vld [vmem:[#allocation2 + $0x30] sm:$0xf]
        %v988 = vld [vmem:[#allocation2 + $0x34] sm:$0xf]
        %v989 = vld [vmem:[#allocation2 + $0x38] sm:$0x1]
        %v990 = vld [vmem:[#allocation2 + $0x3c] sm:$0xf]
        %v991 = vld [vmem:[#allocation2 + $0x40] sm:$0xf]
        %v992 = vld [vmem:[#allocation2 + $0x44] sm:$0x1]
        %v993 = vld [vmem:[#allocation2 + $0x48] sm:$0xf]
        %v994 = vld [vmem:[#allocation2 + $0x4c] sm:$0xf]
        %v995 = vld [vmem:[#allocation2 + $0x50] sm:$0x1]
        %v996 = vld [vmem:[#allocation2 + $0x54] sm:$0xf]
        %v997 = vld [vmem:[#allocation2 + $0x58] sm:$0xf]
        %v998 = vld [vmem:[#allocation2 + $0x5c] sm:$0x1]
        %v999 = vld [vmem:[#allocation2 + $0x60] sm:$0xf]
        %v1000 = vld [vmem:[#allocation2 + $0x64] sm:$0xf]
        %v1001 = vld [vmem:[#allocation2 + $0x68] sm:$0x1]
        %v1002 = vld [vmem:[#allocation2 + $0x6c] sm:$0xf]
        %v1003 = vld [vmem:[#allocation2 + $0x70] sm:$0xf]
        %v1004 = vld [vmem:[#allocation2 + $0x74] sm:$0x1]
        %v1005 = vld [vmem:[#allocation2 + $0x78] sm:$0xf]
        %v1006 = vld [vmem:[#allocation2 + $0x7c] sm:$0xf]
        %v1007 = vld [vmem:[#allocation2 + $0x80] sm:$0x1]
        %v1008 = vld [vmem:[#allocation2 + $0x84] sm:$0xf]
        %v1009 = vld [vmem:[#allocation2 + $0x88] sm:$0xf]
        %v1010 = vld [vmem:[#allocation2 + $0x8c] sm:$0x1]
        %v1011 = vld [vmem:[#allocation2 + $0x90] sm:$0xf]
        %v1012 = vld [vmem:[#allocation2 + $0x94] sm:$0xf]
        %v1013 = vld [vmem:[#allocation2 + $0x98] sm:$0x1]
        %v1014 = vld [vmem:[#allocation2 + $0x9c] sm:$0xf]
        %v1015 = vld [vmem:[#allocation2 + $0xa0] sm:$0xf]
        %v1016 = vld [vmem:[#allocation2 + $0xa4] sm:$0x1]
        %v1017 = vld [vmem:[#allocation2 + $0xa8] sm:$0xf]
        %v1018 = vld [vmem:[#allocation2 + $0xac] sm:$0xf]
        %v1019 = vld [vmem:[#allocation2 + $0xb0] sm:$0x1]
        %v1020 = vld [vmem:[#allocation2 + $0xb4] sm:$0xf]
        %v1021 = vld [vmem:[#allocation2 + $0xb8] sm:$0xf]
        %v1022 = vld [vmem:[#allocation2 + $0xbc] sm:$0x1]
        %vm1023 = vsmask.f32 3328
        %vm1024 = vsmask.f32 7440
        %vm1025 = vmor %vm1023, %vm1024
        %v1027 = vshrl.u32 %v975, 16
        %v1029 = vrot.slane %v1027, 4
        %v1030 = vshll.u32 %v975, 16
        %v1032 = vrot.slane %v1030, 5
        %v1033 = vor.u32 %v1029, %v1032
        %v1034 = vrot.slane %v1033, 4
        %v1036 = vshll.u32 %v976, 16
        %v1038 = vrot.slane %v1036, 5
        %v1039 = vsel %vm1025, %v1034, %v1038
        %v1040 = vshrl.u32 %v976, 16
        %v1042 = vrot.slane %v1040, 4
        %v1043 = vor.u32 %v1042, %v1038
        %v1044 = vrot.slane %v1043, 4
        %v1046 = vshll.u32 %v977, 16
        %v1048 = vrot.slane %v1046, 5
        %v1049 = vsel %vm1025, %v1044, %v1048
        %v1051 = vshrl.u32 %v978, 16
        %v1053 = vrot.slane %v1051, 4
        %v1054 = vshll.u32 %v978, 16
        %v1056 = vrot.slane %v1054, 5
        %v1057 = vor.u32 %v1053, %v1056
        %v1058 = vrot.slane %v1057, 4
        %v1060 = vshll.u32 %v979, 16
        %v1062 = vrot.slane %v1060, 5
        %v1063 = vsel %vm1025, %v1058, %v1062
        %v1064 = vshrl.u32 %v979, 16
        %v1066 = vrot.slane %v1064, 4
        %v1067 = vor.u32 %v1066, %v1062
        %v1068 = vrot.slane %v1067, 4
        %v1070 = vshll.u32 %v980, 16
        %v1072 = vrot.slane %v1070, 5
        %v1073 = vsel %vm1025, %v1068, %v1072
        %v1075 = vshrl.u32 %v981, 16
        %v1077 = vrot.slane %v1075, 4
        %v1078 = vshll.u32 %v981, 16
        %v1080 = vrot.slane %v1078, 5
        %v1081 = vor.u32 %v1077, %v1080
        %v1082 = vrot.slane %v1081, 4
        %v1084 = vshll.u32 %v982, 16
        %v1086 = vrot.slane %v1084, 5
        %v1087 = vsel %vm1025, %v1082, %v1086
        %v1088 = vshrl.u32 %v982, 16
        %v1090 = vrot.slane %v1088, 4
        %v1091 = vor.u32 %v1090, %v1086
        %v1092 = vrot.slane %v1091, 4
        %v1094 = vshll.u32 %v983, 16
        %v1096 = vrot.slane %v1094, 5
        %v1097 = vsel %vm1025, %v1092, %v1096
        %v1099 = vshrl.u32 %v984, 16
        %v1101 = vrot.slane %v1099, 4
        %v1102 = vshll.u32 %v984, 16
        %v1104 = vrot.slane %v1102, 5
        %v1105 = vor.u32 %v1101, %v1104
        %v1106 = vrot.slane %v1105, 4
        %v1108 = vshll.u32 %v985, 16
        %v1110 = vrot.slane %v1108, 5
        %v1111 = vsel %vm1025, %v1106, %v1110
        %v1112 = vshrl.u32 %v985, 16
        %v1114 = vrot.slane %v1112, 4
        %v1115 = vor.u32 %v1114, %v1110
        %v1116 = vrot.slane %v1115, 4
        %v1118 = vshll.u32 %v986, 16
        %v1120 = vrot.slane %v1118, 5
        %v1121 = vsel %vm1025, %v1116, %v1120
        %v1123 = vshrl.u32 %v987, 16
        %v1125 = vrot.slane %v1123, 4
        %v1126 = vshll.u32 %v987, 16
        %v1128 = vrot.slane %v1126, 5
        %v1129 = vor.u32 %v1125, %v1128
        %v1130 = vrot.slane %v1129, 4
        %v1132 = vshll.u32 %v988, 16
        %v1134 = vrot.slane %v1132, 5
        %v1135 = vsel %vm1025, %v1130, %v1134
        %v1136 = vshrl.u32 %v988, 16
        %v1138 = vrot.slane %v1136, 4
        %v1139 = vor.u32 %v1138, %v1134
        %v1140 = vrot.slane %v1139, 4
        %v1142 = vshll.u32 %v989, 16
        %v1144 = vrot.slane %v1142, 5
        %v1145 = vsel %vm1025, %v1140, %v1144
        %v1147 = vshrl.u32 %v990, 16
        %v1149 = vrot.slane %v1147, 4
        %v1150 = vshll.u32 %v990, 16
        %v1152 = vrot.slane %v1150, 5
        %v1153 = vor.u32 %v1149, %v1152
        %v1154 = vrot.slane %v1153, 4
        %v1156 = vshll.u32 %v991, 16
        %v1158 = vrot.slane %v1156, 5
        %v1159 = vsel %vm1025, %v1154, %v1158
        %v1160 = vshrl.u32 %v991, 16
        %v1162 = vrot.slane %v1160, 4
        %v1163 = vor.u32 %v1162, %v1158
        %v1164 = vrot.slane %v1163, 4
        %v1166 = vshll.u32 %v992, 16
        %v1168 = vrot.slane %v1166, 5
        %v1169 = vsel %vm1025, %v1164, %v1168
        %v1171 = vshrl.u32 %v993, 16
        %v1173 = vrot.slane %v1171, 4
        %v1174 = vshll.u32 %v993, 16
        %v1176 = vrot.slane %v1174, 5
        %v1177 = vor.u32 %v1173, %v1176
        %v1178 = vrot.slane %v1177, 4
        %v1180 = vshll.u32 %v994, 16
        %v1182 = vrot.slane %v1180, 5
        %v1183 = vsel %vm1025, %v1178, %v1182
        %v1184 = vshrl.u32 %v994, 16
        %v1186 = vrot.slane %v1184, 4
        %v1187 = vor.u32 %v1186, %v1182
        %v1188 = vrot.slane %v1187, 4
        %v1190 = vshll.u32 %v995, 16
        %v1192 = vrot.slane %v1190, 5
        %v1193 = vsel %vm1025, %v1188, %v1192
        %v1195 = vshrl.u32 %v996, 16
        %v1197 = vrot.slane %v1195, 4
        %v1198 = vshll.u32 %v996, 16
        %v1200 = vrot.slane %v1198, 5
        %v1201 = vor.u32 %v1197, %v1200
        %v1202 = vrot.slane %v1201, 4
        %v1204 = vshll.u32 %v997, 16
        %v1206 = vrot.slane %v1204, 5
        %v1207 = vsel %vm1025, %v1202, %v1206
        %v1208 = vshrl.u32 %v997, 16
        %v1210 = vrot.slane %v1208, 4
        %v1211 = vor.u32 %v1210, %v1206
        %v1212 = vrot.slane %v1211, 4
        %v1214 = vshll.u32 %v998, 16
        %v1216 = vrot.slane %v1214, 5
        %v1217 = vsel %vm1025, %v1212, %v1216
        %v1219 = vshrl.u32 %v999, 16
        %v1221 = vrot.slane %v1219, 4
        %v1222 = vshll.u32 %v999, 16
        %v1224 = vrot.slane %v1222, 5
        %v1225 = vor.u32 %v1221, %v1224
        %v1226 = vrot.slane %v1225, 4
        %v1228 = vshll.u32 %v1000, 16
        %v1230 = vrot.slane %v1228, 5
        %v1231 = vsel %vm1025, %v1226, %v1230
        %v1232 = vshrl.u32 %v1000, 16
        %v1234 = vrot.slane %v1232, 4
        %v1235 = vor.u32 %v1234, %v1230
        %v1236 = vrot.slane %v1235, 4
        %v1238 = vshll.u32 %v1001, 16
        %v1240 = vrot.slane %v1238, 5
        %v1241 = vsel %vm1025, %v1236, %v1240
        %v1243 = vshrl.u32 %v1002, 16
        %v1245 = vrot.slane %v1243, 4
        %v1246 = vshll.u32 %v1002, 16
        %v1248 = vrot.slane %v1246, 5
        %v1249 = vor.u32 %v1245, %v1248
        %v1250 = vrot.slane %v1249, 4
        %v1252 = vshll.u32 %v1003, 16
        %v1254 = vrot.slane %v1252, 5
        %v1255 = vsel %vm1025, %v1250, %v1254
        %v1256 = vshrl.u32 %v1003, 16
        %v1258 = vrot.slane %v1256, 4
        %v1259 = vor.u32 %v1258, %v1254
        %v1260 = vrot.slane %v1259, 4
        %v1262 = vshll.u32 %v1004, 16
        %v1264 = vrot.slane %v1262, 5
        %v1265 = vsel %vm1025, %v1260, %v1264
        %v1267 = vshrl.u32 %v1005, 16
        %v1269 = vrot.slane %v1267, 4
        %v1270 = vshll.u32 %v1005, 16
        %v1272 = vrot.slane %v1270, 5
        %v1273 = vor.u32 %v1269, %v1272
        %v1274 = vrot.slane %v1273, 4
        %v1276 = vshll.u32 %v1006, 16
        %v1278 = vrot.slane %v1276, 5
        %v1279 = vsel %vm1025, %v1274, %v1278
        %v1280 = vshrl.u32 %v1006, 16
        %v1282 = vrot.slane %v1280, 4
        %v1283 = vor.u32 %v1282, %v1278
        %v1284 = vrot.slane %v1283, 4
        %v1286 = vshll.u32 %v1007, 16
        %v1288 = vrot.slane %v1286, 5
        %v1289 = vsel %vm1025, %v1284, %v1288
        %v1291 = vshrl.u32 %v1008, 16
        %v1293 = vrot.slane %v1291, 4
        %v1294 = vshll.u32 %v1008, 16
        %v1296 = vrot.slane %v1294, 5
        %v1297 = vor.u32 %v1293, %v1296
        %v1298 = vrot.slane %v1297, 4
        %v1300 = vshll.u32 %v1009, 16
        %v1302 = vrot.slane %v1300, 5
        %v1303 = vsel %vm1025, %v1298, %v1302
        %v1304 = vshrl.u32 %v1009, 16
        %v1306 = vrot.slane %v1304, 4
        %v1307 = vor.u32 %v1306, %v1302
        %v1308 = vrot.slane %v1307, 4
        %v1310 = vshll.u32 %v1010, 16
        %v1312 = vrot.slane %v1310, 5
        %v1313 = vsel %vm1025, %v1308, %v1312
        %v1315 = vshrl.u32 %v1011, 16
        %v1317 = vrot.slane %v1315, 4
        %v1318 = vshll.u32 %v1011, 16
        %v1320 = vrot.slane %v1318, 5
        %v1321 = vor.u32 %v1317, %v1320
        %v1322 = vrot.slane %v1321, 4
        %v1324 = vshll.u32 %v1012, 16
        %v1326 = vrot.slane %v1324, 5
        %v1327 = vsel %vm1025, %v1322, %v1326
        %v1328 = vshrl.u32 %v1012, 16
        %v1330 = vrot.slane %v1328, 4
        %v1331 = vor.u32 %v1330, %v1326
        %v1332 = vrot.slane %v1331, 4
        %v1334 = vshll.u32 %v1013, 16
        %v1336 = vrot.slane %v1334, 5
        %v1337 = vsel %vm1025, %v1332, %v1336
        %v1339 = vshrl.u32 %v1014, 16
        %v1341 = vrot.slane %v1339, 4
        %v1342 = vshll.u32 %v1014, 16
        %v1344 = vrot.slane %v1342, 5
        %v1345 = vor.u32 %v1341, %v1344
        %v1346 = vrot.slane %v1345, 4
        %v1348 = vshll.u32 %v1015, 16
        %v1350 = vrot.slane %v1348, 5
        %v1351 = vsel %vm1025, %v1346, %v1350
        %v1352 = vshrl.u32 %v1015, 16
        %v1354 = vrot.slane %v1352, 4
        %v1355 = vor.u32 %v1354, %v1350
        %v1356 = vrot.slane %v1355, 4
        %v1358 = vshll.u32 %v1016, 16
        %v1360 = vrot.slane %v1358, 5
        %v1361 = vsel %vm1025, %v1356, %v1360
        %v1363 = vshrl.u32 %v1017, 16
        %v1365 = vrot.slane %v1363, 4
        %v1366 = vshll.u32 %v1017, 16
        %v1368 = vrot.slane %v1366, 5
        %v1369 = vor.u32 %v1365, %v1368
        %v1370 = vrot.slane %v1369, 4
        %v1372 = vshll.u32 %v1018, 16
        %v1374 = vrot.slane %v1372, 5
        %v1375 = vsel %vm1025, %v1370, %v1374
        %v1376 = vshrl.u32 %v1018, 16
        %v1378 = vrot.slane %v1376, 4
        %v1379 = vor.u32 %v1378, %v1374
        %v1380 = vrot.slane %v1379, 4
        %v1382 = vshll.u32 %v1019, 16
        %v1384 = vrot.slane %v1382, 5
        %v1385 = vsel %vm1025, %v1380, %v1384
        %v1387 = vshrl.u32 %v1020, 16
        %v1389 = vrot.slane %v1387, 4
        %v1390 = vshll.u32 %v1020, 16
        %v1392 = vrot.slane %v1390, 5
        %v1393 = vor.u32 %v1389, %v1392
        %v1394 = vrot.slane %v1393, 4
        %v1396 = vshll.u32 %v1021, 16
        %v1398 = vrot.slane %v1396, 5
        %v1399 = vsel %vm1025, %v1394, %v1398
        %v1400 = vshrl.u32 %v1021, 16
        %v1402 = vrot.slane %v1400, 4
        %v1403 = vor.u32 %v1402, %v1398
        %v1404 = vrot.slane %v1403, 4
        %v1406 = vshll.u32 %v1022, 16
        %v1408 = vrot.slane %v1406, 5
        %v1409 = vsel %vm1025, %v1404, %v1408
        %1442 = vst.msk [vmem:[#allocation3 + $0x4] sm:$0xf] %vm222, %v1039
        %1443 = vst.msk [vmem:[#allocation3 + $0x28] sm:$0xf] %vm222, %v1049
        %1444 = vst.msk [vmem:[#allocation3 + $0x4c] sm:$0xf] %vm222, %v1063
        %1445 = vst.msk [vmem:[#allocation3 + $0x70] sm:$0xf] %vm222, %v1073
        %1446 = vst.msk [vmem:[#allocation3 + $0x94] sm:$0xf] %vm222, %v1087
        %1447 = vst.msk [vmem:[#allocation3 + $0xb8] sm:$0xf] %vm222, %v1097
        %1448 = vst.msk [vmem:[#allocation3 + $0xdc] sm:$0xf] %vm222, %v1111
        %1449 = vst.msk [vmem:[#allocation3 + $0x100] sm:$0xf] %vm222, %v1121
        %1450 = vst.msk [vmem:[#allocation3 + $0x124] sm:$0xf] %vm222, %v1135
        %1451 = vst.msk [vmem:[#allocation3 + $0x148] sm:$0xf] %vm222, %v1145
        %1452 = vst.msk [vmem:[#allocation3 + $0x16c] sm:$0xf] %vm222, %v1159
        %1453 = vst.msk [vmem:[#allocation3 + $0x190] sm:$0xf] %vm222, %v1169
        %1454 = vst.msk [vmem:[#allocation3 + $0x1b4] sm:$0xf] %vm222, %v1183
        %1455 = vst.msk [vmem:[#allocation3 + $0x1d8] sm:$0xf] %vm222, %v1193
        %1456 = vst.msk [vmem:[#allocation3 + $0x1fc] sm:$0xf] %vm222, %v1207
        %1457 = vst.msk [vmem:[#allocation3 + $0x220] sm:$0xf] %vm222, %v1217
        %1458 = vst.msk [vmem:[#allocation3 + $0x244] sm:$0xf] %vm222, %v1231
        %1459 = vst.msk [vmem:[#allocation3 + $0x268] sm:$0xf] %vm222, %v1241
        %1460 = vst.msk [vmem:[#allocation3 + $0x28c] sm:$0xf] %vm222, %v1255
        %1461 = vst.msk [vmem:[#allocation3 + $0x2b0] sm:$0xf] %vm222, %v1265
        %1462 = vst.msk [vmem:[#allocation3 + $0x2d4] sm:$0xf] %vm222, %v1279
        %1463 = vst.msk [vmem:[#allocation3 + $0x2f8] sm:$0xf] %vm222, %v1289
        %1464 = vst.msk [vmem:[#allocation3 + $0x31c] sm:$0xf] %vm222, %v1303
        %1465 = vst.msk [vmem:[#allocation3 + $0x340] sm:$0xf] %vm222, %v1313
        %1466 = vst.msk [vmem:[#allocation3 + $0x364] sm:$0xf] %vm222, %v1327
        %1467 = vst.msk [vmem:[#allocation3 + $0x388] sm:$0xf] %vm222, %v1337
        %1468 = vst.msk [vmem:[#allocation3 + $0x3ac] sm:$0xf] %vm222, %v1351
        %1469 = vst.msk [vmem:[#allocation3 + $0x3d0] sm:$0xf] %vm222, %v1361
        %1470 = vst.msk [vmem:[#allocation3 + $0x3f4] sm:$0xf] %vm222, %v1375
        %1471 = vst.msk [vmem:[#allocation3 + $0x418] sm:$0xf] %vm222, %v1385
        %1472 = vst.msk [vmem:[#allocation3 + $0x43c] sm:$0xf] %vm222, %v1399
        %1473 = vst.msk [vmem:[#allocation3 + $0x460] sm:$0xf] %vm222, %v1409
        %v1474 = vld [vmem:[#allocation2] sm:$0xe]
        %v1475 = vld [vmem:[#allocation2 + $0x4] sm:$0xf]
        %v1476 = vld [vmem:[#allocation2 + $0x8] sm:$0x1]
        %v1477 = vld [vmem:[#allocation2 + $0xc] sm:$0xe]
        %v1478 = vld [vmem:[#allocation2 + $0x10] sm:$0xf]
        %v1479 = vld [vmem:[#allocation2 + $0x14] sm:$0x1]
        %v1480 = vld [vmem:[#allocation2 + $0x18] sm:$0xe]
        %v1481 = vld [vmem:[#allocation2 + $0x1c] sm:$0xf]
        %v1482 = vld [vmem:[#allocation2 + $0x20] sm:$0x1]
        %v1483 = vld [vmem:[#allocation2 + $0x24] sm:$0xe]
        %v1484 = vld [vmem:[#allocation2 + $0x28] sm:$0xf]
        %v1485 = vld [vmem:[#allocation2 + $0x2c] sm:$0x1]
        %v1486 = vld [vmem:[#allocation2 + $0x30] sm:$0xe]
        %v1487 = vld [vmem:[#allocation2 + $0x34] sm:$0xf]
        %v1488 = vld [vmem:[#allocation2 + $0x38] sm:$0x1]
        %v1489 = vld [vmem:[#allocation2 + $0x3c] sm:$0xe]
        %v1490 = vld [vmem:[#allocation2 + $0x40] sm:$0xf]
        %v1491 = vld [vmem:[#allocation2 + $0x44] sm:$0x1]
        %v1492 = vld [vmem:[#allocation2 + $0x48] sm:$0xe]
        %v1493 = vld [vmem:[#allocation2 + $0x4c] sm:$0xf]
        %v1494 = vld [vmem:[#allocation2 + $0x50] sm:$0x1]
        %v1495 = vld [vmem:[#allocation2 + $0x54] sm:$0xe]
        %v1496 = vld [vmem:[#allocation2 + $0x58] sm:$0xf]
        %v1497 = vld [vmem:[#allocation2 + $0x5c] sm:$0x1]
        %v1498 = vld [vmem:[#allocation2 + $0x60] sm:$0xe]
        %v1499 = vld [vmem:[#allocation2 + $0x64] sm:$0xf]
        %v1500 = vld [vmem:[#allocation2 + $0x68] sm:$0x1]
        %v1501 = vld [vmem:[#allocation2 + $0x6c] sm:$0xe]
        %v1502 = vld [vmem:[#allocation2 + $0x70] sm:$0xf]
        %v1503 = vld [vmem:[#allocation2 + $0x74] sm:$0x1]
        %v1504 = vld [vmem:[#allocation2 + $0x78] sm:$0xe]
        %v1505 = vld [vmem:[#allocation2 + $0x7c] sm:$0xf]
        %v1506 = vld [vmem:[#allocation2 + $0x80] sm:$0x1]
        %v1507 = vld [vmem:[#allocation2 + $0x84] sm:$0xe]
        %v1508 = vld [vmem:[#allocation2 + $0x88] sm:$0xf]
        %v1509 = vld [vmem:[#allocation2 + $0x8c] sm:$0x1]
        %v1510 = vld [vmem:[#allocation2 + $0x90] sm:$0xe]
        %v1511 = vld [vmem:[#allocation2 + $0x94] sm:$0xf]
        %v1512 = vld [vmem:[#allocation2 + $0x98] sm:$0x1]
        %v1513 = vld [vmem:[#allocation2 + $0x9c] sm:$0xe]
        %v1514 = vld [vmem:[#allocation2 + $0xa0] sm:$0xf]
        %v1515 = vld [vmem:[#allocation2 + $0xa4] sm:$0x1]
        %v1516 = vld [vmem:[#allocation2 + $0xa8] sm:$0xe]
        %v1517 = vld [vmem:[#allocation2 + $0xac] sm:$0xf]
        %v1518 = vld [vmem:[#allocation2 + $0xb0] sm:$0x1]
        %v1519 = vld [vmem:[#allocation2 + $0xb4] sm:$0xe]
        %v1520 = vld [vmem:[#allocation2 + $0xb8] sm:$0xf]
        %v1521 = vld [vmem:[#allocation2 + $0xbc] sm:$0x1]
        %vm1570 = vcmask 1042432
        %vm1571 = vcmask 1046532
        %vm1572 = vmor %vm1570, %vm1571
        %v1573 = vrot.slane %v1474, 5
        %v1574 = vrot.slane %v1573, 4
        %v1575 = vrot.slane %v1475, 5
        %v1576 = vsel %vm1572, %v1574, %v1575
        %v1577 = vrot.slane %v1575, 4
        %v1578 = vrot.slane %v1476, 5
        %v1579 = vsel %vm1572, %v1577, %v1578
        %v1580 = vrot.slane %v1477, 5
        %v1581 = vrot.slane %v1580, 4
        %v1582 = vrot.slane %v1478, 5
        %v1583 = vsel %vm1572, %v1581, %v1582
        %v1584 = vrot.slane %v1582, 4
        %v1585 = vrot.slane %v1479, 5
        %v1586 = vsel %vm1572, %v1584, %v1585
        %v1587 = vrot.slane %v1480, 5
        %v1588 = vrot.slane %v1587, 4
        %v1589 = vrot.slane %v1481, 5
        %v1590 = vsel %vm1572, %v1588, %v1589
        %v1591 = vrot.slane %v1589, 4
        %v1592 = vrot.slane %v1482, 5
        %v1593 = vsel %vm1572, %v1591, %v1592
        %v1594 = vrot.slane %v1483, 5
        %v1595 = vrot.slane %v1594, 4
        %v1596 = vrot.slane %v1484, 5
        %v1597 = vsel %vm1572, %v1595, %v1596
        %v1598 = vrot.slane %v1596, 4
        %v1599 = vrot.slane %v1485, 5
        %v1600 = vsel %vm1572, %v1598, %v1599
        %v1601 = vrot.slane %v1486, 5
        %v1602 = vrot.slane %v1601, 4
        %v1603 = vrot.slane %v1487, 5
        %v1604 = vsel %vm1572, %v1602, %v1603
        %v1605 = vrot.slane %v1603, 4
        %v1606 = vrot.slane %v1488, 5
        %v1607 = vsel %vm1572, %v1605, %v1606
        %v1608 = vrot.slane %v1489, 5
        %v1609 = vrot.slane %v1608, 4
        %v1610 = vrot.slane %v1490, 5
        %v1611 = vsel %vm1572, %v1609, %v1610
        %v1612 = vrot.slane %v1610, 4
        %v1613 = vrot.slane %v1491, 5
        %v1614 = vsel %vm1572, %v1612, %v1613
        %v1615 = vrot.slane %v1492, 5
        %v1616 = vrot.slane %v1615, 4
        %v1617 = vrot.slane %v1493, 5
        %v1618 = vsel %vm1572, %v1616, %v1617
        %v1619 = vrot.slane %v1617, 4
        %v1620 = vrot.slane %v1494, 5
        %v1621 = vsel %vm1572, %v1619, %v1620
        %v1622 = vrot.slane %v1495, 5
        %v1623 = vrot.slane %v1622, 4
        %v1624 = vrot.slane %v1496, 5
        %v1625 = vsel %vm1572, %v1623, %v1624
        %v1626 = vrot.slane %v1624, 4
        %v1627 = vrot.slane %v1497, 5
        %v1628 = vsel %vm1572, %v1626, %v1627
        %v1629 = vrot.slane %v1498, 5
        %v1630 = vrot.slane %v1629, 4
        %v1631 = vrot.slane %v1499, 5
        %v1632 = vsel %vm1572, %v1630, %v1631
        %v1633 = vrot.slane %v1631, 4
        %v1634 = vrot.slane %v1500, 5
        %v1635 = vsel %vm1572, %v1633, %v1634
        %v1636 = vrot.slane %v1501, 5
        %v1637 = vrot.slane %v1636, 4
        %v1638 = vrot.slane %v1502, 5
        %v1639 = vsel %vm1572, %v1637, %v1638
        %v1640 = vrot.slane %v1638, 4
        %v1641 = vrot.slane %v1503, 5
        %v1642 = vsel %vm1572, %v1640, %v1641
        %v1643 = vrot.slane %v1504, 5
        %v1644 = vrot.slane %v1643, 4
        %v1645 = vrot.slane %v1505, 5
        %v1646 = vsel %vm1572, %v1644, %v1645
        %v1647 = vrot.slane %v1645, 4
        %v1648 = vrot.slane %v1506, 5
        %v1649 = vsel %vm1572, %v1647, %v1648
        %v1650 = vrot.slane %v1507, 5
        %v1651 = vrot.slane %v1650, 4
        %v1652 = vrot.slane %v1508, 5
        %v1653 = vsel %vm1572, %v1651, %v1652
        %v1654 = vrot.slane %v1652, 4
        %v1655 = vrot.slane %v1509, 5
        %v1656 = vsel %vm1572, %v1654, %v1655
        %v1657 = vrot.slane %v1510, 5
        %v1658 = vrot.slane %v1657, 4
        %v1659 = vrot.slane %v1511, 5
        %v1660 = vsel %vm1572, %v1658, %v1659
        %v1661 = vrot.slane %v1659, 4
        %v1662 = vrot.slane %v1512, 5
        %v1663 = vsel %vm1572, %v1661, %v1662
        %v1664 = vrot.slane %v1513, 5
        %v1665 = vrot.slane %v1664, 4
        %v1666 = vrot.slane %v1514, 5
        %v1667 = vsel %vm1572, %v1665, %v1666
        %v1668 = vrot.slane %v1666, 4
        %v1669 = vrot.slane %v1515, 5
        %v1670 = vsel %vm1572, %v1668, %v1669
        %v1671 = vrot.slane %v1516, 5
        %v1672 = vrot.slane %v1671, 4
        %v1673 = vrot.slane %v1517, 5
        %v1674 = vsel %vm1572, %v1672, %v1673
        %v1675 = vrot.slane %v1673, 4
        %v1676 = vrot.slane %v1518, 5
        %v1677 = vsel %vm1572, %v1675, %v1676
        %v1678 = vrot.slane %v1519, 5
        %v1679 = vrot.slane %v1678, 4
        %v1680 = vrot.slane %v1520, 5
        %v1681 = vsel %vm1572, %v1679, %v1680
        %v1682 = vrot.slane %v1680, 4
        %v1683 = vrot.slane %v1521, 5
        %v1684 = vsel %vm1572, %v1682, %v1683
        %1717 = vst.msk [vmem:[#allocation3 + $0x8] sm:$0xf] %vm222, %v1576
        %1718 = vst.msk [vmem:[#allocation3 + $0x2c] sm:$0xf] %vm222, %v1579
        %1719 = vst.msk [vmem:[#allocation3 + $0x50] sm:$0xf] %vm222, %v1583
        %1720 = vst.msk [vmem:[#allocation3 + $0x74] sm:$0xf] %vm222, %v1586
        %1721 = vst.msk [vmem:[#allocation3 + $0x98] sm:$0xf] %vm222, %v1590
        %1722 = vst.msk [vmem:[#allocation3 + $0xbc] sm:$0xf] %vm222, %v1593
        %1723 = vst.msk [vmem:[#allocation3 + $0xe0] sm:$0xf] %vm222, %v1597
        %1724 = vst.msk [vmem:[#allocation3 + $0x104] sm:$0xf] %vm222, %v1600
        %1725 = vst.msk [vmem:[#allocation3 + $0x128] sm:$0xf] %vm222, %v1604
        %1726 = vst.msk [vmem:[#allocation3 + $0x14c] sm:$0xf] %vm222, %v1607
        %1727 = vst.msk [vmem:[#allocation3 + $0x170] sm:$0xf] %vm222, %v1611
        %1728 = vst.msk [vmem:[#allocation3 + $0x194] sm:$0xf] %vm222, %v1614
        %1729 = vst.msk [vmem:[#allocation3 + $0x1b8] sm:$0xf] %vm222, %v1618
        %1730 = vst.msk [vmem:[#allocation3 + $0x1dc] sm:$0xf] %vm222, %v1621
        %1731 = vst.msk [vmem:[#allocation3 + $0x200] sm:$0xf] %vm222, %v1625
        %1732 = vst.msk [vmem:[#allocation3 + $0x224] sm:$0xf] %vm222, %v1628
        %1733 = vst.msk [vmem:[#allocation3 + $0x248] sm:$0xf] %vm222, %v1632
        %1734 = vst.msk [vmem:[#allocation3 + $0x26c] sm:$0xf] %vm222, %v1635
        %1735 = vst.msk [vmem:[#allocation3 + $0x290] sm:$0xf] %vm222, %v1639
        %1736 = vst.msk [vmem:[#allocation3 + $0x2b4] sm:$0xf] %vm222, %v1642
        %1737 = vst.msk [vmem:[#allocation3 + $0x2d8] sm:$0xf] %vm222, %v1646
        %1738 = vst.msk [vmem:[#allocation3 + $0x2fc] sm:$0xf] %vm222, %v1649
        %1739 = vst.msk [vmem:[#allocation3 + $0x320] sm:$0xf] %vm222, %v1653
        %1740 = vst.msk [vmem:[#allocation3 + $0x344] sm:$0xf] %vm222, %v1656
        %1741 = vst.msk [vmem:[#allocation3 + $0x368] sm:$0xf] %vm222, %v1660
        %1742 = vst.msk [vmem:[#allocation3 + $0x38c] sm:$0xf] %vm222, %v1663
        %1743 = vst.msk [vmem:[#allocation3 + $0x3b0] sm:$0xf] %vm222, %v1667
        %1744 = vst.msk [vmem:[#allocation3 + $0x3d4] sm:$0xf] %vm222, %v1670
        %1745 = vst.msk [vmem:[#allocation3 + $0x3f8] sm:$0xf] %vm222, %v1674
        %1746 = vst.msk [vmem:[#allocation3 + $0x41c] sm:$0xf] %vm222, %v1677
        %1747 = vst.msk [vmem:[#allocation3 + $0x440] sm:$0xf] %vm222, %v1681
        %1748 = vst.msk [vmem:[#allocation3 + $0x464] sm:$0xf] %vm222, %v1684
        %v1749 = vld [vmem:[%s633] sm:$0xf]
        %v1750 = vld [vmem:[%s633 + $0x4] sm:$0xf]
        %v1751 = vld [vmem:[%s633 + $0xc] sm:$0xf]
        %v1752 = vld [vmem:[%s633 + $0x10] sm:$0xf]
        %v1753 = vld [vmem:[%s633 + $0x18] sm:$0xf]
        %v1754 = vld [vmem:[%s633 + $0x1c] sm:$0xf]
        %v1755 = vld [vmem:[%s633 + $0x24] sm:$0xf]
        %v1756 = vld [vmem:[%s633 + $0x28] sm:$0xf]
        %v1757 = vld [vmem:[%s633 + $0x30] sm:$0xf]
        %v1758 = vld [vmem:[%s633 + $0x34] sm:$0xf]
        %v1759 = vld [vmem:[%s633 + $0x3c] sm:$0xf]
        %v1760 = vld [vmem:[%s633 + $0x40] sm:$0xf]
        %v1761 = vld [vmem:[%s633 + $0x48] sm:$0xf]
        %v1762 = vld [vmem:[%s633 + $0x4c] sm:$0xf]
        %v1763 = vld [vmem:[%s633 + $0x54] sm:$0xf]
        %v1764 = vld [vmem:[%s633 + $0x58] sm:$0xf]
        %v1765 = vld [vmem:[%s633 + $0x60] sm:$0xf]
        %v1766 = vld [vmem:[%s633 + $0x64] sm:$0xf]
        %v1767 = vld [vmem:[%s633 + $0x6c] sm:$0xf]
        %v1768 = vld [vmem:[%s633 + $0x70] sm:$0xf]
        %v1769 = vld [vmem:[%s633 + $0x78] sm:$0xf]
        %v1770 = vld [vmem:[%s633 + $0x7c] sm:$0xf]
        %v1771 = vld [vmem:[%s633 + $0x84] sm:$0xf]
        %v1772 = vld [vmem:[%s633 + $0x88] sm:$0xf]
        %v1773 = vld [vmem:[%s633 + $0x90] sm:$0xf]
        %v1774 = vld [vmem:[%s633 + $0x94] sm:$0xf]
        %v1775 = vld [vmem:[%s633 + $0x9c] sm:$0xf]
        %v1776 = vld [vmem:[%s633 + $0xa0] sm:$0xf]
        %v1777 = vld [vmem:[%s633 + $0xa8] sm:$0xf]
        %v1778 = vld [vmem:[%s633 + $0xac] sm:$0xf]
        %v1779 = vld [vmem:[%s633 + $0xb4] sm:$0xf]
        %v1780 = vld [vmem:[%s633 + $0xb8] sm:$0xf]
        %1781 = vst.msk [vmem:[#allocation3 + $0xc] sm:$0xf] %vm222, %v1749
        %1782 = vst.msk [vmem:[#allocation3 + $0x30] sm:$0xf] %vm222, %v1750
        %1783 = vst.msk [vmem:[#allocation3 + $0x54] sm:$0xf] %vm222, %v1751
        %1784 = vst.msk [vmem:[#allocation3 + $0x78] sm:$0xf] %vm222, %v1752
        %1785 = vst.msk [vmem:[#allocation3 + $0x9c] sm:$0xf] %vm222, %v1753
        %1786 = vst.msk [vmem:[#allocation3 + $0xc0] sm:$0xf] %vm222, %v1754
        %1787 = vst.msk [vmem:[#allocation3 + $0xe4] sm:$0xf] %vm222, %v1755
        %1788 = vst.msk [vmem:[#allocation3 + $0x108] sm:$0xf] %vm222, %v1756
        %1789 = vst.msk [vmem:[#allocation3 + $0x12c] sm:$0xf] %vm222, %v1757
        %1790 = vst.msk [vmem:[#allocation3 + $0x150] sm:$0xf] %vm222, %v1758
        %1791 = vst.msk [vmem:[#allocation3 + $0x174] sm:$0xf] %vm222, %v1759
        %1792 = vst.msk [vmem:[#allocation3 + $0x198] sm:$0xf] %vm222, %v1760
        %1793 = vst.msk [vmem:[#allocation3 + $0x1bc] sm:$0xf] %vm222, %v1761
        %1794 = vst.msk [vmem:[#allocation3 + $0x1e0] sm:$0xf] %vm222, %v1762
        %1795 = vst.msk [vmem:[#allocation3 + $0x204] sm:$0xf] %vm222, %v1763
        %1796 = vst.msk [vmem:[#allocation3 + $0x228] sm:$0xf] %vm222, %v1764
        %1797 = vst.msk [vmem:[#allocation3 + $0x24c] sm:$0xf] %vm222, %v1765
        %1798 = vst.msk [vmem:[#allocation3 + $0x270] sm:$0xf] %vm222, %v1766
        %1799 = vst.msk [vmem:[#allocation3 + $0x294] sm:$0xf] %vm222, %v1767
        %1800 = vst.msk [vmem:[#allocation3 + $0x2b8] sm:$0xf] %vm222, %v1768
        %1801 = vst.msk [vmem:[#allocation3 + $0x2dc] sm:$0xf] %vm222, %v1769
        %1802 = vst.msk [vmem:[#allocation3 + $0x300] sm:$0xf] %vm222, %v1770
        %1803 = vst.msk [vmem:[#allocation3 + $0x324] sm:$0xf] %vm222, %v1771
        %1804 = vst.msk [vmem:[#allocation3 + $0x348] sm:$0xf] %vm222, %v1772
        %1805 = vst.msk [vmem:[#allocation3 + $0x36c] sm:$0xf] %vm222, %v1773
        %1806 = vst.msk [vmem:[#allocation3 + $0x390] sm:$0xf] %vm222, %v1774
        %1807 = vst.msk [vmem:[#allocation3 + $0x3b4] sm:$0xf] %vm222, %v1775
        %1808 = vst.msk [vmem:[#allocation3 + $0x3d8] sm:$0xf] %vm222, %v1776
        %1809 = vst.msk [vmem:[#allocation3 + $0x3fc] sm:$0xf] %vm222, %v1777
        %1810 = vst.msk [vmem:[#allocation3 + $0x420] sm:$0xf] %vm222, %v1778
        %1811 = vst.msk [vmem:[#allocation3 + $0x444] sm:$0xf] %vm222, %v1779
        %1812 = vst.msk [vmem:[#allocation3 + $0x468] sm:$0xf] %vm222, %v1780
        %v1813 = vld [vmem:[%s633] sm:$0xf]
        %v1814 = vld [vmem:[%s633 + $0x4] sm:$0xf]
        %v1815 = vld [vmem:[%s633 + $0x8] sm:$0x1]
        %v1816 = vld [vmem:[%s633 + $0xc] sm:$0xf]
        %v1817 = vld [vmem:[%s633 + $0x10] sm:$0xf]
        %v1818 = vld [vmem:[%s633 + $0x14] sm:$0x1]
        %v1819 = vld [vmem:[%s633 + $0x18] sm:$0xf]
        %v1820 = vld [vmem:[%s633 + $0x1c] sm:$0xf]
        %v1821 = vld [vmem:[%s633 + $0x20] sm:$0x1]
        %v1822 = vld [vmem:[%s633 + $0x24] sm:$0xf]
        %v1823 = vld [vmem:[%s633 + $0x28] sm:$0xf]
        %v1824 = vld [vmem:[%s633 + $0x2c] sm:$0x1]
        %v1825 = vld [vmem:[%s633 + $0x30] sm:$0xf]
        %v1826 = vld [vmem:[%s633 + $0x34] sm:$0xf]
        %v1827 = vld [vmem:[%s633 + $0x38] sm:$0x1]
        %v1828 = vld [vmem:[%s633 + $0x3c] sm:$0xf]
        %v1829 = vld [vmem:[%s633 + $0x40] sm:$0xf]
        %v1830 = vld [vmem:[%s633 + $0x44] sm:$0x1]
        %v1831 = vld [vmem:[%s633 + $0x48] sm:$0xf]
        %v1832 = vld [vmem:[%s633 + $0x4c] sm:$0xf]
        %v1833 = vld [vmem:[%s633 + $0x50] sm:$0x1]
        %v1834 = vld [vmem:[%s633 + $0x54] sm:$0xf]
        %v1835 = vld [vmem:[%s633 + $0x58] sm:$0xf]
        %v1836 = vld [vmem:[%s633 + $0x5c] sm:$0x1]
        %v1837 = vld [vmem:[%s633 + $0x60] sm:$0xf]
        %v1838 = vld [vmem:[%s633 + $0x64] sm:$0xf]
        %v1839 = vld [vmem:[%s633 + $0x68] sm:$0x1]
        %v1840 = vld [vmem:[%s633 + $0x6c] sm:$0xf]
        %v1841 = vld [vmem:[%s633 + $0x70] sm:$0xf]
        %v1842 = vld [vmem:[%s633 + $0x74] sm:$0x1]
        %v1843 = vld [vmem:[%s633 + $0x78] sm:$0xf]
        %v1844 = vld [vmem:[%s633 + $0x7c] sm:$0xf]
        %v1845 = vld [vmem:[%s633 + $0x80] sm:$0x1]
        %v1846 = vld [vmem:[%s633 + $0x84] sm:$0xf]
        %v1847 = vld [vmem:[%s633 + $0x88] sm:$0xf]
        %v1848 = vld [vmem:[%s633 + $0x8c] sm:$0x1]
        %v1849 = vld [vmem:[%s633 + $0x90] sm:$0xf]
        %v1850 = vld [vmem:[%s633 + $0x94] sm:$0xf]
        %v1851 = vld [vmem:[%s633 + $0x98] sm:$0x1]
        %v1852 = vld [vmem:[%s633 + $0x9c] sm:$0xf]
        %v1853 = vld [vmem:[%s633 + $0xa0] sm:$0xf]
        %v1854 = vld [vmem:[%s633 + $0xa4] sm:$0x1]
        %v1855 = vld [vmem:[%s633 + $0xa8] sm:$0xf]
        %v1856 = vld [vmem:[%s633 + $0xac] sm:$0xf]
        %v1857 = vld [vmem:[%s633 + $0xb0] sm:$0x1]
        %v1858 = vld [vmem:[%s633 + $0xb4] sm:$0xf]
        %v1859 = vld [vmem:[%s633 + $0xb8] sm:$0xf]
        %v1860 = vld [vmem:[%s633 + $0xbc] sm:$0x1]
        %v1862 = vshrl.u32 %v1813, 16
        %v1864 = vrot.slane %v1862, 4
        %v1865 = vshll.u32 %v1813, 16
        %v1867 = vrot.slane %v1865, 5
        %v1868 = vor.u32 %v1864, %v1867
        %v1869 = vrot.slane %v1868, 4
        %v1871 = vshll.u32 %v1814, 16
        %v1873 = vrot.slane %v1871, 5
        %v1874 = vsel %vm1025, %v1869, %v1873
        %v1875 = vshrl.u32 %v1814, 16
        %v1877 = vrot.slane %v1875, 4
        %v1878 = vor.u32 %v1877, %v1873
        %v1879 = vrot.slane %v1878, 4
        %v1881 = vshll.u32 %v1815, 16
        %v1883 = vrot.slane %v1881, 5
        %v1884 = vsel %vm1025, %v1879, %v1883
        %v1886 = vshrl.u32 %v1816, 16
        %v1888 = vrot.slane %v1886, 4
        %v1889 = vshll.u32 %v1816, 16
        %v1891 = vrot.slane %v1889, 5
        %v1892 = vor.u32 %v1888, %v1891
        %v1893 = vrot.slane %v1892, 4
        %v1895 = vshll.u32 %v1817, 16
        %v1897 = vrot.slane %v1895, 5
        %v1898 = vsel %vm1025, %v1893, %v1897
        %v1899 = vshrl.u32 %v1817, 16
        %v1901 = vrot.slane %v1899, 4
        %v1902 = vor.u32 %v1901, %v1897
        %v1903 = vrot.slane %v1902, 4
        %v1905 = vshll.u32 %v1818, 16
        %v1907 = vrot.slane %v1905, 5
        %v1908 = vsel %vm1025, %v1903, %v1907
        %v1910 = vshrl.u32 %v1819, 16
        %v1912 = vrot.slane %v1910, 4
        %v1913 = vshll.u32 %v1819, 16
        %v1915 = vrot.slane %v1913, 5
        %v1916 = vor.u32 %v1912, %v1915
        %v1917 = vrot.slane %v1916, 4
        %v1919 = vshll.u32 %v1820, 16
        %v1921 = vrot.slane %v1919, 5
        %v1922 = vsel %vm1025, %v1917, %v1921
        %v1923 = vshrl.u32 %v1820, 16
        %v1925 = vrot.slane %v1923, 4
        %v1926 = vor.u32 %v1925, %v1921
        %v1927 = vrot.slane %v1926, 4
        %v1929 = vshll.u32 %v1821, 16
        %v1931 = vrot.slane %v1929, 5
        %v1932 = vsel %vm1025, %v1927, %v1931
        %v1934 = vshrl.u32 %v1822, 16
        %v1936 = vrot.slane %v1934, 4
        %v1937 = vshll.u32 %v1822, 16
        %v1939 = vrot.slane %v1937, 5
        %v1940 = vor.u32 %v1936, %v1939
        %v1941 = vrot.slane %v1940, 4
        %v1943 = vshll.u32 %v1823, 16
        %v1945 = vrot.slane %v1943, 5
        %v1946 = vsel %vm1025, %v1941, %v1945
        %v1947 = vshrl.u32 %v1823, 16
        %v1949 = vrot.slane %v1947, 4
        %v1950 = vor.u32 %v1949, %v1945
        %v1951 = vrot.slane %v1950, 4
        %v1953 = vshll.u32 %v1824, 16
        %v1955 = vrot.slane %v1953, 5
        %v1956 = vsel %vm1025, %v1951, %v1955
        %v1958 = vshrl.u32 %v1825, 16
        %v1960 = vrot.slane %v1958, 4
        %v1961 = vshll.u32 %v1825, 16
        %v1963 = vrot.slane %v1961, 5
        %v1964 = vor.u32 %v1960, %v1963
        %v1965 = vrot.slane %v1964, 4
        %v1967 = vshll.u32 %v1826, 16
        %v1969 = vrot.slane %v1967, 5
        %v1970 = vsel %vm1025, %v1965, %v1969
        %v1971 = vshrl.u32 %v1826, 16
        %v1973 = vrot.slane %v1971, 4
        %v1974 = vor.u32 %v1973, %v1969
        %v1975 = vrot.slane %v1974, 4
        %v1977 = vshll.u32 %v1827, 16
        %v1979 = vrot.slane %v1977, 5
        %v1980 = vsel %vm1025, %v1975, %v1979
        %v1982 = vshrl.u32 %v1828, 16
        %v1984 = vrot.slane %v1982, 4
        %v1985 = vshll.u32 %v1828, 16
        %v1987 = vrot.slane %v1985, 5
        %v1988 = vor.u32 %v1984, %v1987
        %v1989 = vrot.slane %v1988, 4
        %v1991 = vshll.u32 %v1829, 16
        %v1993 = vrot.slane %v1991, 5
        %v1994 = vsel %vm1025, %v1989, %v1993
        %v1995 = vshrl.u32 %v1829, 16
        %v1997 = vrot.slane %v1995, 4
        %v1998 = vor.u32 %v1997, %v1993
        %v1999 = vrot.slane %v1998, 4
        %v2001 = vshll.u32 %v1830, 16
        %v2003 = vrot.slane %v2001, 5
        %v2004 = vsel %vm1025, %v1999, %v2003
        %v2006 = vshrl.u32 %v1831, 16
        %v2008 = vrot.slane %v2006, 4
        %v2009 = vshll.u32 %v1831, 16
        %v2011 = vrot.slane %v2009, 5
        %v2012 = vor.u32 %v2008, %v2011
        %v2013 = vrot.slane %v2012, 4
        %v2015 = vshll.u32 %v1832, 16
        %v2017 = vrot.slane %v2015, 5
        %v2018 = vsel %vm1025, %v2013, %v2017
        %v2019 = vshrl.u32 %v1832, 16
        %v2021 = vrot.slane %v2019, 4
        %v2022 = vor.u32 %v2021, %v2017
        %v2023 = vrot.slane %v2022, 4
        %v2025 = vshll.u32 %v1833, 16
        %v2027 = vrot.slane %v2025, 5
        %v2028 = vsel %vm1025, %v2023, %v2027
        %v2030 = vshrl.u32 %v1834, 16
        %v2032 = vrot.slane %v2030, 4
        %v2033 = vshll.u32 %v1834, 16
        %v2035 = vrot.slane %v2033, 5
        %v2036 = vor.u32 %v2032, %v2035
        %v2037 = vrot.slane %v2036, 4
        %v2039 = vshll.u32 %v1835, 16
        %v2041 = vrot.slane %v2039, 5
        %v2042 = vsel %vm1025, %v2037, %v2041
        %v2043 = vshrl.u32 %v1835, 16
        %v2045 = vrot.slane %v2043, 4
        %v2046 = vor.u32 %v2045, %v2041
        %v2047 = vrot.slane %v2046, 4
        %v2049 = vshll.u32 %v1836, 16
        %v2051 = vrot.slane %v2049, 5
        %v2052 = vsel %vm1025, %v2047, %v2051
        %v2054 = vshrl.u32 %v1837, 16
        %v2056 = vrot.slane %v2054, 4
        %v2057 = vshll.u32 %v1837, 16
        %v2059 = vrot.slane %v2057, 5
        %v2060 = vor.u32 %v2056, %v2059
        %v2061 = vrot.slane %v2060, 4
        %v2063 = vshll.u32 %v1838, 16
        %v2065 = vrot.slane %v2063, 5
        %v2066 = vsel %vm1025, %v2061, %v2065
        %v2067 = vshrl.u32 %v1838, 16
        %v2069 = vrot.slane %v2067, 4
        %v2070 = vor.u32 %v2069, %v2065
        %v2071 = vrot.slane %v2070, 4
        %v2073 = vshll.u32 %v1839, 16
        %v2075 = vrot.slane %v2073, 5
        %v2076 = vsel %vm1025, %v2071, %v2075
        %v2078 = vshrl.u32 %v1840, 16
        %v2080 = vrot.slane %v2078, 4
        %v2081 = vshll.u32 %v1840, 16
        %v2083 = vrot.slane %v2081, 5
        %v2084 = vor.u32 %v2080, %v2083
        %v2085 = vrot.slane %v2084, 4
        %v2087 = vshll.u32 %v1841, 16
        %v2089 = vrot.slane %v2087, 5
        %v2090 = vsel %vm1025, %v2085, %v2089
        %v2091 = vshrl.u32 %v1841, 16
        %v2093 = vrot.slane %v2091, 4
        %v2094 = vor.u32 %v2093, %v2089
        %v2095 = vrot.slane %v2094, 4
        %v2097 = vshll.u32 %v1842, 16
        %v2099 = vrot.slane %v2097, 5
        %v2100 = vsel %vm1025, %v2095, %v2099
        %v2102 = vshrl.u32 %v1843, 16
        %v2104 = vrot.slane %v2102, 4
        %v2105 = vshll.u32 %v1843, 16
        %v2107 = vrot.slane %v2105, 5
        %v2108 = vor.u32 %v2104, %v2107
        %v2109 = vrot.slane %v2108, 4
        %v2111 = vshll.u32 %v1844, 16
        %v2113 = vrot.slane %v2111, 5
        %v2114 = vsel %vm1025, %v2109, %v2113
        %v2115 = vshrl.u32 %v1844, 16
        %v2117 = vrot.slane %v2115, 4
        %v2118 = vor.u32 %v2117, %v2113
        %v2119 = vrot.slane %v2118, 4
        %v2121 = vshll.u32 %v1845, 16
        %v2123 = vrot.slane %v2121, 5
        %v2124 = vsel %vm1025, %v2119, %v2123
        %v2126 = vshrl.u32 %v1846, 16
        %v2128 = vrot.slane %v2126, 4
        %v2129 = vshll.u32 %v1846, 16
        %v2131 = vrot.slane %v2129, 5
        %v2132 = vor.u32 %v2128, %v2131
        %v2133 = vrot.slane %v2132, 4
        %v2135 = vshll.u32 %v1847, 16
        %v2137 = vrot.slane %v2135, 5
        %v2138 = vsel %vm1025, %v2133, %v2137
        %v2139 = vshrl.u32 %v1847, 16
        %v2141 = vrot.slane %v2139, 4
        %v2142 = vor.u32 %v2141, %v2137
        %v2143 = vrot.slane %v2142, 4
        %v2145 = vshll.u32 %v1848, 16
        %v2147 = vrot.slane %v2145, 5
        %v2148 = vsel %vm1025, %v2143, %v2147
        %v2150 = vshrl.u32 %v1849, 16
        %v2152 = vrot.slane %v2150, 4
        %v2153 = vshll.u32 %v1849, 16
        %v2155 = vrot.slane %v2153, 5
        %v2156 = vor.u32 %v2152, %v2155
        %v2157 = vrot.slane %v2156, 4
        %v2159 = vshll.u32 %v1850, 16
        %v2161 = vrot.slane %v2159, 5
        %v2162 = vsel %vm1025, %v2157, %v2161
        %v2163 = vshrl.u32 %v1850, 16
        %v2165 = vrot.slane %v2163, 4
        %v2166 = vor.u32 %v2165, %v2161
        %v2167 = vrot.slane %v2166, 4
        %v2169 = vshll.u32 %v1851, 16
        %v2171 = vrot.slane %v2169, 5
        %v2172 = vsel %vm1025, %v2167, %v2171
        %v2174 = vshrl.u32 %v1852, 16
        %v2176 = vrot.slane %v2174, 4
        %v2177 = vshll.u32 %v1852, 16
        %v2179 = vrot.slane %v2177, 5
        %v2180 = vor.u32 %v2176, %v2179
        %v2181 = vrot.slane %v2180, 4
        %v2183 = vshll.u32 %v1853, 16
        %v2185 = vrot.slane %v2183, 5
        %v2186 = vsel %vm1025, %v2181, %v2185
        %v2187 = vshrl.u32 %v1853, 16
        %v2189 = vrot.slane %v2187, 4
        %v2190 = vor.u32 %v2189, %v2185
        %v2191 = vrot.slane %v2190, 4
        %v2193 = vshll.u32 %v1854, 16
        %v2195 = vrot.slane %v2193, 5
        %v2196 = vsel %vm1025, %v2191, %v2195
        %v2198 = vshrl.u32 %v1855, 16
        %v2200 = vrot.slane %v2198, 4
        %v2201 = vshll.u32 %v1855, 16
        %v2203 = vrot.slane %v2201, 5
        %v2204 = vor.u32 %v2200, %v2203
        %v2205 = vrot.slane %v2204, 4
        %v2207 = vshll.u32 %v1856, 16
        %v2209 = vrot.slane %v2207, 5
        %v2210 = vsel %vm1025, %v2205, %v2209
        %v2211 = vshrl.u32 %v1856, 16
        %v2213 = vrot.slane %v2211, 4
        %v2214 = vor.u32 %v2213, %v2209
        %v2215 = vrot.slane %v2214, 4
        %v2217 = vshll.u32 %v1857, 16
        %v2219 = vrot.slane %v2217, 5
        %v2220 = vsel %vm1025, %v2215, %v2219
        %v2222 = vshrl.u32 %v1858, 16
        %v2224 = vrot.slane %v2222, 4
        %v2225 = vshll.u32 %v1858, 16
        %v2227 = vrot.slane %v2225, 5
        %v2228 = vor.u32 %v2224, %v2227
        %v2229 = vrot.slane %v2228, 4
        %v2231 = vshll.u32 %v1859, 16
        %v2233 = vrot.slane %v2231, 5
        %v2234 = vsel %vm1025, %v2229, %v2233
        %v2235 = vshrl.u32 %v1859, 16
        %v2237 = vrot.slane %v2235, 4
        %v2238 = vor.u32 %v2237, %v2233
        %v2239 = vrot.slane %v2238, 4
        %v2241 = vshll.u32 %v1860, 16
        %v2243 = vrot.slane %v2241, 5
        %v2244 = vsel %vm1025, %v2239, %v2243
        %2277 = vst.msk [vmem:[#allocation3 + $0x10] sm:$0xf] %vm222, %v1874
        %2278 = vst.msk [vmem:[#allocation3 + $0x34] sm:$0xf] %vm222, %v1884
        %2279 = vst.msk [vmem:[#allocation3 + $0x58] sm:$0xf] %vm222, %v1898
        %2280 = vst.msk [vmem:[#allocation3 + $0x7c] sm:$0xf] %vm222, %v1908
        %2281 = vst.msk [vmem:[#allocation3 + $0xa0] sm:$0xf] %vm222, %v1922
        %2282 = vst.msk [vmem:[#allocation3 + $0xc4] sm:$0xf] %vm222, %v1932
        %2283 = vst.msk [vmem:[#allocation3 + $0xe8] sm:$0xf] %vm222, %v1946
        %2284 = vst.msk [vmem:[#allocation3 + $0x10c] sm:$0xf] %vm222, %v1956
        %2285 = vst.msk [vmem:[#allocation3 + $0x130] sm:$0xf] %vm222, %v1970
        %2286 = vst.msk [vmem:[#allocation3 + $0x154] sm:$0xf] %vm222, %v1980
        %2287 = vst.msk [vmem:[#allocation3 + $0x178] sm:$0xf] %vm222, %v1994
        %2288 = vst.msk [vmem:[#allocation3 + $0x19c] sm:$0xf] %vm222, %v2004
        %2289 = vst.msk [vmem:[#allocation3 + $0x1c0] sm:$0xf] %vm222, %v2018
        %2290 = vst.msk [vmem:[#allocation3 + $0x1e4] sm:$0xf] %vm222, %v2028
        %2291 = vst.msk [vmem:[#allocation3 + $0x208] sm:$0xf] %vm222, %v2042
        %2292 = vst.msk [vmem:[#allocation3 + $0x22c] sm:$0xf] %vm222, %v2052
        %2293 = vst.msk [vmem:[#allocation3 + $0x250] sm:$0xf] %vm222, %v2066
        %2294 = vst.msk [vmem:[#allocation3 + $0x274] sm:$0xf] %vm222, %v2076
        %2295 = vst.msk [vmem:[#allocation3 + $0x298] sm:$0xf] %vm222, %v2090
        %2296 = vst.msk [vmem:[#allocation3 + $0x2bc] sm:$0xf] %vm222, %v2100
        %2297 = vst.msk [vmem:[#allocation3 + $0x2e0] sm:$0xf] %vm222, %v2114
        %2298 = vst.msk [vmem:[#allocation3 + $0x304] sm:$0xf] %vm222, %v2124
        %2299 = vst.msk [vmem:[#allocation3 + $0x328] sm:$0xf] %vm222, %v2138
        %2300 = vst.msk [vmem:[#allocation3 + $0x34c] sm:$0xf] %vm222, %v2148
        %2301 = vst.msk [vmem:[#allocation3 + $0x370] sm:$0xf] %vm222, %v2162
        %2302 = vst.msk [vmem:[#allocation3 + $0x394] sm:$0xf] %vm222, %v2172
        %2303 = vst.msk [vmem:[#allocation3 + $0x3b8] sm:$0xf] %vm222, %v2186
        %2304 = vst.msk [vmem:[#allocation3 + $0x3dc] sm:$0xf] %vm222, %v2196
        %2305 = vst.msk [vmem:[#allocation3 + $0x400] sm:$0xf] %vm222, %v2210
        %2306 = vst.msk [vmem:[#allocation3 + $0x424] sm:$0xf] %vm222, %v2220
        %2307 = vst.msk [vmem:[#allocation3 + $0x448] sm:$0xf] %vm222, %v2234
        %2308 = vst.msk [vmem:[#allocation3 + $0x46c] sm:$0xf] %vm222, %v2244
        %v2309 = vld [vmem:[%s633] sm:$0xe]
        %v2310 = vld [vmem:[%s633 + $0x4] sm:$0xf]
        %v2311 = vld [vmem:[%s633 + $0x8] sm:$0x1]
        %v2312 = vld [vmem:[%s633 + $0xc] sm:$0xe]
        %v2313 = vld [vmem:[%s633 + $0x10] sm:$0xf]
        %v2314 = vld [vmem:[%s633 + $0x14] sm:$0x1]
        %v2315 = vld [vmem:[%s633 + $0x18] sm:$0xe]
        %v2316 = vld [vmem:[%s633 + $0x1c] sm:$0xf]
        %v2317 = vld [vmem:[%s633 + $0x20] sm:$0x1]
        %v2318 = vld [vmem:[%s633 + $0x24] sm:$0xe]
        %v2319 = vld [vmem:[%s633 + $0x28] sm:$0xf]
        %v2320 = vld [vmem:[%s633 + $0x2c] sm:$0x1]
        %v2321 = vld [vmem:[%s633 + $0x30] sm:$0xe]
        %v2322 = vld [vmem:[%s633 + $0x34] sm:$0xf]
        %v2323 = vld [vmem:[%s633 + $0x38] sm:$0x1]
        %v2324 = vld [vmem:[%s633 + $0x3c] sm:$0xe]
        %v2325 = vld [vmem:[%s633 + $0x40] sm:$0xf]
        %v2326 = vld [vmem:[%s633 + $0x44] sm:$0x1]
        %v2327 = vld [vmem:[%s633 + $0x48] sm:$0xe]
        %v2328 = vld [vmem:[%s633 + $0x4c] sm:$0xf]
        %v2329 = vld [vmem:[%s633 + $0x50] sm:$0x1]
        %v2330 = vld [vmem:[%s633 + $0x54] sm:$0xe]
        %v2331 = vld [vmem:[%s633 + $0x58] sm:$0xf]
        %v2332 = vld [vmem:[%s633 + $0x5c] sm:$0x1]
        %v2333 = vld [vmem:[%s633 + $0x60] sm:$0xe]
        %v2334 = vld [vmem:[%s633 + $0x64] sm:$0xf]
        %v2335 = vld [vmem:[%s633 + $0x68] sm:$0x1]
        %v2336 = vld [vmem:[%s633 + $0x6c] sm:$0xe]
        %v2337 = vld [vmem:[%s633 + $0x70] sm:$0xf]
        %v2338 = vld [vmem:[%s633 + $0x74] sm:$0x1]
        %v2339 = vld [vmem:[%s633 + $0x78] sm:$0xe]
        %v2340 = vld [vmem:[%s633 + $0x7c] sm:$0xf]
        %v2341 = vld [vmem:[%s633 + $0x80] sm:$0x1]
        %v2342 = vld [vmem:[%s633 + $0x84] sm:$0xe]
        %v2343 = vld [vmem:[%s633 + $0x88] sm:$0xf]
        %v2344 = vld [vmem:[%s633 + $0x8c] sm:$0x1]
        %v2345 = vld [vmem:[%s633 + $0x90] sm:$0xe]
        %v2346 = vld [vmem:[%s633 + $0x94] sm:$0xf]
        %v2347 = vld [vmem:[%s633 + $0x98] sm:$0x1]
        %v2348 = vld [vmem:[%s633 + $0x9c] sm:$0xe]
        %v2349 = vld [vmem:[%s633 + $0xa0] sm:$0xf]
        %v2350 = vld [vmem:[%s633 + $0xa4] sm:$0x1]
        %v2351 = vld [vmem:[%s633 + $0xa8] sm:$0xe]
        %v2352 = vld [vmem:[%s633 + $0xac] sm:$0xf]
        %v2353 = vld [vmem:[%s633 + $0xb0] sm:$0x1]
        %v2354 = vld [vmem:[%s633 + $0xb4] sm:$0xe]
        %v2355 = vld [vmem:[%s633 + $0xb8] sm:$0xf]
        %v2356 = vld [vmem:[%s633 + $0xbc] sm:$0x1]
        %v2405 = vrot.slane %v2309, 5
        %v2406 = vrot.slane %v2405, 4
        %v2407 = vrot.slane %v2310, 5
        %v2408 = vsel %vm1572, %v2406, %v2407
        %v2409 = vrot.slane %v2407, 4
        %v2410 = vrot.slane %v2311, 5
        %v2411 = vsel %vm1572, %v2409, %v2410
        %v2412 = vrot.slane %v2312, 5
        %v2413 = vrot.slane %v2412, 4
        %v2414 = vrot.slane %v2313, 5
        %v2415 = vsel %vm1572, %v2413, %v2414
        %v2416 = vrot.slane %v2414, 4
        %v2417 = vrot.slane %v2314, 5
        %v2418 = vsel %vm1572, %v2416, %v2417
        %v2419 = vrot.slane %v2315, 5
        %v2420 = vrot.slane %v2419, 4
        %v2421 = vrot.slane %v2316, 5
        %v2422 = vsel %vm1572, %v2420, %v2421
        %v2423 = vrot.slane %v2421, 4
        %v2424 = vrot.slane %v2317, 5
        %v2425 = vsel %vm1572, %v2423, %v2424
        %v2426 = vrot.slane %v2318, 5
        %v2427 = vrot.slane %v2426, 4
        %v2428 = vrot.slane %v2319, 5
        %v2429 = vsel %vm1572, %v2427, %v2428
        %v2430 = vrot.slane %v2428, 4
        %v2431 = vrot.slane %v2320, 5
        %v2432 = vsel %vm1572, %v2430, %v2431
        %v2433 = vrot.slane %v2321, 5
        %v2434 = vrot.slane %v2433, 4
        %v2435 = vrot.slane %v2322, 5
        %v2436 = vsel %vm1572, %v2434, %v2435
        %v2437 = vrot.slane %v2435, 4
        %v2438 = vrot.slane %v2323, 5
        %v2439 = vsel %vm1572, %v2437, %v2438
        %v2440 = vrot.slane %v2324, 5
        %v2441 = vrot.slane %v2440, 4
        %v2442 = vrot.slane %v2325, 5
        %v2443 = vsel %vm1572, %v2441, %v2442
        %v2444 = vrot.slane %v2442, 4
        %v2445 = vrot.slane %v2326, 5
        %v2446 = vsel %vm1572, %v2444, %v2445
        %v2447 = vrot.slane %v2327, 5
        %v2448 = vrot.slane %v2447, 4
        %v2449 = vrot.slane %v2328, 5
        %v2450 = vsel %vm1572, %v2448, %v2449
        %v2451 = vrot.slane %v2449, 4
        %v2452 = vrot.slane %v2329, 5
        %v2453 = vsel %vm1572, %v2451, %v2452
        %v2454 = vrot.slane %v2330, 5
        %v2455 = vrot.slane %v2454, 4
        %v2456 = vrot.slane %v2331, 5
        %v2457 = vsel %vm1572, %v2455, %v2456
        %v2458 = vrot.slane %v2456, 4
        %v2459 = vrot.slane %v2332, 5
        %v2460 = vsel %vm1572, %v2458, %v2459
        %v2461 = vrot.slane %v2333, 5
        %v2462 = vrot.slane %v2461, 4
        %v2463 = vrot.slane %v2334, 5
        %v2464 = vsel %vm1572, %v2462, %v2463
        %v2465 = vrot.slane %v2463, 4
        %v2466 = vrot.slane %v2335, 5
        %v2467 = vsel %vm1572, %v2465, %v2466
        %v2468 = vrot.slane %v2336, 5
        %v2469 = vrot.slane %v2468, 4
        %v2470 = vrot.slane %v2337, 5
        %v2471 = vsel %vm1572, %v2469, %v2470
        %v2472 = vrot.slane %v2470, 4
        %v2473 = vrot.slane %v2338, 5
        %v2474 = vsel %vm1572, %v2472, %v2473
        %v2475 = vrot.slane %v2339, 5
        %v2476 = vrot.slane %v2475, 4
        %v2477 = vrot.slane %v2340, 5
        %v2478 = vsel %vm1572, %v2476, %v2477
        %v2479 = vrot.slane %v2477, 4
        %v2480 = vrot.slane %v2341, 5
        %v2481 = vsel %vm1572, %v2479, %v2480
        %v2482 = vrot.slane %v2342, 5
        %v2483 = vrot.slane %v2482, 4
        %v2484 = vrot.slane %v2343, 5
        %v2485 = vsel %vm1572, %v2483, %v2484
        %v2486 = vrot.slane %v2484, 4
        %v2487 = vrot.slane %v2344, 5
        %v2488 = vsel %vm1572, %v2486, %v2487
        %v2489 = vrot.slane %v2345, 5
        %v2490 = vrot.slane %v2489, 4
        %v2491 = vrot.slane %v2346, 5
        %v2492 = vsel %vm1572, %v2490, %v2491
        %v2493 = vrot.slane %v2491, 4
        %v2494 = vrot.slane %v2347, 5
        %v2495 = vsel %vm1572, %v2493, %v2494
        %v2496 = vrot.slane %v2348, 5
        %v2497 = vrot.slane %v2496, 4
        %v2498 = vrot.slane %v2349, 5
        %v2499 = vsel %vm1572, %v2497, %v2498
        %v2500 = vrot.slane %v2498, 4
        %v2501 = vrot.slane %v2350, 5
        %v2502 = vsel %vm1572, %v2500, %v2501
        %v2503 = vrot.slane %v2351, 5
        %v2504 = vrot.slane %v2503, 4
        %v2505 = vrot.slane %v2352, 5
        %v2506 = vsel %vm1572, %v2504, %v2505
        %v2507 = vrot.slane %v2505, 4
        %v2508 = vrot.slane %v2353, 5
        %v2509 = vsel %vm1572, %v2507, %v2508
        %v2510 = vrot.slane %v2354, 5
        %v2511 = vrot.slane %v2510, 4
        %v2512 = vrot.slane %v2355, 5
        %v2513 = vsel %vm1572, %v2511, %v2512
        %v2514 = vrot.slane %v2512, 4
        %v2515 = vrot.slane %v2356, 5
        %v2516 = vsel %vm1572, %v2514, %v2515
        %2549 = vst.msk [vmem:[#allocation3 + $0x14] sm:$0xf] %vm222, %v2408
        %2550 = vst.msk [vmem:[#allocation3 + $0x38] sm:$0xf] %vm222, %v2411
        %2551 = vst.msk [vmem:[#allocation3 + $0x5c] sm:$0xf] %vm222, %v2415
        %2552 = vst.msk [vmem:[#allocation3 + $0x80] sm:$0xf] %vm222, %v2418
        %2553 = vst.msk [vmem:[#allocation3 + $0xa4] sm:$0xf] %vm222, %v2422
        %2554 = vst.msk [vmem:[#allocation3 + $0xc8] sm:$0xf] %vm222, %v2425
        %2555 = vst.msk [vmem:[#allocation3 + $0xec] sm:$0xf] %vm222, %v2429
        %2556 = vst.msk [vmem:[#allocation3 + $0x110] sm:$0xf] %vm222, %v2432
        %2557 = vst.msk [vmem:[#allocation3 + $0x134] sm:$0xf] %vm222, %v2436
        %2558 = vst.msk [vmem:[#allocation3 + $0x158] sm:$0xf] %vm222, %v2439
        %2559 = vst.msk [vmem:[#allocation3 + $0x17c] sm:$0xf] %vm222, %v2443
        %2560 = vst.msk [vmem:[#allocation3 + $0x1a0] sm:$0xf] %vm222, %v2446
        %2561 = vst.msk [vmem:[#allocation3 + $0x1c4] sm:$0xf] %vm222, %v2450
        %2562 = vst.msk [vmem:[#allocation3 + $0x1e8] sm:$0xf] %vm222, %v2453
        %2563 = vst.msk [vmem:[#allocation3 + $0x20c] sm:$0xf] %vm222, %v2457
        %2564 = vst.msk [vmem:[#allocation3 + $0x230] sm:$0xf] %vm222, %v2460
        %2565 = vst.msk [vmem:[#allocation3 + $0x254] sm:$0xf] %vm222, %v2464
        %2566 = vst.msk [vmem:[#allocation3 + $0x278] sm:$0xf] %vm222, %v2467
        %2567 = vst.msk [vmem:[#allocation3 + $0x29c] sm:$0xf] %vm222, %v2471
        %2568 = vst.msk [vmem:[#allocation3 + $0x2c0] sm:$0xf] %vm222, %v2474
        %2569 = vst.msk [vmem:[#allocation3 + $0x2e4] sm:$0xf] %vm222, %v2478
        %2570 = vst.msk [vmem:[#allocation3 + $0x308] sm:$0xf] %vm222, %v2481
        %2571 = vst.msk [vmem:[#allocation3 + $0x32c] sm:$0xf] %vm222, %v2485
        %2572 = vst.msk [vmem:[#allocation3 + $0x350] sm:$0xf] %vm222, %v2488
        %2573 = vst.msk [vmem:[#allocation3 + $0x374] sm:$0xf] %vm222, %v2492
        %2574 = vst.msk [vmem:[#allocation3 + $0x398] sm:$0xf] %vm222, %v2495
        %2575 = vst.msk [vmem:[#allocation3 + $0x3bc] sm:$0xf] %vm222, %v2499
        %2576 = vst.msk [vmem:[#allocation3 + $0x3e0] sm:$0xf] %vm222, %v2502
        %2577 = vst.msk [vmem:[#allocation3 + $0x404] sm:$0xf] %vm222, %v2506
        %2578 = vst.msk [vmem:[#allocation3 + $0x428] sm:$0xf] %vm222, %v2509
        %2579 = vst.msk [vmem:[#allocation3 + $0x44c] sm:$0xf] %vm222, %v2513
        %2580 = vst.msk [vmem:[#allocation3 + $0x470] sm:$0xf] %vm222, %v2516
        %s2581 = scalar_lea.vmem [#allocation2], 24
        %v2582 = vld [vmem:[%s2581] sm:$0xf]
        %v2583 = vld [vmem:[%s2581 + $0x4] sm:$0xf]
        %v2584 = vld [vmem:[%s2581 + $0xc] sm:$0xf]
        %v2585 = vld [vmem:[%s2581 + $0x10] sm:$0xf]
        %v2586 = vld [vmem:[%s2581 + $0x18] sm:$0xf]
        %v2587 = vld [vmem:[%s2581 + $0x1c] sm:$0xf]
        %v2588 = vld [vmem:[%s2581 + $0x24] sm:$0xf]
        %v2589 = vld [vmem:[%s2581 + $0x28] sm:$0xf]
        %v2590 = vld [vmem:[%s2581 + $0x30] sm:$0xf]
        %v2591 = vld [vmem:[%s2581 + $0x34] sm:$0xf]
        %v2592 = vld [vmem:[%s2581 + $0x3c] sm:$0xf]
        %v2593 = vld [vmem:[%s2581 + $0x40] sm:$0xf]
        %v2594 = vld [vmem:[%s2581 + $0x48] sm:$0xf]
        %v2595 = vld [vmem:[%s2581 + $0x4c] sm:$0xf]
        %v2596 = vld [vmem:[%s2581 + $0x54] sm:$0xf]
        %v2597 = vld [vmem:[%s2581 + $0x58] sm:$0xf]
        %v2598 = vld [vmem:[%s2581 + $0x60] sm:$0xf]
        %v2599 = vld [vmem:[%s2581 + $0x64] sm:$0xf]
        %v2600 = vld [vmem:[%s2581 + $0x6c] sm:$0xf]
        %v2601 = vld [vmem:[%s2581 + $0x70] sm:$0xf]
        %v2602 = vld [vmem:[%s2581 + $0x78] sm:$0xf]
        %v2603 = vld [vmem:[%s2581 + $0x7c] sm:$0xf]
        %v2604 = vld [vmem:[%s2581 + $0x84] sm:$0xf]
        %v2605 = vld [vmem:[%s2581 + $0x88] sm:$0xf]
        %v2606 = vld [vmem:[%s2581 + $0x90] sm:$0xf]
        %v2607 = vld [vmem:[%s2581 + $0x94] sm:$0xf]
        %v2608 = vld [vmem:[%s2581 + $0x9c] sm:$0xf]
        %v2609 = vld [vmem:[%s2581 + $0xa0] sm:$0xf]
        %v2610 = vld [vmem:[%s2581 + $0xa8] sm:$0xf]
        %v2611 = vld [vmem:[%s2581 + $0xac] sm:$0xf]
        %v2612 = vld [vmem:[%s2581 + $0xb4] sm:$0xf]
        %v2613 = vld [vmem:[%s2581 + $0xb8] sm:$0xf]
        %2614 = vst.msk [vmem:[#allocation3 + $0x18] sm:$0xf] %vm222, %v2582
        %2615 = vst.msk [vmem:[#allocation3 + $0x3c] sm:$0xf] %vm222, %v2583
        %2616 = vst.msk [vmem:[#allocation3 + $0x60] sm:$0xf] %vm222, %v2584
        %2617 = vst.msk [vmem:[#allocation3 + $0x84] sm:$0xf] %vm222, %v2585
        %2618 = vst.msk [vmem:[#allocation3 + $0xa8] sm:$0xf] %vm222, %v2586
        %2619 = vst.msk [vmem:[#allocation3 + $0xcc] sm:$0xf] %vm222, %v2587
        %2620 = vst.msk [vmem:[#allocation3 + $0xf0] sm:$0xf] %vm222, %v2588
        %2621 = vst.msk [vmem:[#allocation3 + $0x114] sm:$0xf] %vm222, %v2589
        %2622 = vst.msk [vmem:[#allocation3 + $0x138] sm:$0xf] %vm222, %v2590
        %2623 = vst.msk [vmem:[#allocation3 + $0x15c] sm:$0xf] %vm222, %v2591
        %2624 = vst.msk [vmem:[#allocation3 + $0x180] sm:$0xf] %vm222, %v2592
        %2625 = vst.msk [vmem:[#allocation3 + $0x1a4] sm:$0xf] %vm222, %v2593
        %2626 = vst.msk [vmem:[#allocation3 + $0x1c8] sm:$0xf] %vm222, %v2594
        %2627 = vst.msk [vmem:[#allocation3 + $0x1ec] sm:$0xf] %vm222, %v2595
        %2628 = vst.msk [vmem:[#allocation3 + $0x210] sm:$0xf] %vm222, %v2596
        %2629 = vst.msk [vmem:[#allocation3 + $0x234] sm:$0xf] %vm222, %v2597
        %2630 = vst.msk [vmem:[#allocation3 + $0x258] sm:$0xf] %vm222, %v2598
        %2631 = vst.msk [vmem:[#allocation3 + $0x27c] sm:$0xf] %vm222, %v2599
        %2632 = vst.msk [vmem:[#allocation3 + $0x2a0] sm:$0xf] %vm222, %v2600
        %2633 = vst.msk [vmem:[#allocation3 + $0x2c4] sm:$0xf] %vm222, %v2601
        %2634 = vst.msk [vmem:[#allocation3 + $0x2e8] sm:$0xf] %vm222, %v2602
        %2635 = vst.msk [vmem:[#allocation3 + $0x30c] sm:$0xf] %vm222, %v2603
        %2636 = vst.msk [vmem:[#allocation3 + $0x330] sm:$0xf] %vm222, %v2604
        %2637 = vst.msk [vmem:[#allocation3 + $0x354] sm:$0xf] %vm222, %v2605
        %2638 = vst.msk [vmem:[#allocation3 + $0x378] sm:$0xf] %vm222, %v2606
        %2639 = vst.msk [vmem:[#allocation3 + $0x39c] sm:$0xf] %vm222, %v2607
        %2640 = vst.msk [vmem:[#allocation3 + $0x3c0] sm:$0xf] %vm222, %v2608
        %2641 = vst.msk [vmem:[#allocation3 + $0x3e4] sm:$0xf] %vm222, %v2609
        %2642 = vst.msk [vmem:[#allocation3 + $0x408] sm:$0xf] %vm222, %v2610
        %2643 = vst.msk [vmem:[#allocation3 + $0x42c] sm:$0xf] %vm222, %v2611
        %2644 = vst.msk [vmem:[#allocation3 + $0x450] sm:$0xf] %vm222, %v2612
        %2645 = vst.msk [vmem:[#allocation3 + $0x474] sm:$0xf] %vm222, %v2613
        %v2646 = vld [vmem:[%s2581] sm:$0xf]
        %v2647 = vld [vmem:[%s2581 + $0x4] sm:$0xf]
        %v2648 = vld [vmem:[%s2581 + $0x8] sm:$0x1]
        %v2649 = vld [vmem:[%s2581 + $0xc] sm:$0xf]
        %v2650 = vld [vmem:[%s2581 + $0x10] sm:$0xf]
        %v2651 = vld [vmem:[%s2581 + $0x14] sm:$0x1]
        %v2652 = vld [vmem:[%s2581 + $0x18] sm:$0xf]
        %v2653 = vld [vmem:[%s2581 + $0x1c] sm:$0xf]
        %v2654 = vld [vmem:[%s2581 + $0x20] sm:$0x1]
        %v2655 = vld [vmem:[%s2581 + $0x24] sm:$0xf]
        %v2656 = vld [vmem:[%s2581 + $0x28] sm:$0xf]
        %v2657 = vld [vmem:[%s2581 + $0x2c] sm:$0x1]
        %v2658 = vld [vmem:[%s2581 + $0x30] sm:$0xf]
        %v2659 = vld [vmem:[%s2581 + $0x34] sm:$0xf]
        %v2660 = vld [vmem:[%s2581 + $0x38] sm:$0x1]
        %v2661 = vld [vmem:[%s2581 + $0x3c] sm:$0xf]
        %v2662 = vld [vmem:[%s2581 + $0x40] sm:$0xf]
        %v2663 = vld [vmem:[%s2581 + $0x44] sm:$0x1]
        %v2664 = vld [vmem:[%s2581 + $0x48] sm:$0xf]
        %v2665 = vld [vmem:[%s2581 + $0x4c] sm:$0xf]
        %v2666 = vld [vmem:[%s2581 + $0x50] sm:$0x1]
        %v2667 = vld [vmem:[%s2581 + $0x54] sm:$0xf]
        %v2668 = vld [vmem:[%s2581 + $0x58] sm:$0xf]
        %v2669 = vld [vmem:[%s2581 + $0x5c] sm:$0x1]
        %v2670 = vld [vmem:[%s2581 + $0x60] sm:$0xf]
        %v2671 = vld [vmem:[%s2581 + $0x64] sm:$0xf]
        %v2672 = vld [vmem:[%s2581 + $0x68] sm:$0x1]
        %v2673 = vld [vmem:[%s2581 + $0x6c] sm:$0xf]
        %v2674 = vld [vmem:[%s2581 + $0x70] sm:$0xf]
        %v2675 = vld [vmem:[%s2581 + $0x74] sm:$0x1]
        %v2676 = vld [vmem:[%s2581 + $0x78] sm:$0xf]
        %v2677 = vld [vmem:[%s2581 + $0x7c] sm:$0xf]
        %v2678 = vld [vmem:[%s2581 + $0x80] sm:$0x1]
        %v2679 = vld [vmem:[%s2581 + $0x84] sm:$0xf]
        %v2680 = vld [vmem:[%s2581 + $0x88] sm:$0xf]
        %v2681 = vld [vmem:[%s2581 + $0x8c] sm:$0x1]
        %v2682 = vld [vmem:[%s2581 + $0x90] sm:$0xf]
        %v2683 = vld [vmem:[%s2581 + $0x94] sm:$0xf]
        %v2684 = vld [vmem:[%s2581 + $0x98] sm:$0x1]
        %v2685 = vld [vmem:[%s2581 + $0x9c] sm:$0xf]
        %v2686 = vld [vmem:[%s2581 + $0xa0] sm:$0xf]
        %v2687 = vld [vmem:[%s2581 + $0xa4] sm:$0x1]
        %v2688 = vld [vmem:[%s2581 + $0xa8] sm:$0xf]
        %v2689 = vld [vmem:[%s2581 + $0xac] sm:$0xf]
        %v2690 = vld [vmem:[%s2581 + $0xb0] sm:$0x1]
        %v2691 = vld [vmem:[%s2581 + $0xb4] sm:$0xf]
        %v2692 = vld [vmem:[%s2581 + $0xb8] sm:$0xf]
        %v2693 = vld [vmem:[%s2581 + $0xbc] sm:$0x1]
        %v2695 = vshrl.u32 %v2646, 16
        %v2697 = vrot.slane %v2695, 4
        %v2698 = vshll.u32 %v2646, 16
        %v2700 = vrot.slane %v2698, 5
        %v2701 = vor.u32 %v2697, %v2700
        %v2702 = vrot.slane %v2701, 4
        %v2704 = vshll.u32 %v2647, 16
        %v2706 = vrot.slane %v2704, 5
        %v2707 = vsel %vm1025, %v2702, %v2706
        %v2708 = vshrl.u32 %v2647, 16
        %v2710 = vrot.slane %v2708, 4
        %v2711 = vor.u32 %v2710, %v2706
        %v2712 = vrot.slane %v2711, 4
        %v2714 = vshll.u32 %v2648, 16
        %v2716 = vrot.slane %v2714, 5
        %v2717 = vsel %vm1025, %v2712, %v2716
        %v2719 = vshrl.u32 %v2649, 16
        %v2721 = vrot.slane %v2719, 4
        %v2722 = vshll.u32 %v2649, 16
        %v2724 = vrot.slane %v2722, 5
        %v2725 = vor.u32 %v2721, %v2724
        %v2726 = vrot.slane %v2725, 4
        %v2728 = vshll.u32 %v2650, 16
        %v2730 = vrot.slane %v2728, 5
        %v2731 = vsel %vm1025, %v2726, %v2730
        %v2732 = vshrl.u32 %v2650, 16
        %v2734 = vrot.slane %v2732, 4
        %v2735 = vor.u32 %v2734, %v2730
        %v2736 = vrot.slane %v2735, 4
        %v2738 = vshll.u32 %v2651, 16
        %v2740 = vrot.slane %v2738, 5
        %v2741 = vsel %vm1025, %v2736, %v2740
        %v2743 = vshrl.u32 %v2652, 16
        %v2745 = vrot.slane %v2743, 4
        %v2746 = vshll.u32 %v2652, 16
        %v2748 = vrot.slane %v2746, 5
        %v2749 = vor.u32 %v2745, %v2748
        %v2750 = vrot.slane %v2749, 4
        %v2752 = vshll.u32 %v2653, 16
        %v2754 = vrot.slane %v2752, 5
        %v2755 = vsel %vm1025, %v2750, %v2754
        %v2756 = vshrl.u32 %v2653, 16
        %v2758 = vrot.slane %v2756, 4
        %v2759 = vor.u32 %v2758, %v2754
        %v2760 = vrot.slane %v2759, 4
        %v2762 = vshll.u32 %v2654, 16
        %v2764 = vrot.slane %v2762, 5
        %v2765 = vsel %vm1025, %v2760, %v2764
        %v2767 = vshrl.u32 %v2655, 16
        %v2769 = vrot.slane %v2767, 4
        %v2770 = vshll.u32 %v2655, 16
        %v2772 = vrot.slane %v2770, 5
        %v2773 = vor.u32 %v2769, %v2772
        %v2774 = vrot.slane %v2773, 4
        %v2776 = vshll.u32 %v2656, 16
        %v2778 = vrot.slane %v2776, 5
        %v2779 = vsel %vm1025, %v2774, %v2778
        %v2780 = vshrl.u32 %v2656, 16
        %v2782 = vrot.slane %v2780, 4
        %v2783 = vor.u32 %v2782, %v2778
        %v2784 = vrot.slane %v2783, 4
        %v2786 = vshll.u32 %v2657, 16
        %v2788 = vrot.slane %v2786, 5
        %v2789 = vsel %vm1025, %v2784, %v2788
        %v2791 = vshrl.u32 %v2658, 16
        %v2793 = vrot.slane %v2791, 4
        %v2794 = vshll.u32 %v2658, 16
        %v2796 = vrot.slane %v2794, 5
        %v2797 = vor.u32 %v2793, %v2796
        %v2798 = vrot.slane %v2797, 4
        %v2800 = vshll.u32 %v2659, 16
        %v2802 = vrot.slane %v2800, 5
        %v2803 = vsel %vm1025, %v2798, %v2802
        %v2804 = vshrl.u32 %v2659, 16
        %v2806 = vrot.slane %v2804, 4
        %v2807 = vor.u32 %v2806, %v2802
        %v2808 = vrot.slane %v2807, 4
        %v2810 = vshll.u32 %v2660, 16
        %v2812 = vrot.slane %v2810, 5
        %v2813 = vsel %vm1025, %v2808, %v2812
        %v2815 = vshrl.u32 %v2661, 16
        %v2817 = vrot.slane %v2815, 4
        %v2818 = vshll.u32 %v2661, 16
        %v2820 = vrot.slane %v2818, 5
        %v2821 = vor.u32 %v2817, %v2820
        %v2822 = vrot.slane %v2821, 4
        %v2824 = vshll.u32 %v2662, 16
        %v2826 = vrot.slane %v2824, 5
        %v2827 = vsel %vm1025, %v2822, %v2826
        %v2828 = vshrl.u32 %v2662, 16
        %v2830 = vrot.slane %v2828, 4
        %v2831 = vor.u32 %v2830, %v2826
        %v2832 = vrot.slane %v2831, 4
        %v2834 = vshll.u32 %v2663, 16
        %v2836 = vrot.slane %v2834, 5
        %v2837 = vsel %vm1025, %v2832, %v2836
        %v2839 = vshrl.u32 %v2664, 16
        %v2841 = vrot.slane %v2839, 4
        %v2842 = vshll.u32 %v2664, 16
        %v2844 = vrot.slane %v2842, 5
        %v2845 = vor.u32 %v2841, %v2844
        %v2846 = vrot.slane %v2845, 4
        %v2848 = vshll.u32 %v2665, 16
        %v2850 = vrot.slane %v2848, 5
        %v2851 = vsel %vm1025, %v2846, %v2850
        %v2852 = vshrl.u32 %v2665, 16
        %v2854 = vrot.slane %v2852, 4
        %v2855 = vor.u32 %v2854, %v2850
        %v2856 = vrot.slane %v2855, 4
        %v2858 = vshll.u32 %v2666, 16
        %v2860 = vrot.slane %v2858, 5
        %v2861 = vsel %vm1025, %v2856, %v2860
        %v2863 = vshrl.u32 %v2667, 16
        %v2865 = vrot.slane %v2863, 4
        %v2866 = vshll.u32 %v2667, 16
        %v2868 = vrot.slane %v2866, 5
        %v2869 = vor.u32 %v2865, %v2868
        %v2870 = vrot.slane %v2869, 4
        %v2872 = vshll.u32 %v2668, 16
        %v2874 = vrot.slane %v2872, 5
        %v2875 = vsel %vm1025, %v2870, %v2874
        %v2876 = vshrl.u32 %v2668, 16
        %v2878 = vrot.slane %v2876, 4
        %v2879 = vor.u32 %v2878, %v2874
        %v2880 = vrot.slane %v2879, 4
        %v2882 = vshll.u32 %v2669, 16
        %v2884 = vrot.slane %v2882, 5
        %v2885 = vsel %vm1025, %v2880, %v2884
        %v2887 = vshrl.u32 %v2670, 16
        %v2889 = vrot.slane %v2887, 4
        %v2890 = vshll.u32 %v2670, 16
        %v2892 = vrot.slane %v2890, 5
        %v2893 = vor.u32 %v2889, %v2892
        %v2894 = vrot.slane %v2893, 4
        %v2896 = vshll.u32 %v2671, 16
        %v2898 = vrot.slane %v2896, 5
        %v2899 = vsel %vm1025, %v2894, %v2898
        %v2900 = vshrl.u32 %v2671, 16
        %v2902 = vrot.slane %v2900, 4
        %v2903 = vor.u32 %v2902, %v2898
        %v2904 = vrot.slane %v2903, 4
        %v2906 = vshll.u32 %v2672, 16
        %v2908 = vrot.slane %v2906, 5
        %v2909 = vsel %vm1025, %v2904, %v2908
        %v2911 = vshrl.u32 %v2673, 16
        %v2913 = vrot.slane %v2911, 4
        %v2914 = vshll.u32 %v2673, 16
        %v2916 = vrot.slane %v2914, 5
        %v2917 = vor.u32 %v2913, %v2916
        %v2918 = vrot.slane %v2917, 4
        %v2920 = vshll.u32 %v2674, 16
        %v2922 = vrot.slane %v2920, 5
        %v2923 = vsel %vm1025, %v2918, %v2922
        %v2924 = vshrl.u32 %v2674, 16
        %v2926 = vrot.slane %v2924, 4
        %v2927 = vor.u32 %v2926, %v2922
        %v2928 = vrot.slane %v2927, 4
        %v2930 = vshll.u32 %v2675, 16
        %v2932 = vrot.slane %v2930, 5
        %v2933 = vsel %vm1025, %v2928, %v2932
        %v2935 = vshrl.u32 %v2676, 16
        %v2937 = vrot.slane %v2935, 4
        %v2938 = vshll.u32 %v2676, 16
        %v2940 = vrot.slane %v2938, 5
        %v2941 = vor.u32 %v2937, %v2940
        %v2942 = vrot.slane %v2941, 4
        %v2944 = vshll.u32 %v2677, 16
        %v2946 = vrot.slane %v2944, 5
        %v2947 = vsel %vm1025, %v2942, %v2946
        %v2948 = vshrl.u32 %v2677, 16
        %v2950 = vrot.slane %v2948, 4
        %v2951 = vor.u32 %v2950, %v2946
        %v2952 = vrot.slane %v2951, 4
        %v2954 = vshll.u32 %v2678, 16
        %v2956 = vrot.slane %v2954, 5
        %v2957 = vsel %vm1025, %v2952, %v2956
        %v2959 = vshrl.u32 %v2679, 16
        %v2961 = vrot.slane %v2959, 4
        %v2962 = vshll.u32 %v2679, 16
        %v2964 = vrot.slane %v2962, 5
        %v2965 = vor.u32 %v2961, %v2964
        %v2966 = vrot.slane %v2965, 4
        %v2968 = vshll.u32 %v2680, 16
        %v2970 = vrot.slane %v2968, 5
        %v2971 = vsel %vm1025, %v2966, %v2970
        %v2972 = vshrl.u32 %v2680, 16
        %v2974 = vrot.slane %v2972, 4
        %v2975 = vor.u32 %v2974, %v2970
        %v2976 = vrot.slane %v2975, 4
        %v2978 = vshll.u32 %v2681, 16
        %v2980 = vrot.slane %v2978, 5
        %v2981 = vsel %vm1025, %v2976, %v2980
        %v2983 = vshrl.u32 %v2682, 16
        %v2985 = vrot.slane %v2983, 4
        %v2986 = vshll.u32 %v2682, 16
        %v2988 = vrot.slane %v2986, 5
        %v2989 = vor.u32 %v2985, %v2988
        %v2990 = vrot.slane %v2989, 4
        %v2992 = vshll.u32 %v2683, 16
        %v2994 = vrot.slane %v2992, 5
        %v2995 = vsel %vm1025, %v2990, %v2994
        %v2996 = vshrl.u32 %v2683, 16
        %v2998 = vrot.slane %v2996, 4
        %v2999 = vor.u32 %v2998, %v2994
        %v3000 = vrot.slane %v2999, 4
        %v3002 = vshll.u32 %v2684, 16
        %v3004 = vrot.slane %v3002, 5
        %v3005 = vsel %vm1025, %v3000, %v3004
        %v3007 = vshrl.u32 %v2685, 16
        %v3009 = vrot.slane %v3007, 4
        %v3010 = vshll.u32 %v2685, 16
        %v3012 = vrot.slane %v3010, 5
        %v3013 = vor.u32 %v3009, %v3012
        %v3014 = vrot.slane %v3013, 4
        %v3016 = vshll.u32 %v2686, 16
        %v3018 = vrot.slane %v3016, 5
        %v3019 = vsel %vm1025, %v3014, %v3018
        %v3020 = vshrl.u32 %v2686, 16
        %v3022 = vrot.slane %v3020, 4
        %v3023 = vor.u32 %v3022, %v3018
        %v3024 = vrot.slane %v3023, 4
        %v3026 = vshll.u32 %v2687, 16
        %v3028 = vrot.slane %v3026, 5
        %v3029 = vsel %vm1025, %v3024, %v3028
        %v3031 = vshrl.u32 %v2688, 16
        %v3033 = vrot.slane %v3031, 4
        %v3034 = vshll.u32 %v2688, 16
        %v3036 = vrot.slane %v3034, 5
        %v3037 = vor.u32 %v3033, %v3036
        %v3038 = vrot.slane %v3037, 4
        %v3040 = vshll.u32 %v2689, 16
        %v3042 = vrot.slane %v3040, 5
        %v3043 = vsel %vm1025, %v3038, %v3042
        %v3044 = vshrl.u32 %v2689, 16
        %v3046 = vrot.slane %v3044, 4
        %v3047 = vor.u32 %v3046, %v3042
        %v3048 = vrot.slane %v3047, 4
        %v3050 = vshll.u32 %v2690, 16
        %v3052 = vrot.slane %v3050, 5
        %v3053 = vsel %vm1025, %v3048, %v3052
        %v3055 = vshrl.u32 %v2691, 16
        %v3057 = vrot.slane %v3055, 4
        %v3058 = vshll.u32 %v2691, 16
        %v3060 = vrot.slane %v3058, 5
        %v3061 = vor.u32 %v3057, %v3060
        %v3062 = vrot.slane %v3061, 4
        %v3064 = vshll.u32 %v2692, 16
        %v3066 = vrot.slane %v3064, 5
        %v3067 = vsel %vm1025, %v3062, %v3066
        %v3068 = vshrl.u32 %v2692, 16
        %v3070 = vrot.slane %v3068, 4
        %v3071 = vor.u32 %v3070, %v3066
        %v3072 = vrot.slane %v3071, 4
        %v3074 = vshll.u32 %v2693, 16
        %v3076 = vrot.slane %v3074, 5
        %v3077 = vsel %vm1025, %v3072, %v3076
        %3110 = vst.msk [vmem:[#allocation3 + $0x1c] sm:$0xf] %vm222, %v2707
        %3111 = vst.msk [vmem:[#allocation3 + $0x40] sm:$0xf] %vm222, %v2717
        %3112 = vst.msk [vmem:[#allocation3 + $0x64] sm:$0xf] %vm222, %v2731
        %3113 = vst.msk [vmem:[#allocation3 + $0x88] sm:$0xf] %vm222, %v2741
        %3114 = vst.msk [vmem:[#allocation3 + $0xac] sm:$0xf] %vm222, %v2755
        %3115 = vst.msk [vmem:[#allocation3 + $0xd0] sm:$0xf] %vm222, %v2765
        %3116 = vst.msk [vmem:[#allocation3 + $0xf4] sm:$0xf] %vm222, %v2779
        %3117 = vst.msk [vmem:[#allocation3 + $0x118] sm:$0xf] %vm222, %v2789
        %3118 = vst.msk [vmem:[#allocation3 + $0x13c] sm:$0xf] %vm222, %v2803
        %3119 = vst.msk [vmem:[#allocation3 + $0x160] sm:$0xf] %vm222, %v2813
        %3120 = vst.msk [vmem:[#allocation3 + $0x184] sm:$0xf] %vm222, %v2827
        %3121 = vst.msk [vmem:[#allocation3 + $0x1a8] sm:$0xf] %vm222, %v2837
        %3122 = vst.msk [vmem:[#allocation3 + $0x1cc] sm:$0xf] %vm222, %v2851
        %3123 = vst.msk [vmem:[#allocation3 + $0x1f0] sm:$0xf] %vm222, %v2861
        %3124 = vst.msk [vmem:[#allocation3 + $0x214] sm:$0xf] %vm222, %v2875
        %3125 = vst.msk [vmem:[#allocation3 + $0x238] sm:$0xf] %vm222, %v2885
        %3126 = vst.msk [vmem:[#allocation3 + $0x25c] sm:$0xf] %vm222, %v2899
        %3127 = vst.msk [vmem:[#allocation3 + $0x280] sm:$0xf] %vm222, %v2909
        %3128 = vst.msk [vmem:[#allocation3 + $0x2a4] sm:$0xf] %vm222, %v2923
        %3129 = vst.msk [vmem:[#allocation3 + $0x2c8] sm:$0xf] %vm222, %v2933
        %3130 = vst.msk [vmem:[#allocation3 + $0x2ec] sm:$0xf] %vm222, %v2947
        %3131 = vst.msk [vmem:[#allocation3 + $0x310] sm:$0xf] %vm222, %v2957
        %3132 = vst.msk [vmem:[#allocation3 + $0x334] sm:$0xf] %vm222, %v2971
        %3133 = vst.msk [vmem:[#allocation3 + $0x358] sm:$0xf] %vm222, %v2981
        %3134 = vst.msk [vmem:[#allocation3 + $0x37c] sm:$0xf] %vm222, %v2995
        %3135 = vst.msk [vmem:[#allocation3 + $0x3a0] sm:$0xf] %vm222, %v3005
        %3136 = vst.msk [vmem:[#allocation3 + $0x3c4] sm:$0xf] %vm222, %v3019
        %3137 = vst.msk [vmem:[#allocation3 + $0x3e8] sm:$0xf] %vm222, %v3029
        %3138 = vst.msk [vmem:[#allocation3 + $0x40c] sm:$0xf] %vm222, %v3043
        %3139 = vst.msk [vmem:[#allocation3 + $0x430] sm:$0xf] %vm222, %v3053
        %3140 = vst.msk [vmem:[#allocation3 + $0x454] sm:$0xf] %vm222, %v3067
        %3141 = vst.msk [vmem:[#allocation3 + $0x478] sm:$0xf] %vm222, %v3077
        %v3142 = vld [vmem:[%s2581] sm:$0xe]
        %v3143 = vld [vmem:[%s2581 + $0x4] sm:$0xf]
        %v3144 = vld [vmem:[%s2581 + $0x8] sm:$0x1]
        %v3145 = vld [vmem:[%s2581 + $0xc] sm:$0xe]
        %v3146 = vld [vmem:[%s2581 + $0x10] sm:$0xf]
        %v3147 = vld [vmem:[%s2581 + $0x14] sm:$0x1]
        %v3148 = vld [vmem:[%s2581 + $0x18] sm:$0xe]
        %v3149 = vld [vmem:[%s2581 + $0x1c] sm:$0xf]
        %v3150 = vld [vmem:[%s2581 + $0x20] sm:$0x1]
        %v3151 = vld [vmem:[%s2581 + $0x24] sm:$0xe]
        %v3152 = vld [vmem:[%s2581 + $0x28] sm:$0xf]
        %v3153 = vld [vmem:[%s2581 + $0x2c] sm:$0x1]
        %v3154 = vld [vmem:[%s2581 + $0x30] sm:$0xe]
        %v3155 = vld [vmem:[%s2581 + $0x34] sm:$0xf]
        %v3156 = vld [vmem:[%s2581 + $0x38] sm:$0x1]
        %v3157 = vld [vmem:[%s2581 + $0x3c] sm:$0xe]
        %v3158 = vld [vmem:[%s2581 + $0x40] sm:$0xf]
        %v3159 = vld [vmem:[%s2581 + $0x44] sm:$0x1]
        %v3160 = vld [vmem:[%s2581 + $0x48] sm:$0xe]
        %v3161 = vld [vmem:[%s2581 + $0x4c] sm:$0xf]
        %v3162 = vld [vmem:[%s2581 + $0x50] sm:$0x1]
        %v3163 = vld [vmem:[%s2581 + $0x54] sm:$0xe]
        %v3164 = vld [vmem:[%s2581 + $0x58] sm:$0xf]
        %v3165 = vld [vmem:[%s2581 + $0x5c] sm:$0x1]
        %v3166 = vld [vmem:[%s2581 + $0x60] sm:$0xe]
        %v3167 = vld [vmem:[%s2581 + $0x64] sm:$0xf]
        %v3168 = vld [vmem:[%s2581 + $0x68] sm:$0x1]
        %v3169 = vld [vmem:[%s2581 + $0x6c] sm:$0xe]
        %v3170 = vld [vmem:[%s2581 + $0x70] sm:$0xf]
        %v3171 = vld [vmem:[%s2581 + $0x74] sm:$0x1]
        %v3172 = vld [vmem:[%s2581 + $0x78] sm:$0xe]
        %v3173 = vld [vmem:[%s2581 + $0x7c] sm:$0xf]
        %v3174 = vld [vmem:[%s2581 + $0x80] sm:$0x1]
        %v3175 = vld [vmem:[%s2581 + $0x84] sm:$0xe]
        %v3176 = vld [vmem:[%s2581 + $0x88] sm:$0xf]
        %v3177 = vld [vmem:[%s2581 + $0x8c] sm:$0x1]
        %v3178 = vld [vmem:[%s2581 + $0x90] sm:$0xe]
        %v3179 = vld [vmem:[%s2581 + $0x94] sm:$0xf]
        %v3180 = vld [vmem:[%s2581 + $0x98] sm:$0x1]
        %v3181 = vld [vmem:[%s2581 + $0x9c] sm:$0xe]
        %v3182 = vld [vmem:[%s2581 + $0xa0] sm:$0xf]
        %v3183 = vld [vmem:[%s2581 + $0xa4] sm:$0x1]
        %v3184 = vld [vmem:[%s2581 + $0xa8] sm:$0xe]
        %v3185 = vld [vmem:[%s2581 + $0xac] sm:$0xf]
        %v3186 = vld [vmem:[%s2581 + $0xb0] sm:$0x1]
        %v3187 = vld [vmem:[%s2581 + $0xb4] sm:$0xe]
        %v3188 = vld [vmem:[%s2581 + $0xb8] sm:$0xf]
        %v3189 = vld [vmem:[%s2581 + $0xbc] sm:$0x1]
        %v3238 = vrot.slane %v3142, 5
        %v3239 = vrot.slane %v3238, 4
        %v3240 = vrot.slane %v3143, 5
        %v3241 = vsel %vm1572, %v3239, %v3240
        %v3242 = vrot.slane %v3240, 4
        %v3243 = vrot.slane %v3144, 5
        %v3244 = vsel %vm1572, %v3242, %v3243
        %v3245 = vrot.slane %v3145, 5
        %v3246 = vrot.slane %v3245, 4
        %v3247 = vrot.slane %v3146, 5
        %v3248 = vsel %vm1572, %v3246, %v3247
        %v3249 = vrot.slane %v3247, 4
        %v3250 = vrot.slane %v3147, 5
        %v3251 = vsel %vm1572, %v3249, %v3250
        %v3252 = vrot.slane %v3148, 5
        %v3253 = vrot.slane %v3252, 4
        %v3254 = vrot.slane %v3149, 5
        %v3255 = vsel %vm1572, %v3253, %v3254
        %v3256 = vrot.slane %v3254, 4
        %v3257 = vrot.slane %v3150, 5
        %v3258 = vsel %vm1572, %v3256, %v3257
        %v3259 = vrot.slane %v3151, 5
        %v3260 = vrot.slane %v3259, 4
        %v3261 = vrot.slane %v3152, 5
        %v3262 = vsel %vm1572, %v3260, %v3261
        %v3263 = vrot.slane %v3261, 4
        %v3264 = vrot.slane %v3153, 5
        %v3265 = vsel %vm1572, %v3263, %v3264
        %v3266 = vrot.slane %v3154, 5
        %v3267 = vrot.slane %v3266, 4
        %v3268 = vrot.slane %v3155, 5
        %v3269 = vsel %vm1572, %v3267, %v3268
        %v3270 = vrot.slane %v3268, 4
        %v3271 = vrot.slane %v3156, 5
        %v3272 = vsel %vm1572, %v3270, %v3271
        %v3273 = vrot.slane %v3157, 5
        %v3274 = vrot.slane %v3273, 4
        %v3275 = vrot.slane %v3158, 5
        %v3276 = vsel %vm1572, %v3274, %v3275
        %v3277 = vrot.slane %v3275, 4
        %v3278 = vrot.slane %v3159, 5
        %v3279 = vsel %vm1572, %v3277, %v3278
        %v3280 = vrot.slane %v3160, 5
        %v3281 = vrot.slane %v3280, 4
        %v3282 = vrot.slane %v3161, 5
        %v3283 = vsel %vm1572, %v3281, %v3282
        %v3284 = vrot.slane %v3282, 4
        %v3285 = vrot.slane %v3162, 5
        %v3286 = vsel %vm1572, %v3284, %v3285
        %v3287 = vrot.slane %v3163, 5
        %v3288 = vrot.slane %v3287, 4
        %v3289 = vrot.slane %v3164, 5
        %v3290 = vsel %vm1572, %v3288, %v3289
        %v3291 = vrot.slane %v3289, 4
        %v3292 = vrot.slane %v3165, 5
        %v3293 = vsel %vm1572, %v3291, %v3292
        %v3294 = vrot.slane %v3166, 5
        %v3295 = vrot.slane %v3294, 4
        %v3296 = vrot.slane %v3167, 5
        %v3297 = vsel %vm1572, %v3295, %v3296
        %v3298 = vrot.slane %v3296, 4
        %v3299 = vrot.slane %v3168, 5
        %v3300 = vsel %vm1572, %v3298, %v3299
        %v3301 = vrot.slane %v3169, 5
        %v3302 = vrot.slane %v3301, 4
        %v3303 = vrot.slane %v3170, 5
        %v3304 = vsel %vm1572, %v3302, %v3303
        %v3305 = vrot.slane %v3303, 4
        %v3306 = vrot.slane %v3171, 5
        %v3307 = vsel %vm1572, %v3305, %v3306
        %v3308 = vrot.slane %v3172, 5
        %v3309 = vrot.slane %v3308, 4
        %v3310 = vrot.slane %v3173, 5
        %v3311 = vsel %vm1572, %v3309, %v3310
        %v3312 = vrot.slane %v3310, 4
        %v3313 = vrot.slane %v3174, 5
        %v3314 = vsel %vm1572, %v3312, %v3313
        %v3315 = vrot.slane %v3175, 5
        %v3316 = vrot.slane %v3315, 4
        %v3317 = vrot.slane %v3176, 5
        %v3318 = vsel %vm1572, %v3316, %v3317
        %v3319 = vrot.slane %v3317, 4
        %v3320 = vrot.slane %v3177, 5
        %v3321 = vsel %vm1572, %v3319, %v3320
        %v3322 = vrot.slane %v3178, 5
        %v3323 = vrot.slane %v3322, 4
        %v3324 = vrot.slane %v3179, 5
        %v3325 = vsel %vm1572, %v3323, %v3324
        %v3326 = vrot.slane %v3324, 4
        %v3327 = vrot.slane %v3180, 5
        %v3328 = vsel %vm1572, %v3326, %v3327
        %v3329 = vrot.slane %v3181, 5
        %v3330 = vrot.slane %v3329, 4
        %v3331 = vrot.slane %v3182, 5
        %v3332 = vsel %vm1572, %v3330, %v3331
        %v3333 = vrot.slane %v3331, 4
        %v3334 = vrot.slane %v3183, 5
        %v3335 = vsel %vm1572, %v3333, %v3334
        %v3336 = vrot.slane %v3184, 5
        %v3337 = vrot.slane %v3336, 4
        %v3338 = vrot.slane %v3185, 5
        %v3339 = vsel %vm1572, %v3337, %v3338
        %v3340 = vrot.slane %v3338, 4
        %v3341 = vrot.slane %v3186, 5
        %v3342 = vsel %vm1572, %v3340, %v3341
        %v3343 = vrot.slane %v3187, 5
        %v3344 = vrot.slane %v3343, 4
        %v3345 = vrot.slane %v3188, 5
        %v3346 = vsel %vm1572, %v3344, %v3345
        %v3347 = vrot.slane %v3345, 4
        %v3348 = vrot.slane %v3189, 5
        %v3349 = vsel %vm1572, %v3347, %v3348
        %3382 = vst.msk [vmem:[#allocation3 + $0x20] sm:$0xf] %vm222, %v3241
        %3383 = vst.msk [vmem:[#allocation3 + $0x44] sm:$0xf] %vm222, %v3244
        %3384 = vst.msk [vmem:[#allocation3 + $0x68] sm:$0xf] %vm222, %v3248
        %3385 = vst.msk [vmem:[#allocation3 + $0x8c] sm:$0xf] %vm222, %v3251
        %3386 = vst.msk [vmem:[#allocation3 + $0xb0] sm:$0xf] %vm222, %v3255
        %3387 = vst.msk [vmem:[#allocation3 + $0xd4] sm:$0xf] %vm222, %v3258
        %3388 = vst.msk [vmem:[#allocation3 + $0xf8] sm:$0xf] %vm222, %v3262
        %3389 = vst.msk [vmem:[#allocation3 + $0x11c] sm:$0xf] %vm222, %v3265
        %3390 = vst.msk [vmem:[#allocation3 + $0x140] sm:$0xf] %vm222, %v3269
        %3391 = vst.msk [vmem:[#allocation3 + $0x164] sm:$0xf] %vm222, %v3272
        %3392 = vst.msk [vmem:[#allocation3 + $0x188] sm:$0xf] %vm222, %v3276
        %3393 = vst.msk [vmem:[#allocation3 + $0x1ac] sm:$0xf] %vm222, %v3279
        %3394 = vst.msk [vmem:[#allocation3 + $0x1d0] sm:$0xf] %vm222, %v3283
        %3395 = vst.msk [vmem:[#allocation3 + $0x1f4] sm:$0xf] %vm222, %v3286
        %3396 = vst.msk [vmem:[#allocation3 + $0x218] sm:$0xf] %vm222, %v3290
        %3397 = vst.msk [vmem:[#allocation3 + $0x23c] sm:$0xf] %vm222, %v3293
        %3398 = vst.msk [vmem:[#allocation3 + $0x260] sm:$0xf] %vm222, %v3297
        %3399 = vst.msk [vmem:[#allocation3 + $0x284] sm:$0xf] %vm222, %v3300
        %3400 = vst.msk [vmem:[#allocation3 + $0x2a8] sm:$0xf] %vm222, %v3304
        %3401 = vst.msk [vmem:[#allocation3 + $0x2cc] sm:$0xf] %vm222, %v3307
        %3402 = vst.msk [vmem:[#allocation3 + $0x2f0] sm:$0xf] %vm222, %v3311
        %3403 = vst.msk [vmem:[#allocation3 + $0x314] sm:$0xf] %vm222, %v3314
        %3404 = vst.msk [vmem:[#allocation3 + $0x338] sm:$0xf] %vm222, %v3318
        %3405 = vst.msk [vmem:[#allocation3 + $0x35c] sm:$0xf] %vm222, %v3321
        %3406 = vst.msk [vmem:[#allocation3 + $0x380] sm:$0xf] %vm222, %v3325
        %3407 = vst.msk [vmem:[#allocation3 + $0x3a4] sm:$0xf] %vm222, %v3328
        %3408 = vst.msk [vmem:[#allocation3 + $0x3c8] sm:$0xf] %vm222, %v3332
        %3409 = vst.msk [vmem:[#allocation3 + $0x3ec] sm:$0xf] %vm222, %v3335
        %3410 = vst.msk [vmem:[#allocation3 + $0x410] sm:$0xf] %vm222, %v3339
        %3411 = vst.msk [vmem:[#allocation3 + $0x434] sm:$0xf] %vm222, %v3342
        %3412 = vst.msk [vmem:[#allocation3 + $0x458] sm:$0xf] %vm222, %v3346
        %3413 = vst.msk [vmem:[#allocation3 + $0x47c] sm:$0xf] %vm222, %v3349
        %v3414 = vld [vmem:[#allocation3] sm:$0xff]
        %v3415 = vld [vmem:[#allocation3 + $0x8] sm:$0xff]
        %v3416 = vld [vmem:[#allocation3 + $0x10] sm:$0xff]
        %v3417 = vld [vmem:[#allocation3 + $0x18] sm:$0xff]
        %v3418 = vld [vmem:[#allocation3 + $0x20] sm:$0xf]
        %v3419 = vld [vmem:[#allocation3 + $0x24] sm:$0xff]
        %v3420 = vld [vmem:[#allocation3 + $0x2c] sm:$0xff]
        %v3421 = vld [vmem:[#allocation3 + $0x34] sm:$0xff]
        %v3422 = vld [vmem:[#allocation3 + $0x3c] sm:$0xff]
        %v3423 = vld [vmem:[#allocation3 + $0x44] sm:$0xf]
        %v3424 = vld [vmem:[#allocation3 + $0x48] sm:$0xff]
        %v3425 = vld [vmem:[#allocation3 + $0x50] sm:$0xff]
        %v3426 = vld [vmem:[#allocation3 + $0x58] sm:$0xff]
        %v3427 = vld [vmem:[#allocation3 + $0x60] sm:$0xff]
        %v3428 = vld [vmem:[#allocation3 + $0x68] sm:$0xf]
        %v3429 = vld [vmem:[#allocation3 + $0x6c] sm:$0xff]
        %v3430 = vld [vmem:[#allocation3 + $0x74] sm:$0xff]
        %v3431 = vld [vmem:[#allocation3 + $0x7c] sm:$0xff]
        %v3432 = vld [vmem:[#allocation3 + $0x84] sm:$0xff]
        %v3433 = vld [vmem:[#allocation3 + $0x8c] sm:$0xf]
        %v3434 = vld [vmem:[#allocation3 + $0x90] sm:$0xff]
        %v3435 = vld [vmem:[#allocation3 + $0x98] sm:$0xff]
        %v3436 = vld [vmem:[#allocation3 + $0xa0] sm:$0xff]
        %v3437 = vld [vmem:[#allocation3 + $0xa8] sm:$0xff]
        %v3438 = vld [vmem:[#allocation3 + $0xb0] sm:$0xf]
        %v3439 = vld [vmem:[#allocation3 + $0xb4] sm:$0xff]
        %v3440 = vld [vmem:[#allocation3 + $0xbc] sm:$0xff]
        %v3441 = vld [vmem:[#allocation3 + $0xc4] sm:$0xff]
        %v3442 = vld [vmem:[#allocation3 + $0xcc] sm:$0xff]
        %v3443 = vld [vmem:[#allocation3 + $0xd4] sm:$0xf]
        %v3444 = vld [vmem:[#allocation3 + $0xd8] sm:$0xff]
        %v3445 = vld [vmem:[#allocation3 + $0xe0] sm:$0xff]
        %v3446 = vld [vmem:[#allocation3 + $0xe8] sm:$0xff]
        %v3447 = vld [vmem:[#allocation3 + $0xf0] sm:$0xff]
        %v3448 = vld [vmem:[#allocation3 + $0xf8] sm:$0xf]
        %v3449 = vld [vmem:[#allocation3 + $0xfc] sm:$0xff]
        %v3450 = vld [vmem:[#allocation3 + $0x104] sm:$0xff]
        %v3451 = vld [vmem:[#allocation3 + $0x10c] sm:$0xff]
        %v3452 = vld [vmem:[#allocation3 + $0x114] sm:$0xff]
        %v3453 = vld [vmem:[#allocation3 + $0x11c] sm:$0xf]
        %v3454 = vld [vmem:[#allocation3 + $0x120] sm:$0xff]
        %v3455 = vld [vmem:[#allocation3 + $0x128] sm:$0xff]
        %v3456 = vld [vmem:[#allocation3 + $0x130] sm:$0xff]
        %v3457 = vld [vmem:[#allocation3 + $0x138] sm:$0xff]
        %v3458 = vld [vmem:[#allocation3 + $0x140] sm:$0xf]
        %v3459 = vld [vmem:[#allocation3 + $0x144] sm:$0xff]
        %v3460 = vld [vmem:[#allocation3 + $0x14c] sm:$0xff]
        %v3461 = vld [vmem:[#allocation3 + $0x154] sm:$0xff]
        %v3462 = vld [vmem:[#allocation3 + $0x15c] sm:$0xff]
        %v3463 = vld [vmem:[#allocation3 + $0x164] sm:$0xf]
        %v3464 = vld [vmem:[#allocation3 + $0x168] sm:$0xff]
        %v3465 = vld [vmem:[#allocation3 + $0x170] sm:$0xff]
        %v3466 = vld [vmem:[#allocation3 + $0x178] sm:$0xff]
        %v3467 = vld [vmem:[#allocation3 + $0x180] sm:$0xff]
        %v3468 = vld [vmem:[#allocation3 + $0x188] sm:$0xf]
        %v3469 = vld [vmem:[#allocation3 + $0x18c] sm:$0xff]
        %v3470 = vld [vmem:[#allocation3 + $0x194] sm:$0xff]
        %v3471 = vld [vmem:[#allocation3 + $0x19c] sm:$0xff]
        %v3472 = vld [vmem:[#allocation3 + $0x1a4] sm:$0xff]
        %v3473 = vld [vmem:[#allocation3 + $0x1ac] sm:$0xf]
        %v3474 = vld [vmem:[#allocation3 + $0x1b0] sm:$0xff]
        %v3475 = vld [vmem:[#allocation3 + $0x1b8] sm:$0xff]
        %v3476 = vld [vmem:[#allocation3 + $0x1c0] sm:$0xff]
        %v3477 = vld [vmem:[#allocation3 + $0x1c8] sm:$0xff]
        %v3478 = vld [vmem:[#allocation3 + $0x1d0] sm:$0xf]
        %v3479 = vld [vmem:[#allocation3 + $0x1d4] sm:$0xff]
        %v3480 = vld [vmem:[#allocation3 + $0x1dc] sm:$0xff]
        %v3481 = vld [vmem:[#allocation3 + $0x1e4] sm:$0xff]
        %v3482 = vld [vmem:[#allocation3 + $0x1ec] sm:$0xff]
        %v3483 = vld [vmem:[#allocation3 + $0x1f4] sm:$0xf]
        %v3484 = vld [vmem:[#allocation3 + $0x1f8] sm:$0xff]
        %v3485 = vld [vmem:[#allocation3 + $0x200] sm:$0xff]
        %v3486 = vld [vmem:[#allocation3 + $0x208] sm:$0xff]
        %v3487 = vld [vmem:[#allocation3 + $0x210] sm:$0xff]
        %v3488 = vld [vmem:[#allocation3 + $0x218] sm:$0xf]
        %v3489 = vld [vmem:[#allocation3 + $0x21c] sm:$0xff]
        %v3490 = vld [vmem:[#allocation3 + $0x224] sm:$0xff]
        %v3491 = vld [vmem:[#allocation3 + $0x22c] sm:$0xff]
        %v3492 = vld [vmem:[#allocation3 + $0x234] sm:$0xff]
        %v3493 = vld [vmem:[#allocation3 + $0x23c] sm:$0xf]
        %v3494 = vld [vmem:[#allocation3 + $0x240] sm:$0xff]
        %v3495 = vld [vmem:[#allocation3 + $0x248] sm:$0xff]
        %v3496 = vld [vmem:[#allocation3 + $0x250] sm:$0xff]
        %v3497 = vld [vmem:[#allocation3 + $0x258] sm:$0xff]
        %v3498 = vld [vmem:[#allocation3 + $0x260] sm:$0xf]
        %v3499 = vld [vmem:[#allocation3 + $0x264] sm:$0xff]
        %v3500 = vld [vmem:[#allocation3 + $0x26c] sm:$0xff]
        %v3501 = vld [vmem:[#allocation3 + $0x274] sm:$0xff]
        %v3502 = vld [vmem:[#allocation3 + $0x27c] sm:$0xff]
        %v3503 = vld [vmem:[#allocation3 + $0x284] sm:$0xf]
        %v3504 = vld [vmem:[#allocation3 + $0x288] sm:$0xff]
        %v3505 = vld [vmem:[#allocation3 + $0x290] sm:$0xff]
        %v3506 = vld [vmem:[#allocation3 + $0x298] sm:$0xff]
        %v3507 = vld [vmem:[#allocation3 + $0x2a0] sm:$0xff]
        %v3508 = vld [vmem:[#allocation3 + $0x2a8] sm:$0xf]
        %v3509 = vld [vmem:[#allocation3 + $0x2ac] sm:$0xff]
        %v3510 = vld [vmem:[#allocation3 + $0x2b4] sm:$0xff]
        %v3511 = vld [vmem:[#allocation3 + $0x2bc] sm:$0xff]
        %v3512 = vld [vmem:[#allocation3 + $0x2c4] sm:$0xff]
        %v3513 = vld [vmem:[#allocation3 + $0x2cc] sm:$0xf]
        %v3514 = vld [vmem:[#allocation3 + $0x2d0] sm:$0xff]
        %v3515 = vld [vmem:[#allocation3 + $0x2d8] sm:$0xff]
        %v3516 = vld [vmem:[#allocation3 + $0x2e0] sm:$0xff]
        %v3517 = vld [vmem:[#allocation3 + $0x2e8] sm:$0xff]
        %v3518 = vld [vmem:[#allocation3 + $0x2f0] sm:$0xf]
        %v3519 = vld [vmem:[#allocation3 + $0x2f4] sm:$0xff]
        %v3520 = vld [vmem:[#allocation3 + $0x2fc] sm:$0xff]
        %v3521 = vld [vmem:[#allocation3 + $0x304] sm:$0xff]
        %v3522 = vld [vmem:[#allocation3 + $0x30c] sm:$0xff]
        %v3523 = vld [vmem:[#allocation3 + $0x314] sm:$0xf]
        %v3524 = vld [vmem:[#allocation3 + $0x318] sm:$0xff]
        %v3525 = vld [vmem:[#allocation3 + $0x320] sm:$0xff]
        %v3526 = vld [vmem:[#allocation3 + $0x328] sm:$0xff]
        %v3527 = vld [vmem:[#allocation3 + $0x330] sm:$0xff]
        %v3528 = vld [vmem:[#allocation3 + $0x338] sm:$0xf]
        %v3529 = vld [vmem:[#allocation3 + $0x33c] sm:$0xff]
        %v3530 = vld [vmem:[#allocation3 + $0x344] sm:$0xff]
        %v3531 = vld [vmem:[#allocation3 + $0x34c] sm:$0xff]
        %v3532 = vld [vmem:[#allocation3 + $0x354] sm:$0xff]
        %v3533 = vld [vmem:[#allocation3 + $0x35c] sm:$0xf]
        %v3534 = vld [vmem:[#allocation3 + $0x360] sm:$0xff]
        %v3535 = vld [vmem:[#allocation3 + $0x368] sm:$0xff]
        %v3536 = vld [vmem:[#allocation3 + $0x370] sm:$0xff]
        %v3537 = vld [vmem:[#allocation3 + $0x378] sm:$0xff]
        %v3538 = vld [vmem:[#allocation3 + $0x380] sm:$0xf]
        %v3539 = vld [vmem:[#allocation3 + $0x384] sm:$0xff]
        %v3540 = vld [vmem:[#allocation3 + $0x38c] sm:$0xff]
        %v3541 = vld [vmem:[#allocation3 + $0x394] sm:$0xff]
        %v3542 = vld [vmem:[#allocation3 + $0x39c] sm:$0xff]
        %v3543 = vld [vmem:[#allocation3 + $0x3a4] sm:$0xf]
        %v3544 = vld [vmem:[#allocation3 + $0x3a8] sm:$0xff]
        %v3545 = vld [vmem:[#allocation3 + $0x3b0] sm:$0xff]
        %v3546 = vld [vmem:[#allocation3 + $0x3b8] sm:$0xff]
        %v3547 = vld [vmem:[#allocation3 + $0x3c0] sm:$0xff]
        %v3548 = vld [vmem:[#allocation3 + $0x3c8] sm:$0xf]
        %v3549 = vld [vmem:[#allocation3 + $0x3cc] sm:$0xff]
        %v3550 = vld [vmem:[#allocation3 + $0x3d4] sm:$0xff]
        %v3551 = vld [vmem:[#allocation3 + $0x3dc] sm:$0xff]
        %v3552 = vld [vmem:[#allocation3 + $0x3e4] sm:$0xff]
        %v3553 = vld [vmem:[#allocation3 + $0x3ec] sm:$0xf]
        %v3554 = vld [vmem:[#allocation3 + $0x3f0] sm:$0xff]
        %v3555 = vld [vmem:[#allocation3 + $0x3f8] sm:$0xff]
        %v3556 = vld [vmem:[#allocation3 + $0x400] sm:$0xff]
        %v3557 = vld [vmem:[#allocation3 + $0x408] sm:$0xff]
        %v3558 = vld [vmem:[#allocation3 + $0x410] sm:$0xf]
        %v3559 = vld [vmem:[#allocation3 + $0x414] sm:$0xff]
        %v3560 = vld [vmem:[#allocation3 + $0x41c] sm:$0xff]
        %v3561 = vld [vmem:[#allocation3 + $0x424] sm:$0xff]
        %v3562 = vld [vmem:[#allocation3 + $0x42c] sm:$0xff]
        %v3563 = vld [vmem:[#allocation3 + $0x434] sm:$0xf]
        %v3564 = vld [vmem:[#allocation3 + $0x438] sm:$0xff]
        %v3565 = vld [vmem:[#allocation3 + $0x440] sm:$0xff]
        %v3566 = vld [vmem:[#allocation3 + $0x448] sm:$0xff]
        %v3567 = vld [vmem:[#allocation3 + $0x450] sm:$0xff]
        %v3568 = vld [vmem:[#allocation3 + $0x458] sm:$0xf]
        %v3569 = vld [vmem:[#allocation3 + $0x45c] sm:$0xff]
        %v3570 = vld [vmem:[#allocation3 + $0x464] sm:$0xff]
        %v3571 = vld [vmem:[#allocation3 + $0x46c] sm:$0xff]
        %v3572 = vld [vmem:[#allocation3 + $0x474] sm:$0xff]
        %v3573 = vld [vmem:[#allocation3 + $0x47c] sm:$0xf]
        %v3574 = vld [vmem:[#allocation4] sm:$0xf]
        %v3575 = vld [vmem:[#allocation4 + $0x4] sm:$0xf]
        %v3576 = vld [vmem:[#allocation4 + $0x8] sm:$0xf]
        %v3577 = vld [vmem:[#allocation4 + $0xc] sm:$0xf]
        %v3578 = vld [vmem:[#allocation4 + $0x10] sm:$0xf]
        %v3579 = vld [vmem:[#allocation4 + $0x14] sm:$0xf]
        %v3580 = vld [vmem:[#allocation4 + $0x18] sm:$0xf]
        %v3581 = vld [vmem:[#allocation4 + $0x1c] sm:$0xf]
        %v3582 = vld [vmem:[#allocation4 + $0x20] sm:$0xf]
        %v3583 = vld [vmem:[#allocation4 + $0x24] sm:$0xf]
        %v3584 = vld [vmem:[#allocation4 + $0x28] sm:$0xf]
        %v3585 = vld [vmem:[#allocation4 + $0x2c] sm:$0xf]
        %v3586 = vld [vmem:[#allocation4 + $0x30] sm:$0xf]
        %v3587 = vld [vmem:[#allocation4 + $0x34] sm:$0xf]
        %v3588 = vld [vmem:[#allocation4 + $0x38] sm:$0xf]
        %v3589 = vld [vmem:[#allocation4 + $0x3c] sm:$0xf]
        %v3590 = vld [vmem:[#allocation4 + $0x40] sm:$0xf]
        %v3591 = vld [vmem:[#allocation4 + $0x44] sm:$0xf]
        %v3592 = vld [vmem:[#allocation4 + $0x48] sm:$0xf]
        %v3593 = vld [vmem:[#allocation4 + $0x4c] sm:$0xf]
        %v3594 = vld [vmem:[#allocation4 + $0x50] sm:$0xf]
        %v3595 = vld [vmem:[#allocation4 + $0x54] sm:$0xf]
        %v3596 = vld [vmem:[#allocation4 + $0x58] sm:$0xf]
        %v3597 = vld [vmem:[#allocation4 + $0x5c] sm:$0xf]
        %v3598 = vld [vmem:[#allocation4 + $0x60] sm:$0xf]
        %v3599 = vld [vmem:[#allocation4 + $0x64] sm:$0xf]
        %v3600 = vld [vmem:[#allocation4 + $0x68] sm:$0xf]
        %v3601 = vld [vmem:[#allocation4 + $0x6c] sm:$0xf]
        %v3602 = vld [vmem:[#allocation4 + $0x70] sm:$0xf]
        %v3603 = vld [vmem:[#allocation4 + $0x74] sm:$0xf]
        %v3604 = vld [vmem:[#allocation4 + $0x78] sm:$0xf]
        %v3605 = vld [vmem:[#allocation4 + $0x7c] sm:$0xf]
        %v3606 = vld [vmem:[#allocation4 + $0x80] sm:$0xf]
        %v3607 = vld [vmem:[#allocation4 + $0x84] sm:$0xf]
        %v3608 = vld [vmem:[#allocation4 + $0x88] sm:$0xf]
        %v3609 = vld [vmem:[#allocation4 + $0x8c] sm:$0xf]
        %v3610 = vld [vmem:[#allocation4 + $0x90] sm:$0xf]
        %v3611 = vld [vmem:[#allocation4 + $0x94] sm:$0xf]
        %v3612 = vld [vmem:[#allocation4 + $0x98] sm:$0xf]
        %v3613 = vld [vmem:[#allocation4 + $0x9c] sm:$0xf]
        %v3614 = vld [vmem:[#allocation4 + $0xa0] sm:$0xf]
        %v3615 = vld [vmem:[#allocation4 + $0xa4] sm:$0xf]
        %v3616 = vld [vmem:[#allocation4 + $0xa8] sm:$0xf]
        %v3617 = vld [vmem:[#allocation4 + $0xac] sm:$0xf]
        %v3618 = vld [vmem:[#allocation4 + $0xb0] sm:$0xf]
        %v3619 = vld [vmem:[#allocation4 + $0xb4] sm:$0xf]
        %v3620 = vld [vmem:[#allocation4 + $0xb8] sm:$0xf]
        %v3621 = vld [vmem:[#allocation4 + $0xbc] sm:$0xf]
        %v3622 = vld [vmem:[#allocation4 + $0xc0] sm:$0xf]
        %v3623 = vld [vmem:[#allocation4 + $0xc4] sm:$0xf]
        %v3624 = vld [vmem:[#allocation4 + $0xc8] sm:$0xf]
        %v3625 = vld [vmem:[#allocation4 + $0xcc] sm:$0xf]
        %v3626 = vld [vmem:[#allocation4 + $0xd0] sm:$0xf]
        %v3627 = vld [vmem:[#allocation4 + $0xd4] sm:$0xf]
        %v3628 = vld [vmem:[#allocation4 + $0xd8] sm:$0xf]
        %v3629 = vld [vmem:[#allocation4 + $0xdc] sm:$0xf]
        %v3630 = vld [vmem:[#allocation4 + $0xe0] sm:$0xf]
        %v3631 = vld [vmem:[#allocation4 + $0xe4] sm:$0xf]
        %v3632 = vld [vmem:[#allocation4 + $0xe8] sm:$0xf]
        %v3633 = vld [vmem:[#allocation4 + $0xec] sm:$0xf]
        %v3634 = vld [vmem:[#allocation4 + $0xf0] sm:$0xf]
        %v3635 = vld [vmem:[#allocation4 + $0xf4] sm:$0xf]
        %v3636 = vld [vmem:[#allocation4 + $0xf8] sm:$0xf]
        %v3637 = vld [vmem:[#allocation4 + $0xfc] sm:$0xf]
        %v3638 = vld [vmem:[#allocation4 + $0x100] sm:$0xf]
        %v3639 = vld [vmem:[#allocation4 + $0x104] sm:$0xf]
        %v3640 = vld [vmem:[#allocation4 + $0x108] sm:$0xf]
        %v3641 = vld [vmem:[#allocation4 + $0x10c] sm:$0xf]
        %v3642 = vld [vmem:[#allocation4 + $0x110] sm:$0xf]
        %v3643 = vld [vmem:[#allocation4 + $0x114] sm:$0xf]
        %v3644 = vld [vmem:[#allocation4 + $0x118] sm:$0xf]
        %v3645 = vld [vmem:[#allocation4 + $0x11c] sm:$0xf]
        %v3646 = vld [vmem:[#allocation4 + $0x120] sm:$0xf]
        %v3647 = vld [vmem:[#allocation4 + $0x124] sm:$0xf]
        %v3648 = vld [vmem:[#allocation4 + $0x128] sm:$0xf]
        %v3649 = vld [vmem:[#allocation4 + $0x12c] sm:$0xf]
        %v3650 = vld [vmem:[#allocation4 + $0x130] sm:$0xf]
        %v3651 = vld [vmem:[#allocation4 + $0x134] sm:$0xf]
        %v3652 = vld [vmem:[#allocation4 + $0x138] sm:$0xf]
        %v3653 = vld [vmem:[#allocation4 + $0x13c] sm:$0xf]
        %v3654 = vld [vmem:[#allocation4 + $0x140] sm:$0xf]
        %v3655 = vld [vmem:[#allocation4 + $0x144] sm:$0xf]
        %v3656 = vld [vmem:[#allocation4 + $0x148] sm:$0xf]
        %v3657 = vld [vmem:[#allocation4 + $0x14c] sm:$0xf]
        %v3658 = vld [vmem:[#allocation4 + $0x150] sm:$0xf]
        %v3659 = vld [vmem:[#allocation4 + $0x154] sm:$0xf]
        %v3660 = vld [vmem:[#allocation4 + $0x158] sm:$0xf]
        %v3661 = vld [vmem:[#allocation4 + $0x15c] sm:$0xf]
        %v3662 = vld [vmem:[#allocation4 + $0x160] sm:$0xf]
        %v3663 = vld [vmem:[#allocation4 + $0x164] sm:$0xf]
        %v3664 = vld [vmem:[#allocation4 + $0x168] sm:$0xf]
        %v3665 = vld [vmem:[#allocation4 + $0x16c] sm:$0xf]
        %v3666 = vld [vmem:[#allocation4 + $0x170] sm:$0xf]
        %v3667 = vld [vmem:[#allocation4 + $0x174] sm:$0xf]
        %v3668 = vld [vmem:[#allocation4 + $0x178] sm:$0xf]
        %v3669 = vld [vmem:[#allocation4 + $0x17c] sm:$0xf]
        %v3670 = vld [vmem:[#allocation4 + $0x180] sm:$0xf]
        %v3671 = vld [vmem:[#allocation4 + $0x184] sm:$0xf]
        %v3672 = vld [vmem:[#allocation4 + $0x188] sm:$0xf]
        %v3673 = vld [vmem:[#allocation4 + $0x18c] sm:$0xf]
        %v3674 = vld [vmem:[#allocation4 + $0x190] sm:$0xf]
        %v3675 = vld [vmem:[#allocation4 + $0x194] sm:$0xf]
        %v3676 = vld [vmem:[#allocation4 + $0x198] sm:$0xf]
        %v3677 = vld [vmem:[#allocation4 + $0x19c] sm:$0xf]
        %v3678 = vld [vmem:[#allocation4 + $0x1a0] sm:$0xf]
        %v3679 = vld [vmem:[#allocation4 + $0x1a4] sm:$0xf]
        %v3680 = vld [vmem:[#allocation4 + $0x1a8] sm:$0xf]
        %v3681 = vld [vmem:[#allocation4 + $0x1ac] sm:$0xf]
        %v3682 = vld [vmem:[#allocation4 + $0x1b0] sm:$0xf]
        %v3683 = vld [vmem:[#allocation4 + $0x1b4] sm:$0xf]
        %v3684 = vld [vmem:[#allocation4 + $0x1b8] sm:$0xf]
        %v3685 = vld [vmem:[#allocation4 + $0x1bc] sm:$0xf]
        %v3686 = vld [vmem:[#allocation4 + $0x1c0] sm:$0xf]
        %v3687 = vld [vmem:[#allocation4 + $0x1c4] sm:$0xf]
        %v3688 = vld [vmem:[#allocation4 + $0x1c8] sm:$0xf]
        %v3689 = vld [vmem:[#allocation4 + $0x1cc] sm:$0xf]
        %v3690 = vld [vmem:[#allocation4 + $0x1d0] sm:$0xf]
        %v3691 = vld [vmem:[#allocation4 + $0x1d4] sm:$0xf]
        %v3692 = vld [vmem:[#allocation4 + $0x1d8] sm:$0xf]
        %v3693 = vld [vmem:[#allocation4 + $0x1dc] sm:$0xf]
        %v3694 = vld [vmem:[#allocation4 + $0x1e0] sm:$0xf]
        %v3695 = vld [vmem:[#allocation4 + $0x1e4] sm:$0xf]
        %v3696 = vld [vmem:[#allocation4 + $0x1e8] sm:$0xf]
        %v3697 = vld [vmem:[#allocation4 + $0x1ec] sm:$0xf]
        %v3698 = vld [vmem:[#allocation4 + $0x1f0] sm:$0xf]
        %v3699 = vld [vmem:[#allocation4 + $0x1f4] sm:$0xf]
        %v3700 = vld [vmem:[#allocation4 + $0x1f8] sm:$0xf]
        %v3701 = vld [vmem:[#allocation4 + $0x1fc] sm:$0xf]
        %v3702 = vld [vmem:[#allocation4 + $0x200] sm:$0xf]
        %v3703 = vld [vmem:[#allocation4 + $0x204] sm:$0xf]
        %v3704 = vld [vmem:[#allocation4 + $0x208] sm:$0xf]
        %v3705 = vld [vmem:[#allocation4 + $0x20c] sm:$0xf]
        %v3706 = vld [vmem:[#allocation4 + $0x210] sm:$0xf]
        %v3707 = vld [vmem:[#allocation4 + $0x214] sm:$0xf]
        %v3708 = vld [vmem:[#allocation4 + $0x218] sm:$0xf]
        %v3709 = vld [vmem:[#allocation4 + $0x21c] sm:$0xf]
        %v3710 = vld [vmem:[#allocation4 + $0x220] sm:$0xf]
        %v3711 = vld [vmem:[#allocation4 + $0x224] sm:$0xf]
        %v3712 = vld [vmem:[#allocation4 + $0x228] sm:$0xf]
        %v3713 = vld [vmem:[#allocation4 + $0x22c] sm:$0xf]
        %v3714 = vld [vmem:[#allocation4 + $0x230] sm:$0xf]
        %v3715 = vld [vmem:[#allocation4 + $0x234] sm:$0xf]
        %v3716 = vld [vmem:[#allocation4 + $0x238] sm:$0xf]
        %v3717 = vld [vmem:[#allocation4 + $0x23c] sm:$0xf]
        %v3718 = vld [vmem:[%s220] sm:$0x1]
        %v3720 = vperm.slane %v3718, 0
        %v3882 = vunpack.c.l.b16 %v3414
        %v3883 = vunpack.c.h.b16 %v3414
        %v3884 = vunpack.c.l.b16 %v3415
        %v3885 = vunpack.c.h.b16 %v3415
        %v3886 = vunpack.c.l.b16 %v3416
        %v3887 = vunpack.c.h.b16 %v3416
        %v3888 = vunpack.c.l.b16 %v3417
        %v3889 = vunpack.c.h.b16 %v3417
        %v3890 = vunpack.c.l.b16 %v3418
        %v3891 = vunpack.c.l.b16 %v3419
        %v3892 = vunpack.c.h.b16 %v3419
        %v3893 = vunpack.c.l.b16 %v3420
        %v3894 = vunpack.c.h.b16 %v3420
        %v3895 = vunpack.c.l.b16 %v3421
        %v3896 = vunpack.c.h.b16 %v3421
        %v3897 = vunpack.c.l.b16 %v3422
        %v3898 = vunpack.c.h.b16 %v3422
        %v3899 = vunpack.c.l.b16 %v3423
        %v3900 = vunpack.c.l.b16 %v3424
        %v3901 = vunpack.c.h.b16 %v3424
        %v3902 = vunpack.c.l.b16 %v3425
        %v3903 = vunpack.c.h.b16 %v3425
        %v3904 = vunpack.c.l.b16 %v3426
        %v3905 = vunpack.c.h.b16 %v3426
        %v3906 = vunpack.c.l.b16 %v3427
        %v3907 = vunpack.c.h.b16 %v3427
        %v3908 = vunpack.c.l.b16 %v3428
        %v3909 = vunpack.c.l.b16 %v3429
        %v3910 = vunpack.c.h.b16 %v3429
        %v3911 = vunpack.c.l.b16 %v3430
        %v3912 = vunpack.c.h.b16 %v3430
        %v3913 = vunpack.c.l.b16 %v3431
        %v3914 = vunpack.c.h.b16 %v3431
        %v3915 = vunpack.c.l.b16 %v3432
        %v3916 = vunpack.c.h.b16 %v3432
        %v3917 = vunpack.c.l.b16 %v3433
        %v3918 = vunpack.c.l.b16 %v3434
        %v3919 = vunpack.c.h.b16 %v3434
        %v3920 = vunpack.c.l.b16 %v3435
        %v3921 = vunpack.c.h.b16 %v3435
        %v3922 = vunpack.c.l.b16 %v3436
        %v3923 = vunpack.c.h.b16 %v3436
        %v3924 = vunpack.c.l.b16 %v3437
        %v3925 = vunpack.c.h.b16 %v3437
        %v3926 = vunpack.c.l.b16 %v3438
        %v3927 = vunpack.c.l.b16 %v3439
        %v3928 = vunpack.c.h.b16 %v3439
        %v3929 = vunpack.c.l.b16 %v3440
        %v3930 = vunpack.c.h.b16 %v3440
        %v3931 = vunpack.c.l.b16 %v3441
        %v3932 = vunpack.c.h.b16 %v3441
        %v3933 = vunpack.c.l.b16 %v3442
        %v3934 = vunpack.c.h.b16 %v3442
        %v3935 = vunpack.c.l.b16 %v3443
        %v3936 = vunpack.c.l.b16 %v3444
        %v3937 = vunpack.c.h.b16 %v3444
        %v3938 = vunpack.c.l.b16 %v3445
        %v3939 = vunpack.c.h.b16 %v3445
        %v3940 = vunpack.c.l.b16 %v3446
        %v3941 = vunpack.c.h.b16 %v3446
        %v3942 = vunpack.c.l.b16 %v3447
        %v3943 = vunpack.c.h.b16 %v3447
        %v3944 = vunpack.c.l.b16 %v3448
        %v3945 = vunpack.c.l.b16 %v3449
        %v3946 = vunpack.c.h.b16 %v3449
        %v3947 = vunpack.c.l.b16 %v3450
        %v3948 = vunpack.c.h.b16 %v3450
        %v3949 = vunpack.c.l.b16 %v3451
        %v3950 = vunpack.c.h.b16 %v3451
        %v3951 = vunpack.c.l.b16 %v3452
        %v3952 = vunpack.c.h.b16 %v3452
        %v3953 = vunpack.c.l.b16 %v3453
        %v3954 = vunpack.c.l.b16 %v3454
        %v3955 = vunpack.c.h.b16 %v3454
        %v3956 = vunpack.c.l.b16 %v3455
        %v3957 = vunpack.c.h.b16 %v3455
        %v3958 = vunpack.c.l.b16 %v3456
        %v3959 = vunpack.c.h.b16 %v3456
        %v3960 = vunpack.c.l.b16 %v3457
        %v3961 = vunpack.c.h.b16 %v3457
        %v3962 = vunpack.c.l.b16 %v3458
        %v3963 = vunpack.c.l.b16 %v3459
        %v3964 = vunpack.c.h.b16 %v3459
        %v3965 = vunpack.c.l.b16 %v3460
        %v3966 = vunpack.c.h.b16 %v3460
        %v3967 = vunpack.c.l.b16 %v3461
        %v3968 = vunpack.c.h.b16 %v3461
        %v3969 = vunpack.c.l.b16 %v3462
        %v3970 = vunpack.c.h.b16 %v3462
        %v3971 = vunpack.c.l.b16 %v3463
        %v3972 = vunpack.c.l.b16 %v3464
        %v3973 = vunpack.c.h.b16 %v3464
        %v3974 = vunpack.c.l.b16 %v3465
        %v3975 = vunpack.c.h.b16 %v3465
        %v3976 = vunpack.c.l.b16 %v3466
        %v3977 = vunpack.c.h.b16 %v3466
        %v3978 = vunpack.c.l.b16 %v3467
        %v3979 = vunpack.c.h.b16 %v3467
        %v3980 = vunpack.c.l.b16 %v3468
        %v3981 = vunpack.c.l.b16 %v3469
        %v3982 = vunpack.c.h.b16 %v3469
        %v3983 = vunpack.c.l.b16 %v3470
        %v3984 = vunpack.c.h.b16 %v3470
        %v3985 = vunpack.c.l.b16 %v3471
        %v3986 = vunpack.c.h.b16 %v3471
        %v3987 = vunpack.c.l.b16 %v3472
        %v3988 = vunpack.c.h.b16 %v3472
        %v3989 = vunpack.c.l.b16 %v3473
        %v3990 = vunpack.c.l.b16 %v3474
        %v3991 = vunpack.c.h.b16 %v3474
        %v3992 = vunpack.c.l.b16 %v3475
        %v3993 = vunpack.c.h.b16 %v3475
        %v3994 = vunpack.c.l.b16 %v3476
        %v3995 = vunpack.c.h.b16 %v3476
        %v3996 = vunpack.c.l.b16 %v3477
        %v3997 = vunpack.c.h.b16 %v3477
        %v3998 = vunpack.c.l.b16 %v3478
        %v3999 = vunpack.c.l.b16 %v3479
        %v4000 = vunpack.c.h.b16 %v3479
        %v4001 = vunpack.c.l.b16 %v3480
        %v4002 = vunpack.c.h.b16 %v3480
        %v4003 = vunpack.c.l.b16 %v3481
        %v4004 = vunpack.c.h.b16 %v3481
        %v4005 = vunpack.c.l.b16 %v3482
        %v4006 = vunpack.c.h.b16 %v3482
        %v4007 = vunpack.c.l.b16 %v3483
        %v4008 = vunpack.c.l.b16 %v3484
        %v4009 = vunpack.c.h.b16 %v3484
        %v4010 = vunpack.c.l.b16 %v3485
        %v4011 = vunpack.c.h.b16 %v3485
        %v4012 = vunpack.c.l.b16 %v3486
        %v4013 = vunpack.c.h.b16 %v3486
        %v4014 = vunpack.c.l.b16 %v3487
        %v4015 = vunpack.c.h.b16 %v3487
        %v4016 = vunpack.c.l.b16 %v3488
        %v4017 = vunpack.c.l.b16 %v3489
        %v4018 = vunpack.c.h.b16 %v3489
        %v4019 = vunpack.c.l.b16 %v3490
        %v4020 = vunpack.c.h.b16 %v3490
        %v4021 = vunpack.c.l.b16 %v3491
        %v4022 = vunpack.c.h.b16 %v3491
        %v4023 = vunpack.c.l.b16 %v3492
        %v4024 = vunpack.c.h.b16 %v3492
        %v4025 = vunpack.c.l.b16 %v3493
        %v4026 = vunpack.c.l.b16 %v3494
        %v4027 = vunpack.c.h.b16 %v3494
        %v4028 = vunpack.c.l.b16 %v3495
        %v4029 = vunpack.c.h.b16 %v3495
        %v4030 = vunpack.c.l.b16 %v3496
        %v4031 = vunpack.c.h.b16 %v3496
        %v4032 = vunpack.c.l.b16 %v3497
        %v4033 = vunpack.c.h.b16 %v3497
        %v4034 = vunpack.c.l.b16 %v3498
        %v4035 = vunpack.c.l.b16 %v3499
        %v4036 = vunpack.c.h.b16 %v3499
        %v4037 = vunpack.c.l.b16 %v3500
        %v4038 = vunpack.c.h.b16 %v3500
        %v4039 = vunpack.c.l.b16 %v3501
        %v4040 = vunpack.c.h.b16 %v3501
        %v4041 = vunpack.c.l.b16 %v3502
        %v4042 = vunpack.c.h.b16 %v3502
        %v4043 = vunpack.c.l.b16 %v3503
        %v4044 = vunpack.c.l.b16 %v3504
        %v4045 = vunpack.c.h.b16 %v3504
        %v4046 = vunpack.c.l.b16 %v3505
        %v4047 = vunpack.c.h.b16 %v3505
        %v4048 = vunpack.c.l.b16 %v3506
        %v4049 = vunpack.c.h.b16 %v3506
        %v4050 = vunpack.c.l.b16 %v3507
        %v4051 = vunpack.c.h.b16 %v3507
        %v4052 = vunpack.c.l.b16 %v3508
        %v4053 = vunpack.c.l.b16 %v3509
        %v4054 = vunpack.c.h.b16 %v3509
        %v4055 = vunpack.c.l.b16 %v3510
        %v4056 = vunpack.c.h.b16 %v3510
        %v4057 = vunpack.c.l.b16 %v3511
        %v4058 = vunpack.c.h.b16 %v3511
        %v4059 = vunpack.c.l.b16 %v3512
        %v4060 = vunpack.c.h.b16 %v3512
        %v4061 = vunpack.c.l.b16 %v3513
        %v4062 = vunpack.c.l.b16 %v3514
        %v4063 = vunpack.c.h.b16 %v3514
        %v4064 = vunpack.c.l.b16 %v3515
        %v4065 = vunpack.c.h.b16 %v3515
        %v4066 = vunpack.c.l.b16 %v3516
        %v4067 = vunpack.c.h.b16 %v3516
        %v4068 = vunpack.c.l.b16 %v3517
        %v4069 = vunpack.c.h.b16 %v3517
        %v4070 = vunpack.c.l.b16 %v3518
        %v4071 = vunpack.c.l.b16 %v3519
        %v4072 = vunpack.c.h.b16 %v3519
        %v4073 = vunpack.c.l.b16 %v3520
        %v4074 = vunpack.c.h.b16 %v3520
        %v4075 = vunpack.c.l.b16 %v3521
        %v4076 = vunpack.c.h.b16 %v3521
        %v4077 = vunpack.c.l.b16 %v3522
        %v4078 = vunpack.c.h.b16 %v3522
        %v4079 = vunpack.c.l.b16 %v3523
        %v4080 = vunpack.c.l.b16 %v3524
        %v4081 = vunpack.c.h.b16 %v3524
        %v4082 = vunpack.c.l.b16 %v3525
        %v4083 = vunpack.c.h.b16 %v3525
        %v4084 = vunpack.c.l.b16 %v3526
        %v4085 = vunpack.c.h.b16 %v3526
        %v4086 = vunpack.c.l.b16 %v3527
        %v4087 = vunpack.c.h.b16 %v3527
        %v4088 = vunpack.c.l.b16 %v3528
        %v4089 = vunpack.c.l.b16 %v3529
        %v4090 = vunpack.c.h.b16 %v3529
        %v4091 = vunpack.c.l.b16 %v3530
        %v4092 = vunpack.c.h.b16 %v3530
        %v4093 = vunpack.c.l.b16 %v3531
        %v4094 = vunpack.c.h.b16 %v3531
        %v4095 = vunpack.c.l.b16 %v3532
        %v4096 = vunpack.c.h.b16 %v3532
        %v4097 = vunpack.c.l.b16 %v3533
        %v4098 = vunpack.c.l.b16 %v3534
        %v4099 = vunpack.c.h.b16 %v3534
        %v4100 = vunpack.c.l.b16 %v3535
        %v4101 = vunpack.c.h.b16 %v3535
        %v4102 = vunpack.c.l.b16 %v3536
        %v4103 = vunpack.c.h.b16 %v3536
        %v4104 = vunpack.c.l.b16 %v3537
        %v4105 = vunpack.c.h.b16 %v3537
        %v4106 = vunpack.c.l.b16 %v3538
        %v4107 = vunpack.c.l.b16 %v3539
        %v4108 = vunpack.c.h.b16 %v3539
        %v4109 = vunpack.c.l.b16 %v3540
        %v4110 = vunpack.c.h.b16 %v3540
        %v4111 = vunpack.c.l.b16 %v3541
        %v4112 = vunpack.c.h.b16 %v3541
        %v4113 = vunpack.c.l.b16 %v3542
        %v4114 = vunpack.c.h.b16 %v3542
        %v4115 = vunpack.c.l.b16 %v3543
        %v4116 = vunpack.c.l.b16 %v3544
        %v4117 = vunpack.c.h.b16 %v3544
        %v4118 = vunpack.c.l.b16 %v3545
        %v4119 = vunpack.c.h.b16 %v3545
        %v4120 = vunpack.c.l.b16 %v3546
        %v4121 = vunpack.c.h.b16 %v3546
        %v4122 = vunpack.c.l.b16 %v3547
        %v4123 = vunpack.c.h.b16 %v3547
        %v4124 = vunpack.c.l.b16 %v3548
        %v4125 = vunpack.c.l.b16 %v3549
        %v4126 = vunpack.c.h.b16 %v3549
        %v4127 = vunpack.c.l.b16 %v3550
        %v4128 = vunpack.c.h.b16 %v3550
        %v4129 = vunpack.c.l.b16 %v3551
        %v4130 = vunpack.c.h.b16 %v3551
        %v4131 = vunpack.c.l.b16 %v3552
        %v4132 = vunpack.c.h.b16 %v3552
        %v4133 = vunpack.c.l.b16 %v3553
        %v4134 = vunpack.c.l.b16 %v3554
        %v4135 = vunpack.c.h.b16 %v3554
        %v4136 = vunpack.c.l.b16 %v3555
        %v4137 = vunpack.c.h.b16 %v3555
        %v4138 = vunpack.c.l.b16 %v3556
        %v4139 = vunpack.c.h.b16 %v3556
        %v4140 = vunpack.c.l.b16 %v3557
        %v4141 = vunpack.c.h.b16 %v3557
        %v4142 = vunpack.c.l.b16 %v3558
        %v4143 = vunpack.c.l.b16 %v3559
        %v4144 = vunpack.c.h.b16 %v3559
        %v4145 = vunpack.c.l.b16 %v3560
        %v4146 = vunpack.c.h.b16 %v3560
        %v4147 = vunpack.c.l.b16 %v3561
        %v4148 = vunpack.c.h.b16 %v3561
        %v4149 = vunpack.c.l.b16 %v3562
        %v4150 = vunpack.c.h.b16 %v3562
        %v4151 = vunpack.c.l.b16 %v3563
        %v4152 = vunpack.c.l.b16 %v3564
        %v4153 = vunpack.c.h.b16 %v3564
        %v4154 = vunpack.c.l.b16 %v3565
        %v4155 = vunpack.c.h.b16 %v3565
        %v4156 = vunpack.c.l.b16 %v3566
        %v4157 = vunpack.c.h.b16 %v3566
        %v4158 = vunpack.c.l.b16 %v3567
        %v4159 = vunpack.c.h.b16 %v3567
        %v4160 = vunpack.c.l.b16 %v3568
        %v4161 = vunpack.c.l.b16 %v3569
        %v4162 = vunpack.c.h.b16 %v3569
        %v4163 = vunpack.c.l.b16 %v3570
        %v4164 = vunpack.c.h.b16 %v3570
        %v4165 = vunpack.c.l.b16 %v3571
        %v4166 = vunpack.c.h.b16 %v3571
        %v4167 = vunpack.c.l.b16 %v3572
        %v4168 = vunpack.c.h.b16 %v3572
        %v4169 = vunpack.c.l.b16 %v3573
        %v4170 = vpack.c.b16 %v3891, %v3882
        %v4171 = vpack.c.b16 %v3892, %v3883
        %v4172 = vpack.c.b16 %v3893, %v3884
        %v4173 = vpack.c.b16 %v3894, %v3885
        %v4174 = vpack.c.b16 %v3895, %v3886
        %v4175 = vpack.c.b16 %v3896, %v3887
        %v4176 = vpack.c.b16 %v3897, %v3888
        %v4177 = vpack.c.b16 %v3898, %v3889
        %v4178 = vpack.c.b16 %v3899, %v3890
        %v4179 = vpack.c.b16 %v3909, %v3900
        %v4180 = vpack.c.b16 %v3910, %v3901
        %v4181 = vpack.c.b16 %v3911, %v3902
        %v4182 = vpack.c.b16 %v3912, %v3903
        %v4183 = vpack.c.b16 %v3913, %v3904
        %v4184 = vpack.c.b16 %v3914, %v3905
        %v4185 = vpack.c.b16 %v3915, %v3906
        %v4186 = vpack.c.b16 %v3916, %v3907
        %v4187 = vpack.c.b16 %v3917, %v3908
        %v4188 = vpack.c.b16 %v3927, %v3918
        %v4189 = vpack.c.b16 %v3928, %v3919
        %v4190 = vpack.c.b16 %v3929, %v3920
        %v4191 = vpack.c.b16 %v3930, %v3921
        %v4192 = vpack.c.b16 %v3931, %v3922
        %v4193 = vpack.c.b16 %v3932, %v3923
        %v4194 = vpack.c.b16 %v3933, %v3924
        %v4195 = vpack.c.b16 %v3934, %v3925
        %v4196 = vpack.c.b16 %v3935, %v3926
        %v4197 = vpack.c.b16 %v3945, %v3936
        %v4198 = vpack.c.b16 %v3946, %v3937
        %v4199 = vpack.c.b16 %v3947, %v3938
        %v4200 = vpack.c.b16 %v3948, %v3939
        %v4201 = vpack.c.b16 %v3949, %v3940
        %v4202 = vpack.c.b16 %v3950, %v3941
        %v4203 = vpack.c.b16 %v3951, %v3942
        %v4204 = vpack.c.b16 %v3952, %v3943
        %v4205 = vpack.c.b16 %v3953, %v3944
        %v4206 = vpack.c.b16 %v3963, %v3954
        %v4207 = vpack.c.b16 %v3964, %v3955
        %v4208 = vpack.c.b16 %v3965, %v3956
        %v4209 = vpack.c.b16 %v3966, %v3957
        %v4210 = vpack.c.b16 %v3967, %v3958
        %v4211 = vpack.c.b16 %v3968, %v3959
        %v4212 = vpack.c.b16 %v3969, %v3960
        %v4213 = vpack.c.b16 %v3970, %v3961
        %v4214 = vpack.c.b16 %v3971, %v3962
        %v4215 = vpack.c.b16 %v3981, %v3972
        %v4216 = vpack.c.b16 %v3982, %v3973
        %v4217 = vpack.c.b16 %v3983, %v3974
        %v4218 = vpack.c.b16 %v3984, %v3975
        %v4219 = vpack.c.b16 %v3985, %v3976
        %v4220 = vpack.c.b16 %v3986, %v3977
        %v4221 = vpack.c.b16 %v3987, %v3978
        %v4222 = vpack.c.b16 %v3988, %v3979
        %v4223 = vpack.c.b16 %v3989, %v3980
        %v4224 = vpack.c.b16 %v3999, %v3990
        %v4225 = vpack.c.b16 %v4000, %v3991
        %v4226 = vpack.c.b16 %v4001, %v3992
        %v4227 = vpack.c.b16 %v4002, %v3993
        %v4228 = vpack.c.b16 %v4003, %v3994
        %v4229 = vpack.c.b16 %v4004, %v3995
        %v4230 = vpack.c.b16 %v4005, %v3996
        %v4231 = vpack.c.b16 %v4006, %v3997
        %v4232 = vpack.c.b16 %v4007, %v3998
        %v4233 = vpack.c.b16 %v4017, %v4008
        %v4234 = vpack.c.b16 %v4018, %v4009
        %v4235 = vpack.c.b16 %v4019, %v4010
        %v4236 = vpack.c.b16 %v4020, %v4011
        %v4237 = vpack.c.b16 %v4021, %v4012
        %v4238 = vpack.c.b16 %v4022, %v4013
        %v4239 = vpack.c.b16 %v4023, %v4014
        %v4240 = vpack.c.b16 %v4024, %v4015
        %v4241 = vpack.c.b16 %v4025, %v4016
        %v4242 = vpack.c.b16 %v4035, %v4026
        %v4243 = vpack.c.b16 %v4036, %v4027
        %v4244 = vpack.c.b16 %v4037, %v4028
        %v4245 = vpack.c.b16 %v4038, %v4029
        %v4246 = vpack.c.b16 %v4039, %v4030
        %v4247 = vpack.c.b16 %v4040, %v4031
        %v4248 = vpack.c.b16 %v4041, %v4032
        %v4249 = vpack.c.b16 %v4042, %v4033
        %v4250 = vpack.c.b16 %v4043, %v4034
        %v4251 = vpack.c.b16 %v4053, %v4044
        %v4252 = vpack.c.b16 %v4054, %v4045
        %v4253 = vpack.c.b16 %v4055, %v4046
        %v4254 = vpack.c.b16 %v4056, %v4047
        %v4255 = vpack.c.b16 %v4057, %v4048
        %v4256 = vpack.c.b16 %v4058, %v4049
        %v4257 = vpack.c.b16 %v4059, %v4050
        %v4258 = vpack.c.b16 %v4060, %v4051
        %v4259 = vpack.c.b16 %v4061, %v4052
        %v4260 = vpack.c.b16 %v4071, %v4062
        %v4261 = vpack.c.b16 %v4072, %v4063
        %v4262 = vpack.c.b16 %v4073, %v4064
        %v4263 = vpack.c.b16 %v4074, %v4065
        %v4264 = vpack.c.b16 %v4075, %v4066
        %v4265 = vpack.c.b16 %v4076, %v4067
        %v4266 = vpack.c.b16 %v4077, %v4068
        %v4267 = vpack.c.b16 %v4078, %v4069
        %v4268 = vpack.c.b16 %v4079, %v4070
        %v4269 = vpack.c.b16 %v4089, %v4080
        %v4270 = vpack.c.b16 %v4090, %v4081
        %v4271 = vpack.c.b16 %v4091, %v4082
        %v4272 = vpack.c.b16 %v4092, %v4083
        %v4273 = vpack.c.b16 %v4093, %v4084
        %v4274 = vpack.c.b16 %v4094, %v4085
        %v4275 = vpack.c.b16 %v4095, %v4086
        %v4276 = vpack.c.b16 %v4096, %v4087
        %v4277 = vpack.c.b16 %v4097, %v4088
        %v4278 = vpack.c.b16 %v4107, %v4098
        %v4279 = vpack.c.b16 %v4108, %v4099
        %v4280 = vpack.c.b16 %v4109, %v4100
        %v4281 = vpack.c.b16 %v4110, %v4101
        %v4282 = vpack.c.b16 %v4111, %v4102
        %v4283 = vpack.c.b16 %v4112, %v4103
        %v4284 = vpack.c.b16 %v4113, %v4104
        %v4285 = vpack.c.b16 %v4114, %v4105
        %v4286 = vpack.c.b16 %v4115, %v4106
        %v4287 = vpack.c.b16 %v4125, %v4116
        %v4288 = vpack.c.b16 %v4126, %v4117
        %v4289 = vpack.c.b16 %v4127, %v4118
        %v4290 = vpack.c.b16 %v4128, %v4119
        %v4291 = vpack.c.b16 %v4129, %v4120
        %v4292 = vpack.c.b16 %v4130, %v4121
        %v4293 = vpack.c.b16 %v4131, %v4122
        %v4294 = vpack.c.b16 %v4132, %v4123
        %v4295 = vpack.c.b16 %v4133, %v4124
        %v4296 = vpack.c.b16 %v4143, %v4134
        %v4297 = vpack.c.b16 %v4144, %v4135
        %v4298 = vpack.c.b16 %v4145, %v4136
        %v4299 = vpack.c.b16 %v4146, %v4137
        %v4300 = vpack.c.b16 %v4147, %v4138
        %v4301 = vpack.c.b16 %v4148, %v4139
        %v4302 = vpack.c.b16 %v4149, %v4140
        %v4303 = vpack.c.b16 %v4150, %v4141
        %v4304 = vpack.c.b16 %v4151, %v4142
        %v4305 = vpack.c.b16 %v4161, %v4152
        %v4306 = vpack.c.b16 %v4162, %v4153
        %v4307 = vpack.c.b16 %v4163, %v4154
        %v4308 = vpack.c.b16 %v4164, %v4155
        %v4309 = vpack.c.b16 %v4165, %v4156
        %v4310 = vpack.c.b16 %v4166, %v4157
        %v4311 = vpack.c.b16 %v4167, %v4158
        %v4312 = vpack.c.b16 %v4168, %v4159
        %v4313 = vpack.c.b16 %v4169, %v4160
        %v4602 = vunpack.c.l.b16 %v3574
        %v4603 = vunpack.c.l.b16 %v3575
        %v4604 = vunpack.c.l.b16 %v3576
        %v4605 = vunpack.c.l.b16 %v3577
        %v4606 = vunpack.c.l.b16 %v3578
        %v4607 = vunpack.c.l.b16 %v3579
        %v4608 = vunpack.c.l.b16 %v3580
        %v4609 = vunpack.c.l.b16 %v3581
        %v4610 = vunpack.c.l.b16 %v3582
        %v4611 = vunpack.c.l.b16 %v3583
        %v4612 = vunpack.c.l.b16 %v3584
        %v4613 = vunpack.c.l.b16 %v3585
        %v4614 = vunpack.c.l.b16 %v3586
        %v4615 = vunpack.c.l.b16 %v3587
        %v4616 = vunpack.c.l.b16 %v3588
        %v4617 = vunpack.c.l.b16 %v3589
        %v4618 = vunpack.c.l.b16 %v3590
        %v4619 = vunpack.c.l.b16 %v3591
        %v4620 = vunpack.c.l.b16 %v3592
        %v4621 = vunpack.c.l.b16 %v3593
        %v4622 = vunpack.c.l.b16 %v3594
        %v4623 = vunpack.c.l.b16 %v3595
        %v4624 = vunpack.c.l.b16 %v3596
        %v4625 = vunpack.c.l.b16 %v3597
        %v4626 = vunpack.c.l.b16 %v3598
        %v4627 = vunpack.c.l.b16 %v3599
        %v4628 = vunpack.c.l.b16 %v3600
        %v4629 = vunpack.c.l.b16 %v3601
        %v4630 = vunpack.c.l.b16 %v3602
        %v4631 = vunpack.c.l.b16 %v3603
        %v4632 = vunpack.c.l.b16 %v3604
        %v4633 = vunpack.c.l.b16 %v3605
        %v4634 = vunpack.c.l.b16 %v3606
        %v4635 = vunpack.c.l.b16 %v3607
        %v4636 = vunpack.c.l.b16 %v3608
        %v4637 = vunpack.c.l.b16 %v3609
        %v4638 = vunpack.c.l.b16 %v3610
        %v4639 = vunpack.c.l.b16 %v3611
        %v4640 = vunpack.c.l.b16 %v3612
        %v4641 = vunpack.c.l.b16 %v3613
        %v4642 = vunpack.c.l.b16 %v3614
        %v4643 = vunpack.c.l.b16 %v3615
        %v4644 = vunpack.c.l.b16 %v3616
        %v4645 = vunpack.c.l.b16 %v3617
        %v4646 = vunpack.c.l.b16 %v3618
        %v4647 = vunpack.c.l.b16 %v3619
        %v4648 = vunpack.c.l.b16 %v3620
        %v4649 = vunpack.c.l.b16 %v3621
        %v4650 = vunpack.c.l.b16 %v3622
        %v4651 = vunpack.c.l.b16 %v3623
        %v4652 = vunpack.c.l.b16 %v3624
        %v4653 = vunpack.c.l.b16 %v3625
        %v4654 = vunpack.c.l.b16 %v3626
        %v4655 = vunpack.c.l.b16 %v3627
        %v4656 = vunpack.c.l.b16 %v3628
        %v4657 = vunpack.c.l.b16 %v3629
        %v4658 = vunpack.c.l.b16 %v3630
        %v4659 = vunpack.c.l.b16 %v3631
        %v4660 = vunpack.c.l.b16 %v3632
        %v4661 = vunpack.c.l.b16 %v3633
        %v4662 = vunpack.c.l.b16 %v3634
        %v4663 = vunpack.c.l.b16 %v3635
        %v4664 = vunpack.c.l.b16 %v3636
        %v4665 = vunpack.c.l.b16 %v3637
        %v4666 = vunpack.c.l.b16 %v3638
        %v4667 = vunpack.c.l.b16 %v3639
        %v4668 = vunpack.c.l.b16 %v3640
        %v4669 = vunpack.c.l.b16 %v3641
        %v4670 = vunpack.c.l.b16 %v3642
        %v4671 = vunpack.c.l.b16 %v3643
        %v4672 = vunpack.c.l.b16 %v3644
        %v4673 = vunpack.c.l.b16 %v3645
        %v4674 = vunpack.c.l.b16 %v3646
        %v4675 = vunpack.c.l.b16 %v3647
        %v4676 = vunpack.c.l.b16 %v3648
        %v4677 = vunpack.c.l.b16 %v3649
        %v4678 = vunpack.c.l.b16 %v3650
        %v4679 = vunpack.c.l.b16 %v3651
        %v4680 = vunpack.c.l.b16 %v3652
        %v4681 = vunpack.c.l.b16 %v3653
        %v4682 = vunpack.c.l.b16 %v3654
        %v4683 = vunpack.c.l.b16 %v3655
        %v4684 = vunpack.c.l.b16 %v3656
        %v4685 = vunpack.c.l.b16 %v3657
        %v4686 = vunpack.c.l.b16 %v3658
        %v4687 = vunpack.c.l.b16 %v3659
        %v4688 = vunpack.c.l.b16 %v3660
        %v4689 = vunpack.c.l.b16 %v3661
        %v4690 = vunpack.c.l.b16 %v3662
        %v4691 = vunpack.c.l.b16 %v3663
        %v4692 = vunpack.c.l.b16 %v3664
        %v4693 = vunpack.c.l.b16 %v3665
        %v4694 = vunpack.c.l.b16 %v3666
        %v4695 = vunpack.c.l.b16 %v3667
        %v4696 = vunpack.c.l.b16 %v3668
        %v4697 = vunpack.c.l.b16 %v3669
        %v4698 = vunpack.c.l.b16 %v3670
        %v4699 = vunpack.c.l.b16 %v3671
        %v4700 = vunpack.c.l.b16 %v3672
        %v4701 = vunpack.c.l.b16 %v3673
        %v4702 = vunpack.c.l.b16 %v3674
        %v4703 = vunpack.c.l.b16 %v3675
        %v4704 = vunpack.c.l.b16 %v3676
        %v4705 = vunpack.c.l.b16 %v3677
        %v4706 = vunpack.c.l.b16 %v3678
        %v4707 = vunpack.c.l.b16 %v3679
        %v4708 = vunpack.c.l.b16 %v3680
        %v4709 = vunpack.c.l.b16 %v3681
        %v4710 = vunpack.c.l.b16 %v3682
        %v4711 = vunpack.c.l.b16 %v3683
        %v4712 = vunpack.c.l.b16 %v3684
        %v4713 = vunpack.c.l.b16 %v3685
        %v4714 = vunpack.c.l.b16 %v3686
        %v4715 = vunpack.c.l.b16 %v3687
        %v4716 = vunpack.c.l.b16 %v3688
        %v4717 = vunpack.c.l.b16 %v3689
        %v4718 = vunpack.c.l.b16 %v3690
        %v4719 = vunpack.c.l.b16 %v3691
        %v4720 = vunpack.c.l.b16 %v3692
        %v4721 = vunpack.c.l.b16 %v3693
        %v4722 = vunpack.c.l.b16 %v3694
        %v4723 = vunpack.c.l.b16 %v3695
        %v4724 = vunpack.c.l.b16 %v3696
        %v4725 = vunpack.c.l.b16 %v3697
        %v4726 = vunpack.c.l.b16 %v3698
        %v4727 = vunpack.c.l.b16 %v3699
        %v4728 = vunpack.c.l.b16 %v3700
        %v4729 = vunpack.c.l.b16 %v3701
        %v4730 = vunpack.c.l.b16 %v3702
        %v4731 = vunpack.c.l.b16 %v3703
        %v4732 = vunpack.c.l.b16 %v3704
        %v4733 = vunpack.c.l.b16 %v3705
        %v4734 = vunpack.c.l.b16 %v3706
        %v4735 = vunpack.c.l.b16 %v3707
        %v4736 = vunpack.c.l.b16 %v3708
        %v4737 = vunpack.c.l.b16 %v3709
        %v4738 = vunpack.c.l.b16 %v3710
        %v4739 = vunpack.c.l.b16 %v3711
        %v4740 = vunpack.c.l.b16 %v3712
        %v4741 = vunpack.c.l.b16 %v3713
        %v4742 = vunpack.c.l.b16 %v3714
        %v4743 = vunpack.c.l.b16 %v3715
        %v4744 = vunpack.c.l.b16 %v3716
        %v4745 = vunpack.c.l.b16 %v3717
        %v4746 = vpack.c.b16 %v4603, %v4602
        %v4747 = vpack.c.b16 %v4605, %v4604
        %v4748 = vpack.c.b16 %v4607, %v4606
        %v4749 = vpack.c.b16 %v4609, %v4608
        %v4750 = vpack.c.b16 %v4611, %v4610
        %v4751 = vpack.c.b16 %v4613, %v4612
        %v4752 = vpack.c.b16 %v4615, %v4614
        %v4753 = vpack.c.b16 %v4617, %v4616
        %v4754 = vpack.c.b16 %v4619, %v4618
        %v4755 = vpack.c.b16 %v4621, %v4620
        %v4756 = vpack.c.b16 %v4623, %v4622
        %v4757 = vpack.c.b16 %v4625, %v4624
        %v4758 = vpack.c.b16 %v4627, %v4626
        %v4759 = vpack.c.b16 %v4629, %v4628
        %v4760 = vpack.c.b16 %v4631, %v4630
        %v4761 = vpack.c.b16 %v4633, %v4632
        %v4762 = vpack.c.b16 %v4635, %v4634
        %v4763 = vpack.c.b16 %v4637, %v4636
        %v4764 = vpack.c.b16 %v4639, %v4638
        %v4765 = vpack.c.b16 %v4641, %v4640
        %v4766 = vpack.c.b16 %v4643, %v4642
        %v4767 = vpack.c.b16 %v4645, %v4644
        %v4768 = vpack.c.b16 %v4647, %v4646
        %v4769 = vpack.c.b16 %v4649, %v4648
        %v4770 = vpack.c.b16 %v4651, %v4650
        %v4771 = vpack.c.b16 %v4653, %v4652
        %v4772 = vpack.c.b16 %v4655, %v4654
        %v4773 = vpack.c.b16 %v4657, %v4656
        %v4774 = vpack.c.b16 %v4659, %v4658
        %v4775 = vpack.c.b16 %v4661, %v4660
        %v4776 = vpack.c.b16 %v4663, %v4662
        %v4777 = vpack.c.b16 %v4665, %v4664
        %v4778 = vpack.c.b16 %v4667, %v4666
        %v4779 = vpack.c.b16 %v4669, %v4668
        %v4780 = vpack.c.b16 %v4671, %v4670
        %v4781 = vpack.c.b16 %v4673, %v4672
        %v4782 = vpack.c.b16 %v4675, %v4674
        %v4783 = vpack.c.b16 %v4677, %v4676
        %v4784 = vpack.c.b16 %v4679, %v4678
        %v4785 = vpack.c.b16 %v4681, %v4680
        %v4786 = vpack.c.b16 %v4683, %v4682
        %v4787 = vpack.c.b16 %v4685, %v4684
        %v4788 = vpack.c.b16 %v4687, %v4686
        %v4789 = vpack.c.b16 %v4689, %v4688
        %v4790 = vpack.c.b16 %v4691, %v4690
        %v4791 = vpack.c.b16 %v4693, %v4692
        %v4792 = vpack.c.b16 %v4695, %v4694
        %v4793 = vpack.c.b16 %v4697, %v4696
        %v4794 = vpack.c.b16 %v4699, %v4698
        %v4795 = vpack.c.b16 %v4701, %v4700
        %v4796 = vpack.c.b16 %v4703, %v4702
        %v4797 = vpack.c.b16 %v4705, %v4704
        %v4798 = vpack.c.b16 %v4707, %v4706
        %v4799 = vpack.c.b16 %v4709, %v4708
        %v4800 = vpack.c.b16 %v4711, %v4710
        %v4801 = vpack.c.b16 %v4713, %v4712
        %v4802 = vpack.c.b16 %v4715, %v4714
        %v4803 = vpack.c.b16 %v4717, %v4716
        %v4804 = vpack.c.b16 %v4719, %v4718
        %v4805 = vpack.c.b16 %v4721, %v4720
        %v4806 = vpack.c.b16 %v4723, %v4722
        %v4807 = vpack.c.b16 %v4725, %v4724
        %v4808 = vpack.c.b16 %v4727, %v4726
        %v4809 = vpack.c.b16 %v4729, %v4728
        %v4810 = vpack.c.b16 %v4731, %v4730
        %v4811 = vpack.c.b16 %v4733, %v4732
        %v4812 = vpack.c.b16 %v4735, %v4734
        %v4813 = vpack.c.b16 %v4737, %v4736
        %v4814 = vpack.c.b16 %v4739, %v4738
        %v4815 = vpack.c.b16 %v4741, %v4740
        %v4816 = vpack.c.b16 %v4743, %v4742
        %v4817 = vpack.c.b16 %v4745, %v4744
        %4890 = vmatpush.bf16.msra.mxu0 %v4753
        %4891 = vmatpush.bf16.msra.mxu0 %v4752
        %4892 = vmatpush.bf16.msra.mxu0 %v4751
        %4893 = vmatpush.bf16.msra.mxu0 %v4750
        %4894 = vmatpush.bf16.msra.mxu0 %v4749
        %4895 = vmatpush.bf16.msra.mxu0 %v4748
        %4896 = vmatpush.bf16.msra.mxu0 %v4747
        %4897 = vmatpush.bf16.msra.mxu0 %v4746
        %4898 = vmatmul.bf16.gmra.mxu0 %v4170
        %v4899 = vpop.f32.mrf.mxu0
        %v4900 = vadd.f32 %v3720, %v4899
        %v4901 = vpop.f32.mrf.mxu0
        %v4902 = vadd.f32 %v3720, %v4901
        %4903 = vmatmul.bf16.gmra.mxu0 %v4179
        %v4904 = vpop.f32.mrf.mxu0
        %v4905 = vadd.f32 %v3720, %v4904
        %v4906 = vpop.f32.mrf.mxu0
        %v4907 = vadd.f32 %v3720, %v4906
        %4908 = vmatmul.bf16.gmra.mxu0 %v4188
        %v4909 = vpop.f32.mrf.mxu0
        %v4910 = vadd.f32 %v3720, %v4909
        %v4911 = vpop.f32.mrf.mxu0
        %v4912 = vadd.f32 %v3720, %v4911
        %4913 = vmatmul.bf16.gmra.mxu0 %v4197
        %v4914 = vpop.f32.mrf.mxu0
        %v4915 = vadd.f32 %v3720, %v4914
        %v4916 = vpop.f32.mrf.mxu0
        %v4917 = vadd.f32 %v3720, %v4916
        %4918 = vmatmul.bf16.gmra.mxu0 %v4206
        %v4919 = vpop.f32.mrf.mxu0
        %v4920 = vadd.f32 %v3720, %v4919
        %v4921 = vpop.f32.mrf.mxu0
        %v4922 = vadd.f32 %v3720, %v4921
        %4923 = vmatmul.bf16.gmra.mxu0 %v4215
        %v4924 = vpop.f32.mrf.mxu0
        %v4925 = vadd.f32 %v3720, %v4924
        %v4926 = vpop.f32.mrf.mxu0
        %v4927 = vadd.f32 %v3720, %v4926
        %4928 = vmatmul.bf16.gmra.mxu0 %v4224
        %v4929 = vpop.f32.mrf.mxu0
        %v4930 = vadd.f32 %v3720, %v4929
        %v4931 = vpop.f32.mrf.mxu0
        %v4932 = vadd.f32 %v3720, %v4931
        %4933 = vmatmul.bf16.gmra.mxu0 %v4233
        %v4934 = vpop.f32.mrf.mxu0
        %v4935 = vadd.f32 %v3720, %v4934
        %v4936 = vpop.f32.mrf.mxu0
        %v4937 = vadd.f32 %v3720, %v4936
        %4938 = vmatmul.bf16.gmra.mxu0 %v4242
        %v4939 = vpop.f32.mrf.mxu0
        %v4940 = vadd.f32 %v3720, %v4939
        %v4941 = vpop.f32.mrf.mxu0
        %v4942 = vadd.f32 %v3720, %v4941
        %4943 = vmatmul.bf16.gmra.mxu0 %v4251
        %v4944 = vpop.f32.mrf.mxu0
        %v4945 = vadd.f32 %v3720, %v4944
        %v4946 = vpop.f32.mrf.mxu0
        %v4947 = vadd.f32 %v3720, %v4946
        %4948 = vmatmul.bf16.gmra.mxu0 %v4260
        %v4949 = vpop.f32.mrf.mxu0
        %v4950 = vadd.f32 %v3720, %v4949
        %v4951 = vpop.f32.mrf.mxu0
        %v4952 = vadd.f32 %v3720, %v4951
        %4953 = vmatmul.bf16.gmra.mxu0 %v4269
        %v4954 = vpop.f32.mrf.mxu0
        %v4955 = vadd.f32 %v3720, %v4954
        %v4956 = vpop.f32.mrf.mxu0
        %v4957 = vadd.f32 %v3720, %v4956
        %4958 = vmatmul.bf16.gmra.mxu0 %v4278
        %v4959 = vpop.f32.mrf.mxu0
        %v4960 = vadd.f32 %v3720, %v4959
        %v4961 = vpop.f32.mrf.mxu0
        %v4962 = vadd.f32 %v3720, %v4961
        %4963 = vmatmul.bf16.gmra.mxu0 %v4287
        %v4964 = vpop.f32.mrf.mxu0
        %v4965 = vadd.f32 %v3720, %v4964
        %v4966 = vpop.f32.mrf.mxu0
        %v4967 = vadd.f32 %v3720, %v4966
        %4968 = vmatmul.bf16.gmra.mxu0 %v4296
        %v4969 = vpop.f32.mrf.mxu0
        %v4970 = vadd.f32 %v3720, %v4969
        %v4971 = vpop.f32.mrf.mxu0
        %v4972 = vadd.f32 %v3720, %v4971
        %4973 = vmatmul.bf16.gmra.mxu0 %v4305
        %v4974 = vpop.f32.mrf.mxu0
        %v4975 = vadd.f32 %v3720, %v4974
        %v4976 = vpop.f32.mrf.mxu0
        %v4977 = vadd.f32 %v3720, %v4976
        %4978 = vdwg.mxu0
        %4979 = vmatpush.bf16.msra.mxu0 %v4761
        %4980 = vmatpush.bf16.msra.mxu0 %v4760
        %4981 = vmatpush.bf16.msra.mxu0 %v4759
        %4982 = vmatpush.bf16.msra.mxu0 %v4758
        %4983 = vmatpush.bf16.msra.mxu0 %v4757
        %4984 = vmatpush.bf16.msra.mxu0 %v4756
        %4985 = vmatpush.bf16.msra.mxu0 %v4755
        %4986 = vmatpush.bf16.msra.mxu0 %v4754
        %4987 = vmatmul.bf16.gmra.mxu0 %v4171
        %v4988 = vpop.f32.mrf.mxu0
        %v4989 = vadd.f32 %v4900, %v4988
        %v4990 = vpop.f32.mrf.mxu0
        %v4991 = vadd.f32 %v4902, %v4990
        %4992 = vmatmul.bf16.gmra.mxu0 %v4180
        %v4993 = vpop.f32.mrf.mxu0
        %v4994 = vadd.f32 %v4905, %v4993
        %v4995 = vpop.f32.mrf.mxu0
        %v4996 = vadd.f32 %v4907, %v4995
        %4997 = vmatmul.bf16.gmra.mxu0 %v4189
        %v4998 = vpop.f32.mrf.mxu0
        %v4999 = vadd.f32 %v4910, %v4998
        %v5000 = vpop.f32.mrf.mxu0
        %v5001 = vadd.f32 %v4912, %v5000
        %5002 = vmatmul.bf16.gmra.mxu0 %v4198
        %v5003 = vpop.f32.mrf.mxu0
        %v5004 = vadd.f32 %v4915, %v5003
        %v5005 = vpop.f32.mrf.mxu0
        %v5006 = vadd.f32 %v4917, %v5005
        %5007 = vmatmul.bf16.gmra.mxu0 %v4207
        %v5008 = vpop.f32.mrf.mxu0
        %v5009 = vadd.f32 %v4920, %v5008
        %v5010 = vpop.f32.mrf.mxu0
        %v5011 = vadd.f32 %v4922, %v5010
        %5012 = vmatmul.bf16.gmra.mxu0 %v4216
        %v5013 = vpop.f32.mrf.mxu0
        %v5014 = vadd.f32 %v4925, %v5013
        %v5015 = vpop.f32.mrf.mxu0
        %v5016 = vadd.f32 %v4927, %v5015
        %5017 = vmatmul.bf16.gmra.mxu0 %v4225
        %v5018 = vpop.f32.mrf.mxu0
        %v5019 = vadd.f32 %v4930, %v5018
        %v5020 = vpop.f32.mrf.mxu0
        %v5021 = vadd.f32 %v4932, %v5020
        %5022 = vmatmul.bf16.gmra.mxu0 %v4234
        %v5023 = vpop.f32.mrf.mxu0
        %v5024 = vadd.f32 %v4935, %v5023
        %v5025 = vpop.f32.mrf.mxu0
        %v5026 = vadd.f32 %v4937, %v5025
        %5027 = vmatmul.bf16.gmra.mxu0 %v4243
        %v5028 = vpop.f32.mrf.mxu0
        %v5029 = vadd.f32 %v4940, %v5028
        %v5030 = vpop.f32.mrf.mxu0
        %v5031 = vadd.f32 %v4942, %v5030
        %5032 = vmatmul.bf16.gmra.mxu0 %v4252
        %v5033 = vpop.f32.mrf.mxu0
        %v5034 = vadd.f32 %v4945, %v5033
        %v5035 = vpop.f32.mrf.mxu0
        %v5036 = vadd.f32 %v4947, %v5035
        %5037 = vmatmul.bf16.gmra.mxu0 %v4261
        %v5038 = vpop.f32.mrf.mxu0
        %v5039 = vadd.f32 %v4950, %v5038
        %v5040 = vpop.f32.mrf.mxu0
        %v5041 = vadd.f32 %v4952, %v5040
        %5042 = vmatmul.bf16.gmra.mxu0 %v4270
        %v5043 = vpop.f32.mrf.mxu0
        %v5044 = vadd.f32 %v4955, %v5043
        %v5045 = vpop.f32.mrf.mxu0
        %v5046 = vadd.f32 %v4957, %v5045
        %5047 = vmatmul.bf16.gmra.mxu0 %v4279
        %v5048 = vpop.f32.mrf.mxu0
        %v5049 = vadd.f32 %v4960, %v5048
        %v5050 = vpop.f32.mrf.mxu0
        %v5051 = vadd.f32 %v4962, %v5050
        %5052 = vmatmul.bf16.gmra.mxu0 %v4288
        %v5053 = vpop.f32.mrf.mxu0
        %v5054 = vadd.f32 %v4965, %v5053
        %v5055 = vpop.f32.mrf.mxu0
        %v5056 = vadd.f32 %v4967, %v5055
        %5057 = vmatmul.bf16.gmra.mxu0 %v4297
        %v5058 = vpop.f32.mrf.mxu0
        %v5059 = vadd.f32 %v4970, %v5058
        %v5060 = vpop.f32.mrf.mxu0
        %v5061 = vadd.f32 %v4972, %v5060
        %5062 = vmatmul.bf16.gmra.mxu0 %v4306
        %v5063 = vpop.f32.mrf.mxu0
        %v5064 = vadd.f32 %v4975, %v5063
        %v5065 = vpop.f32.mrf.mxu0
        %v5066 = vadd.f32 %v4977, %v5065
        %5067 = vdwg.mxu0
        %5068 = vmatpush.bf16.msra.mxu0 %v4769
        %5069 = vmatpush.bf16.msra.mxu0 %v4768
        %5070 = vmatpush.bf16.msra.mxu0 %v4767
        %5071 = vmatpush.bf16.msra.mxu0 %v4766
        %5072 = vmatpush.bf16.msra.mxu0 %v4765
        %5073 = vmatpush.bf16.msra.mxu0 %v4764
        %5074 = vmatpush.bf16.msra.mxu0 %v4763
        %5075 = vmatpush.bf16.msra.mxu0 %v4762
        %5076 = vmatmul.bf16.gmra.mxu0 %v4172
        %v5077 = vpop.f32.mrf.mxu0
        %v5078 = vadd.f32 %v4989, %v5077
        %v5079 = vpop.f32.mrf.mxu0
        %v5080 = vadd.f32 %v4991, %v5079
        %5081 = vmatmul.bf16.gmra.mxu0 %v4181
        %v5082 = vpop.f32.mrf.mxu0
        %v5083 = vadd.f32 %v4994, %v5082
        %v5084 = vpop.f32.mrf.mxu0
        %v5085 = vadd.f32 %v4996, %v5084
        %5086 = vmatmul.bf16.gmra.mxu0 %v4190
        %v5087 = vpop.f32.mrf.mxu0
        %v5088 = vadd.f32 %v4999, %v5087
        %v5089 = vpop.f32.mrf.mxu0
        %v5090 = vadd.f32 %v5001, %v5089
        %5091 = vmatmul.bf16.gmra.mxu0 %v4199
        %v5092 = vpop.f32.mrf.mxu0
        %v5093 = vadd.f32 %v5004, %v5092
        %v5094 = vpop.f32.mrf.mxu0
        %v5095 = vadd.f32 %v5006, %v5094
        %5096 = vmatmul.bf16.gmra.mxu0 %v4208
        %v5097 = vpop.f32.mrf.mxu0
        %v5098 = vadd.f32 %v5009, %v5097
        %v5099 = vpop.f32.mrf.mxu0
        %v5100 = vadd.f32 %v5011, %v5099
        %5101 = vmatmul.bf16.gmra.mxu0 %v4217
        %v5102 = vpop.f32.mrf.mxu0
        %v5103 = vadd.f32 %v5014, %v5102
        %v5104 = vpop.f32.mrf.mxu0
        %v5105 = vadd.f32 %v5016, %v5104
        %5106 = vmatmul.bf16.gmra.mxu0 %v4226
        %v5107 = vpop.f32.mrf.mxu0
        %v5108 = vadd.f32 %v5019, %v5107
        %v5109 = vpop.f32.mrf.mxu0
        %v5110 = vadd.f32 %v5021, %v5109
        %5111 = vmatmul.bf16.gmra.mxu0 %v4235
        %v5112 = vpop.f32.mrf.mxu0
        %v5113 = vadd.f32 %v5024, %v5112
        %v5114 = vpop.f32.mrf.mxu0
        %v5115 = vadd.f32 %v5026, %v5114
        %5116 = vmatmul.bf16.gmra.mxu0 %v4244
        %v5117 = vpop.f32.mrf.mxu0
        %v5118 = vadd.f32 %v5029, %v5117
        %v5119 = vpop.f32.mrf.mxu0
        %v5120 = vadd.f32 %v5031, %v5119
        %5121 = vmatmul.bf16.gmra.mxu0 %v4253
        %v5122 = vpop.f32.mrf.mxu0
        %v5123 = vadd.f32 %v5034, %v5122
        %v5124 = vpop.f32.mrf.mxu0
        %v5125 = vadd.f32 %v5036, %v5124
        %5126 = vmatmul.bf16.gmra.mxu0 %v4262
        %v5127 = vpop.f32.mrf.mxu0
        %v5128 = vadd.f32 %v5039, %v5127
        %v5129 = vpop.f32.mrf.mxu0
        %v5130 = vadd.f32 %v5041, %v5129
        %5131 = vmatmul.bf16.gmra.mxu0 %v4271
        %v5132 = vpop.f32.mrf.mxu0
        %v5133 = vadd.f32 %v5044, %v5132
        %v5134 = vpop.f32.mrf.mxu0
        %v5135 = vadd.f32 %v5046, %v5134
        %5136 = vmatmul.bf16.gmra.mxu0 %v4280
        %v5137 = vpop.f32.mrf.mxu0
        %v5138 = vadd.f32 %v5049, %v5137
        %v5139 = vpop.f32.mrf.mxu0
        %v5140 = vadd.f32 %v5051, %v5139
        %5141 = vmatmul.bf16.gmra.mxu0 %v4289
        %v5142 = vpop.f32.mrf.mxu0
        %v5143 = vadd.f32 %v5054, %v5142
        %v5144 = vpop.f32.mrf.mxu0
        %v5145 = vadd.f32 %v5056, %v5144
        %5146 = vmatmul.bf16.gmra.mxu0 %v4298
        %v5147 = vpop.f32.mrf.mxu0
        %v5148 = vadd.f32 %v5059, %v5147
        %v5149 = vpop.f32.mrf.mxu0
        %v5150 = vadd.f32 %v5061, %v5149
        %5151 = vmatmul.bf16.gmra.mxu0 %v4307
        %v5152 = vpop.f32.mrf.mxu0
        %v5153 = vadd.f32 %v5064, %v5152
        %v5154 = vpop.f32.mrf.mxu0
        %v5155 = vadd.f32 %v5066, %v5154
        %5156 = vdwg.mxu0
        %5157 = vmatpush.bf16.msra.mxu0 %v4777
        %5158 = vmatpush.bf16.msra.mxu0 %v4776
        %5159 = vmatpush.bf16.msra.mxu0 %v4775
        %5160 = vmatpush.bf16.msra.mxu0 %v4774
        %5161 = vmatpush.bf16.msra.mxu0 %v4773
        %5162 = vmatpush.bf16.msra.mxu0 %v4772
        %5163 = vmatpush.bf16.msra.mxu0 %v4771
        %5164 = vmatpush.bf16.msra.mxu0 %v4770
        %5165 = vmatmul.bf16.gmra.mxu0 %v4173
        %v5166 = vpop.f32.mrf.mxu0
        %v5167 = vadd.f32 %v5078, %v5166
        %v5168 = vpop.f32.mrf.mxu0
        %v5169 = vadd.f32 %v5080, %v5168
        %5170 = vmatmul.bf16.gmra.mxu0 %v4182
        %v5171 = vpop.f32.mrf.mxu0
        %v5172 = vadd.f32 %v5083, %v5171
        %v5173 = vpop.f32.mrf.mxu0
        %v5174 = vadd.f32 %v5085, %v5173
        %5175 = vmatmul.bf16.gmra.mxu0 %v4191
        %v5176 = vpop.f32.mrf.mxu0
        %v5177 = vadd.f32 %v5088, %v5176
        %v5178 = vpop.f32.mrf.mxu0
        %v5179 = vadd.f32 %v5090, %v5178
        %5180 = vmatmul.bf16.gmra.mxu0 %v4200
        %v5181 = vpop.f32.mrf.mxu0
        %v5182 = vadd.f32 %v5093, %v5181
        %v5183 = vpop.f32.mrf.mxu0
        %v5184 = vadd.f32 %v5095, %v5183
        %5185 = vmatmul.bf16.gmra.mxu0 %v4209
        %v5186 = vpop.f32.mrf.mxu0
        %v5187 = vadd.f32 %v5098, %v5186
        %v5188 = vpop.f32.mrf.mxu0
        %v5189 = vadd.f32 %v5100, %v5188
        %5190 = vmatmul.bf16.gmra.mxu0 %v4218
        %v5191 = vpop.f32.mrf.mxu0
        %v5192 = vadd.f32 %v5103, %v5191
        %v5193 = vpop.f32.mrf.mxu0
        %v5194 = vadd.f32 %v5105, %v5193
        %5195 = vmatmul.bf16.gmra.mxu0 %v4227
        %v5196 = vpop.f32.mrf.mxu0
        %v5197 = vadd.f32 %v5108, %v5196
        %v5198 = vpop.f32.mrf.mxu0
        %v5199 = vadd.f32 %v5110, %v5198
        %5200 = vmatmul.bf16.gmra.mxu0 %v4236
        %v5201 = vpop.f32.mrf.mxu0
        %v5202 = vadd.f32 %v5113, %v5201
        %v5203 = vpop.f32.mrf.mxu0
        %v5204 = vadd.f32 %v5115, %v5203
        %5205 = vmatmul.bf16.gmra.mxu0 %v4245
        %v5206 = vpop.f32.mrf.mxu0
        %v5207 = vadd.f32 %v5118, %v5206
        %v5208 = vpop.f32.mrf.mxu0
        %v5209 = vadd.f32 %v5120, %v5208
        %5210 = vmatmul.bf16.gmra.mxu0 %v4254
        %v5211 = vpop.f32.mrf.mxu0
        %v5212 = vadd.f32 %v5123, %v5211
        %v5213 = vpop.f32.mrf.mxu0
        %v5214 = vadd.f32 %v5125, %v5213
        %5215 = vmatmul.bf16.gmra.mxu0 %v4263
        %v5216 = vpop.f32.mrf.mxu0
        %v5217 = vadd.f32 %v5128, %v5216
        %v5218 = vpop.f32.mrf.mxu0
        %v5219 = vadd.f32 %v5130, %v5218
        %5220 = vmatmul.bf16.gmra.mxu0 %v4272
        %v5221 = vpop.f32.mrf.mxu0
        %v5222 = vadd.f32 %v5133, %v5221
        %v5223 = vpop.f32.mrf.mxu0
        %v5224 = vadd.f32 %v5135, %v5223
        %5225 = vmatmul.bf16.gmra.mxu0 %v4281
        %v5226 = vpop.f32.mrf.mxu0
        %v5227 = vadd.f32 %v5138, %v5226
        %v5228 = vpop.f32.mrf.mxu0
        %v5229 = vadd.f32 %v5140, %v5228
        %5230 = vmatmul.bf16.gmra.mxu0 %v4290
        %v5231 = vpop.f32.mrf.mxu0
        %v5232 = vadd.f32 %v5143, %v5231
        %v5233 = vpop.f32.mrf.mxu0
        %v5234 = vadd.f32 %v5145, %v5233
        %5235 = vmatmul.bf16.gmra.mxu0 %v4299
        %v5236 = vpop.f32.mrf.mxu0
        %v5237 = vadd.f32 %v5148, %v5236
        %v5238 = vpop.f32.mrf.mxu0
        %v5239 = vadd.f32 %v5150, %v5238
        %5240 = vmatmul.bf16.gmra.mxu0 %v4308
        %v5241 = vpop.f32.mrf.mxu0
        %v5242 = vadd.f32 %v5153, %v5241
        %v5243 = vpop.f32.mrf.mxu0
        %v5244 = vadd.f32 %v5155, %v5243
        %5245 = vdwg.mxu0
        %5246 = vmatpush.bf16.msra.mxu0 %v4785
        %5247 = vmatpush.bf16.msra.mxu0 %v4784
        %5248 = vmatpush.bf16.msra.mxu0 %v4783
        %5249 = vmatpush.bf16.msra.mxu0 %v4782
        %5250 = vmatpush.bf16.msra.mxu0 %v4781
        %5251 = vmatpush.bf16.msra.mxu0 %v4780
        %5252 = vmatpush.bf16.msra.mxu0 %v4779
        %5253 = vmatpush.bf16.msra.mxu0 %v4778
        %5254 = vmatmul.bf16.gmra.mxu0 %v4174
        %v5255 = vpop.f32.mrf.mxu0
        %v5256 = vadd.f32 %v5167, %v5255
        %v5257 = vpop.f32.mrf.mxu0
        %v5258 = vadd.f32 %v5169, %v5257
        %5259 = vmatmul.bf16.gmra.mxu0 %v4183
        %v5260 = vpop.f32.mrf.mxu0
        %v5261 = vadd.f32 %v5172, %v5260
        %v5262 = vpop.f32.mrf.mxu0
        %v5263 = vadd.f32 %v5174, %v5262
        %5264 = vmatmul.bf16.gmra.mxu0 %v4192
        %v5265 = vpop.f32.mrf.mxu0
        %v5266 = vadd.f32 %v5177, %v5265
        %v5267 = vpop.f32.mrf.mxu0
        %v5268 = vadd.f32 %v5179, %v5267
        %5269 = vmatmul.bf16.gmra.mxu0 %v4201
        %v5270 = vpop.f32.mrf.mxu0
        %v5271 = vadd.f32 %v5182, %v5270
        %v5272 = vpop.f32.mrf.mxu0
        %v5273 = vadd.f32 %v5184, %v5272
        %5274 = vmatmul.bf16.gmra.mxu0 %v4210
        %v5275 = vpop.f32.mrf.mxu0
        %v5276 = vadd.f32 %v5187, %v5275
        %v5277 = vpop.f32.mrf.mxu0
        %v5278 = vadd.f32 %v5189, %v5277
        %5279 = vmatmul.bf16.gmra.mxu0 %v4219
        %v5280 = vpop.f32.mrf.mxu0
        %v5281 = vadd.f32 %v5192, %v5280
        %v5282 = vpop.f32.mrf.mxu0
        %v5283 = vadd.f32 %v5194, %v5282
        %5284 = vmatmul.bf16.gmra.mxu0 %v4228
        %v5285 = vpop.f32.mrf.mxu0
        %v5286 = vadd.f32 %v5197, %v5285
        %v5287 = vpop.f32.mrf.mxu0
        %v5288 = vadd.f32 %v5199, %v5287
        %5289 = vmatmul.bf16.gmra.mxu0 %v4237
        %v5290 = vpop.f32.mrf.mxu0
        %v5291 = vadd.f32 %v5202, %v5290
        %v5292 = vpop.f32.mrf.mxu0
        %v5293 = vadd.f32 %v5204, %v5292
        %5294 = vmatmul.bf16.gmra.mxu0 %v4246
        %v5295 = vpop.f32.mrf.mxu0
        %v5296 = vadd.f32 %v5207, %v5295
        %v5297 = vpop.f32.mrf.mxu0
        %v5298 = vadd.f32 %v5209, %v5297
        %5299 = vmatmul.bf16.gmra.mxu0 %v4255
        %v5300 = vpop.f32.mrf.mxu0
        %v5301 = vadd.f32 %v5212, %v5300
        %v5302 = vpop.f32.mrf.mxu0
        %v5303 = vadd.f32 %v5214, %v5302
        %5304 = vmatmul.bf16.gmra.mxu0 %v4264
        %v5305 = vpop.f32.mrf.mxu0
        %v5306 = vadd.f32 %v5217, %v5305
        %v5307 = vpop.f32.mrf.mxu0
        %v5308 = vadd.f32 %v5219, %v5307
        %5309 = vmatmul.bf16.gmra.mxu0 %v4273
        %v5310 = vpop.f32.mrf.mxu0
        %v5311 = vadd.f32 %v5222, %v5310
        %v5312 = vpop.f32.mrf.mxu0
        %v5313 = vadd.f32 %v5224, %v5312
        %5314 = vmatmul.bf16.gmra.mxu0 %v4282
        %v5315 = vpop.f32.mrf.mxu0
        %v5316 = vadd.f32 %v5227, %v5315
        %v5317 = vpop.f32.mrf.mxu0
        %v5318 = vadd.f32 %v5229, %v5317
        %5319 = vmatmul.bf16.gmra.mxu0 %v4291
        %v5320 = vpop.f32.mrf.mxu0
        %v5321 = vadd.f32 %v5232, %v5320
        %v5322 = vpop.f32.mrf.mxu0
        %v5323 = vadd.f32 %v5234, %v5322
        %5324 = vmatmul.bf16.gmra.mxu0 %v4300
        %v5325 = vpop.f32.mrf.mxu0
        %v5326 = vadd.f32 %v5237, %v5325
        %v5327 = vpop.f32.mrf.mxu0
        %v5328 = vadd.f32 %v5239, %v5327
        %5329 = vmatmul.bf16.gmra.mxu0 %v4309
        %v5330 = vpop.f32.mrf.mxu0
        %v5331 = vadd.f32 %v5242, %v5330
        %v5332 = vpop.f32.mrf.mxu0
        %v5333 = vadd.f32 %v5244, %v5332
        %5334 = vdwg.mxu0
        %5335 = vmatpush.bf16.msra.mxu0 %v4793
        %5336 = vmatpush.bf16.msra.mxu0 %v4792
        %5337 = vmatpush.bf16.msra.mxu0 %v4791
        %5338 = vmatpush.bf16.msra.mxu0 %v4790
        %5339 = vmatpush.bf16.msra.mxu0 %v4789
        %5340 = vmatpush.bf16.msra.mxu0 %v4788
        %5341 = vmatpush.bf16.msra.mxu0 %v4787
        %5342 = vmatpush.bf16.msra.mxu0 %v4786
        %5343 = vmatmul.bf16.gmra.mxu0 %v4175
        %v5344 = vpop.f32.mrf.mxu0
        %v5345 = vadd.f32 %v5256, %v5344
        %v5346 = vpop.f32.mrf.mxu0
        %v5347 = vadd.f32 %v5258, %v5346
        %5348 = vmatmul.bf16.gmra.mxu0 %v4184
        %v5349 = vpop.f32.mrf.mxu0
        %v5350 = vadd.f32 %v5261, %v5349
        %v5351 = vpop.f32.mrf.mxu0
        %v5352 = vadd.f32 %v5263, %v5351
        %5353 = vmatmul.bf16.gmra.mxu0 %v4193
        %v5354 = vpop.f32.mrf.mxu0
        %v5355 = vadd.f32 %v5266, %v5354
        %v5356 = vpop.f32.mrf.mxu0
        %v5357 = vadd.f32 %v5268, %v5356
        %5358 = vmatmul.bf16.gmra.mxu0 %v4202
        %v5359 = vpop.f32.mrf.mxu0
        %v5360 = vadd.f32 %v5271, %v5359
        %v5361 = vpop.f32.mrf.mxu0
        %v5362 = vadd.f32 %v5273, %v5361
        %5363 = vmatmul.bf16.gmra.mxu0 %v4211
        %v5364 = vpop.f32.mrf.mxu0
        %v5365 = vadd.f32 %v5276, %v5364
        %v5366 = vpop.f32.mrf.mxu0
        %v5367 = vadd.f32 %v5278, %v5366
        %5368 = vmatmul.bf16.gmra.mxu0 %v4220
        %v5369 = vpop.f32.mrf.mxu0
        %v5370 = vadd.f32 %v5281, %v5369
        %v5371 = vpop.f32.mrf.mxu0
        %v5372 = vadd.f32 %v5283, %v5371
        %5373 = vmatmul.bf16.gmra.mxu0 %v4229
        %v5374 = vpop.f32.mrf.mxu0
        %v5375 = vadd.f32 %v5286, %v5374
        %v5376 = vpop.f32.mrf.mxu0
        %v5377 = vadd.f32 %v5288, %v5376
        %5378 = vmatmul.bf16.gmra.mxu0 %v4238
        %v5379 = vpop.f32.mrf.mxu0
        %v5380 = vadd.f32 %v5291, %v5379
        %v5381 = vpop.f32.mrf.mxu0
        %v5382 = vadd.f32 %v5293, %v5381
        %5383 = vmatmul.bf16.gmra.mxu0 %v4247
        %v5384 = vpop.f32.mrf.mxu0
        %v5385 = vadd.f32 %v5296, %v5384
        %v5386 = vpop.f32.mrf.mxu0
        %v5387 = vadd.f32 %v5298, %v5386
        %5388 = vmatmul.bf16.gmra.mxu0 %v4256
        %v5389 = vpop.f32.mrf.mxu0
        %v5390 = vadd.f32 %v5301, %v5389
        %v5391 = vpop.f32.mrf.mxu0
        %v5392 = vadd.f32 %v5303, %v5391
        %5393 = vmatmul.bf16.gmra.mxu0 %v4265
        %v5394 = vpop.f32.mrf.mxu0
        %v5395 = vadd.f32 %v5306, %v5394
        %v5396 = vpop.f32.mrf.mxu0
        %v5397 = vadd.f32 %v5308, %v5396
        %5398 = vmatmul.bf16.gmra.mxu0 %v4274
        %v5399 = vpop.f32.mrf.mxu0
        %v5400 = vadd.f32 %v5311, %v5399
        %v5401 = vpop.f32.mrf.mxu0
        %v5402 = vadd.f32 %v5313, %v5401
        %5403 = vmatmul.bf16.gmra.mxu0 %v4283
        %v5404 = vpop.f32.mrf.mxu0
        %v5405 = vadd.f32 %v5316, %v5404
        %v5406 = vpop.f32.mrf.mxu0
        %v5407 = vadd.f32 %v5318, %v5406
        %5408 = vmatmul.bf16.gmra.mxu0 %v4292
        %v5409 = vpop.f32.mrf.mxu0
        %v5410 = vadd.f32 %v5321, %v5409
        %v5411 = vpop.f32.mrf.mxu0
        %v5412 = vadd.f32 %v5323, %v5411
        %5413 = vmatmul.bf16.gmra.mxu0 %v4301
        %v5414 = vpop.f32.mrf.mxu0
        %v5415 = vadd.f32 %v5326, %v5414
        %v5416 = vpop.f32.mrf.mxu0
        %v5417 = vadd.f32 %v5328, %v5416
        %5418 = vmatmul.bf16.gmra.mxu0 %v4310
        %v5419 = vpop.f32.mrf.mxu0
        %v5420 = vadd.f32 %v5331, %v5419
        %v5421 = vpop.f32.mrf.mxu0
        %v5422 = vadd.f32 %v5333, %v5421
        %5423 = vdwg.mxu0
        %5424 = vmatpush.bf16.msra.mxu0 %v4801
        %5425 = vmatpush.bf16.msra.mxu0 %v4800
        %5426 = vmatpush.bf16.msra.mxu0 %v4799
        %5427 = vmatpush.bf16.msra.mxu0 %v4798
        %5428 = vmatpush.bf16.msra.mxu0 %v4797
        %5429 = vmatpush.bf16.msra.mxu0 %v4796
        %5430 = vmatpush.bf16.msra.mxu0 %v4795
        %5431 = vmatpush.bf16.msra.mxu0 %v4794
        %5432 = vmatmul.bf16.gmra.mxu0 %v4176
        %v5433 = vpop.f32.mrf.mxu0
        %v5434 = vadd.f32 %v5345, %v5433
        %v5435 = vpop.f32.mrf.mxu0
        %v5436 = vadd.f32 %v5347, %v5435
        %5437 = vmatmul.bf16.gmra.mxu0 %v4185
        %v5438 = vpop.f32.mrf.mxu0
        %v5439 = vadd.f32 %v5350, %v5438
        %v5440 = vpop.f32.mrf.mxu0
        %v5441 = vadd.f32 %v5352, %v5440
        %5442 = vmatmul.bf16.gmra.mxu0 %v4194
        %v5443 = vpop.f32.mrf.mxu0
        %v5444 = vadd.f32 %v5355, %v5443
        %v5445 = vpop.f32.mrf.mxu0
        %v5446 = vadd.f32 %v5357, %v5445
        %5447 = vmatmul.bf16.gmra.mxu0 %v4203
        %v5448 = vpop.f32.mrf.mxu0
        %v5449 = vadd.f32 %v5360, %v5448
        %v5450 = vpop.f32.mrf.mxu0
        %v5451 = vadd.f32 %v5362, %v5450
        %5452 = vmatmul.bf16.gmra.mxu0 %v4212
        %v5453 = vpop.f32.mrf.mxu0
        %v5454 = vadd.f32 %v5365, %v5453
        %v5455 = vpop.f32.mrf.mxu0
        %v5456 = vadd.f32 %v5367, %v5455
        %5457 = vmatmul.bf16.gmra.mxu0 %v4221
        %v5458 = vpop.f32.mrf.mxu0
        %v5459 = vadd.f32 %v5370, %v5458
        %v5460 = vpop.f32.mrf.mxu0
        %v5461 = vadd.f32 %v5372, %v5460
        %5462 = vmatmul.bf16.gmra.mxu0 %v4230
        %v5463 = vpop.f32.mrf.mxu0
        %v5464 = vadd.f32 %v5375, %v5463
        %v5465 = vpop.f32.mrf.mxu0
        %v5466 = vadd.f32 %v5377, %v5465
        %5467 = vmatmul.bf16.gmra.mxu0 %v4239
        %v5468 = vpop.f32.mrf.mxu0
        %v5469 = vadd.f32 %v5380, %v5468
        %v5470 = vpop.f32.mrf.mxu0
        %v5471 = vadd.f32 %v5382, %v5470
        %5472 = vmatmul.bf16.gmra.mxu0 %v4248
        %v5473 = vpop.f32.mrf.mxu0
        %v5474 = vadd.f32 %v5385, %v5473
        %v5475 = vpop.f32.mrf.mxu0
        %v5476 = vadd.f32 %v5387, %v5475
        %5477 = vmatmul.bf16.gmra.mxu0 %v4257
        %v5478 = vpop.f32.mrf.mxu0
        %v5479 = vadd.f32 %v5390, %v5478
        %v5480 = vpop.f32.mrf.mxu0
        %v5481 = vadd.f32 %v5392, %v5480
        %5482 = vmatmul.bf16.gmra.mxu0 %v4266
        %v5483 = vpop.f32.mrf.mxu0
        %v5484 = vadd.f32 %v5395, %v5483
        %v5485 = vpop.f32.mrf.mxu0
        %v5486 = vadd.f32 %v5397, %v5485
        %5487 = vmatmul.bf16.gmra.mxu0 %v4275
        %v5488 = vpop.f32.mrf.mxu0
        %v5489 = vadd.f32 %v5400, %v5488
        %v5490 = vpop.f32.mrf.mxu0
        %v5491 = vadd.f32 %v5402, %v5490
        %5492 = vmatmul.bf16.gmra.mxu0 %v4284
        %v5493 = vpop.f32.mrf.mxu0
        %v5494 = vadd.f32 %v5405, %v5493
        %v5495 = vpop.f32.mrf.mxu0
        %v5496 = vadd.f32 %v5407, %v5495
        %5497 = vmatmul.bf16.gmra.mxu0 %v4293
        %v5498 = vpop.f32.mrf.mxu0
        %v5499 = vadd.f32 %v5410, %v5498
        %v5500 = vpop.f32.mrf.mxu0
        %v5501 = vadd.f32 %v5412, %v5500
        %5502 = vmatmul.bf16.gmra.mxu0 %v4302
        %v5503 = vpop.f32.mrf.mxu0
        %v5504 = vadd.f32 %v5415, %v5503
        %v5505 = vpop.f32.mrf.mxu0
        %v5506 = vadd.f32 %v5417, %v5505
        %5507 = vmatmul.bf16.gmra.mxu0 %v4311
        %v5508 = vpop.f32.mrf.mxu0
        %v5509 = vadd.f32 %v5420, %v5508
        %v5510 = vpop.f32.mrf.mxu0
        %v5511 = vadd.f32 %v5422, %v5510
        %5512 = vdwg.mxu0
        %5513 = vmatpush.bf16.msra.mxu0 %v4809
        %5514 = vmatpush.bf16.msra.mxu0 %v4808
        %5515 = vmatpush.bf16.msra.mxu0 %v4807
        %5516 = vmatpush.bf16.msra.mxu0 %v4806
        %5517 = vmatpush.bf16.msra.mxu0 %v4805
        %5518 = vmatpush.bf16.msra.mxu0 %v4804
        %5519 = vmatpush.bf16.msra.mxu0 %v4803
        %5520 = vmatpush.bf16.msra.mxu0 %v4802
        %5521 = vmatmul.bf16.gmra.mxu0 %v4177
        %v5522 = vpop.f32.mrf.mxu0
        %v5523 = vadd.f32 %v5434, %v5522
        %v5524 = vpop.f32.mrf.mxu0
        %v5525 = vadd.f32 %v5436, %v5524
        %5526 = vmatmul.bf16.gmra.mxu0 %v4186
        %v5527 = vpop.f32.mrf.mxu0
        %v5528 = vadd.f32 %v5439, %v5527
        %v5529 = vpop.f32.mrf.mxu0
        %v5530 = vadd.f32 %v5441, %v5529
        %5531 = vmatmul.bf16.gmra.mxu0 %v4195
        %v5532 = vpop.f32.mrf.mxu0
        %v5533 = vadd.f32 %v5444, %v5532
        %v5534 = vpop.f32.mrf.mxu0
        %v5535 = vadd.f32 %v5446, %v5534
        %5536 = vmatmul.bf16.gmra.mxu0 %v4204
        %v5537 = vpop.f32.mrf.mxu0
        %v5538 = vadd.f32 %v5449, %v5537
        %v5539 = vpop.f32.mrf.mxu0
        %v5540 = vadd.f32 %v5451, %v5539
        %5541 = vmatmul.bf16.gmra.mxu0 %v4213
        %v5542 = vpop.f32.mrf.mxu0
        %v5543 = vadd.f32 %v5454, %v5542
        %v5544 = vpop.f32.mrf.mxu0
        %v5545 = vadd.f32 %v5456, %v5544
        %5546 = vmatmul.bf16.gmra.mxu0 %v4222
        %v5547 = vpop.f32.mrf.mxu0
        %v5548 = vadd.f32 %v5459, %v5547
        %v5549 = vpop.f32.mrf.mxu0
        %v5550 = vadd.f32 %v5461, %v5549
        %5551 = vmatmul.bf16.gmra.mxu0 %v4231
        %v5552 = vpop.f32.mrf.mxu0
        %v5553 = vadd.f32 %v5464, %v5552
        %v5554 = vpop.f32.mrf.mxu0
        %v5555 = vadd.f32 %v5466, %v5554
        %5556 = vmatmul.bf16.gmra.mxu0 %v4240
        %v5557 = vpop.f32.mrf.mxu0
        %v5558 = vadd.f32 %v5469, %v5557
        %v5559 = vpop.f32.mrf.mxu0
        %v5560 = vadd.f32 %v5471, %v5559
        %5561 = vmatmul.bf16.gmra.mxu0 %v4249
        %v5562 = vpop.f32.mrf.mxu0
        %v5563 = vadd.f32 %v5474, %v5562
        %v5564 = vpop.f32.mrf.mxu0
        %v5565 = vadd.f32 %v5476, %v5564
        %5566 = vmatmul.bf16.gmra.mxu0 %v4258
        %v5567 = vpop.f32.mrf.mxu0
        %v5568 = vadd.f32 %v5479, %v5567
        %v5569 = vpop.f32.mrf.mxu0
        %v5570 = vadd.f32 %v5481, %v5569
        %5571 = vmatmul.bf16.gmra.mxu0 %v4267
        %v5572 = vpop.f32.mrf.mxu0
        %v5573 = vadd.f32 %v5484, %v5572
        %v5574 = vpop.f32.mrf.mxu0
        %v5575 = vadd.f32 %v5486, %v5574
        %5576 = vmatmul.bf16.gmra.mxu0 %v4276
        %v5577 = vpop.f32.mrf.mxu0
        %v5578 = vadd.f32 %v5489, %v5577
        %v5579 = vpop.f32.mrf.mxu0
        %v5580 = vadd.f32 %v5491, %v5579
        %5581 = vmatmul.bf16.gmra.mxu0 %v4285
        %v5582 = vpop.f32.mrf.mxu0
        %v5583 = vadd.f32 %v5494, %v5582
        %v5584 = vpop.f32.mrf.mxu0
        %v5585 = vadd.f32 %v5496, %v5584
        %5586 = vmatmul.bf16.gmra.mxu0 %v4294
        %v5587 = vpop.f32.mrf.mxu0
        %v5588 = vadd.f32 %v5499, %v5587
        %v5589 = vpop.f32.mrf.mxu0
        %v5590 = vadd.f32 %v5501, %v5589
        %5591 = vmatmul.bf16.gmra.mxu0 %v4303
        %v5592 = vpop.f32.mrf.mxu0
        %v5593 = vadd.f32 %v5504, %v5592
        %v5594 = vpop.f32.mrf.mxu0
        %v5595 = vadd.f32 %v5506, %v5594
        %5596 = vmatmul.bf16.gmra.mxu0 %v4312
        %v5597 = vpop.f32.mrf.mxu0
        %v5598 = vadd.f32 %v5509, %v5597
        %v5599 = vpop.f32.mrf.mxu0
        %v5600 = vadd.f32 %v5511, %v5599
        %5601 = vdwg.mxu0
        %5602 = vmatpush.bf16.msra.mxu0 %v4817
        %5603 = vmatpush.bf16.msra.mxu0 %v4816
        %5604 = vmatpush.bf16.msra.mxu0 %v4815
        %5605 = vmatpush.bf16.msra.mxu0 %v4814
        %5606 = vmatpush.bf16.msra.mxu0 %v4813
        %5607 = vmatpush.bf16.msra.mxu0 %v4812
        %5608 = vmatpush.bf16.msra.mxu0 %v4811
        %5609 = vmatpush.bf16.msra.mxu0 %v4810
        %5610 = vmatmul.bf16.gmra.mxu0 %v4178
        %v5611 = vpop.f32.mrf.mxu0
        %v5612 = vadd.f32 %v5523, %v5611
        %v5613 = vpop.f32.mrf.mxu0
        %v5614 = vadd.f32 %v5525, %v5613
        %5615 = vmatmul.bf16.gmra.mxu0 %v4187
        %v5616 = vpop.f32.mrf.mxu0
        %v5617 = vadd.f32 %v5528, %v5616
        %v5618 = vpop.f32.mrf.mxu0
        %v5619 = vadd.f32 %v5530, %v5618
        %5620 = vmatmul.bf16.gmra.mxu0 %v4196
        %v5621 = vpop.f32.mrf.mxu0
        %v5622 = vadd.f32 %v5533, %v5621
        %v5623 = vpop.f32.mrf.mxu0
        %v5624 = vadd.f32 %v5535, %v5623
        %5625 = vmatmul.bf16.gmra.mxu0 %v4205
        %v5626 = vpop.f32.mrf.mxu0
        %v5627 = vadd.f32 %v5538, %v5626
        %v5628 = vpop.f32.mrf.mxu0
        %v5629 = vadd.f32 %v5540, %v5628
        %5630 = vmatmul.bf16.gmra.mxu0 %v4214
        %v5631 = vpop.f32.mrf.mxu0
        %v5632 = vadd.f32 %v5543, %v5631
        %v5633 = vpop.f32.mrf.mxu0
        %v5634 = vadd.f32 %v5545, %v5633
        %5635 = vmatmul.bf16.gmra.mxu0 %v4223
        %v5636 = vpop.f32.mrf.mxu0
        %v5637 = vadd.f32 %v5548, %v5636
        %v5638 = vpop.f32.mrf.mxu0
        %v5639 = vadd.f32 %v5550, %v5638
        %5640 = vmatmul.bf16.gmra.mxu0 %v4232
        %v5641 = vpop.f32.mrf.mxu0
        %v5642 = vadd.f32 %v5553, %v5641
        %v5643 = vpop.f32.mrf.mxu0
        %v5644 = vadd.f32 %v5555, %v5643
        %5645 = vmatmul.bf16.gmra.mxu0 %v4241
        %v5646 = vpop.f32.mrf.mxu0
        %v5647 = vadd.f32 %v5558, %v5646
        %v5648 = vpop.f32.mrf.mxu0
        %v5649 = vadd.f32 %v5560, %v5648
        %5650 = vmatmul.bf16.gmra.mxu0 %v4250
        %v5651 = vpop.f32.mrf.mxu0
        %v5652 = vadd.f32 %v5563, %v5651
        %v5653 = vpop.f32.mrf.mxu0
        %v5654 = vadd.f32 %v5565, %v5653
        %5655 = vmatmul.bf16.gmra.mxu0 %v4259
        %v5656 = vpop.f32.mrf.mxu0
        %v5657 = vadd.f32 %v5568, %v5656
        %v5658 = vpop.f32.mrf.mxu0
        %v5659 = vadd.f32 %v5570, %v5658
        %5660 = vmatmul.bf16.gmra.mxu0 %v4268
        %v5661 = vpop.f32.mrf.mxu0
        %v5662 = vadd.f32 %v5573, %v5661
        %v5663 = vpop.f32.mrf.mxu0
        %v5664 = vadd.f32 %v5575, %v5663
        %5665 = vmatmul.bf16.gmra.mxu0 %v4277
        %v5666 = vpop.f32.mrf.mxu0
        %v5667 = vadd.f32 %v5578, %v5666
        %v5668 = vpop.f32.mrf.mxu0
        %v5669 = vadd.f32 %v5580, %v5668
        %5670 = vmatmul.bf16.gmra.mxu0 %v4286
        %v5671 = vpop.f32.mrf.mxu0
        %v5672 = vadd.f32 %v5583, %v5671
        %v5673 = vpop.f32.mrf.mxu0
        %v5674 = vadd.f32 %v5585, %v5673
        %5675 = vmatmul.bf16.gmra.mxu0 %v4295
        %v5676 = vpop.f32.mrf.mxu0
        %v5677 = vadd.f32 %v5588, %v5676
        %v5678 = vpop.f32.mrf.mxu0
        %v5679 = vadd.f32 %v5590, %v5678
        %5680 = vmatmul.bf16.gmra.mxu0 %v4304
        %v5681 = vpop.f32.mrf.mxu0
        %v5682 = vadd.f32 %v5593, %v5681
        %v5683 = vpop.f32.mrf.mxu0
        %v5684 = vadd.f32 %v5595, %v5683
        %5685 = vmatmul.bf16.gmra.mxu0 %v4313
        %v5686 = vpop.f32.mrf.mxu0
        %v5687 = vadd.f32 %v5598, %v5686
        %v5688 = vpop.f32.mrf.mxu0
        %v5689 = vadd.f32 %v5600, %v5688
        %5690 = vdwg.mxu0
        %v5691 = vmax.f32 %v5612, 0.0
        %v5692 = vmax.f32 %v5614, 0.0
        %v5693 = vmax.f32 %v5617, 0.0
        %v5694 = vmax.f32 %v5619, 0.0
        %v5695 = vmax.f32 %v5622, 0.0
        %v5696 = vmax.f32 %v5624, 0.0
        %v5697 = vmax.f32 %v5627, 0.0
        %v5698 = vmax.f32 %v5629, 0.0
        %v5699 = vmax.f32 %v5632, 0.0
        %v5700 = vmax.f32 %v5634, 0.0
        %v5701 = vmax.f32 %v5637, 0.0
        %v5702 = vmax.f32 %v5639, 0.0
        %v5703 = vmax.f32 %v5642, 0.0
        %v5704 = vmax.f32 %v5644, 0.0
        %v5705 = vmax.f32 %v5647, 0.0
        %v5706 = vmax.f32 %v5649, 0.0
        %v5707 = vmax.f32 %v5652, 0.0
        %v5708 = vmax.f32 %v5654, 0.0
        %v5709 = vmax.f32 %v5657, 0.0
        %v5710 = vmax.f32 %v5659, 0.0
        %v5711 = vmax.f32 %v5662, 0.0
        %v5712 = vmax.f32 %v5664, 0.0
        %v5713 = vmax.f32 %v5667, 0.0
        %v5714 = vmax.f32 %v5669, 0.0
        %v5715 = vmax.f32 %v5672, 0.0
        %v5716 = vmax.f32 %v5674, 0.0
        %v5717 = vmax.f32 %v5677, 0.0
        %v5718 = vmax.f32 %v5679, 0.0
        %v5719 = vmax.f32 %v5682, 0.0
        %v5720 = vmax.f32 %v5684, 0.0
        %v5721 = vmax.f32 %v5687, 0.0
        %v5722 = vmax.f32 %v5689, 0.0
        %v5723 = vpack.c.bf16 %v5691, %v5691
        %v5724 = vpack.c.bf16 %v5692, %v5692
        %v5725 = vpack.c.bf16 %v5693, %v5693
        %v5726 = vpack.c.bf16 %v5694, %v5694
        %v5727 = vpack.c.bf16 %v5695, %v5695
        %v5728 = vpack.c.bf16 %v5696, %v5696
        %v5729 = vpack.c.bf16 %v5697, %v5697
        %v5730 = vpack.c.bf16 %v5698, %v5698
        %v5731 = vpack.c.bf16 %v5699, %v5699
        %v5732 = vpack.c.bf16 %v5700, %v5700
        %v5733 = vpack.c.bf16 %v5701, %v5701
        %v5734 = vpack.c.bf16 %v5702, %v5702
        %v5735 = vpack.c.bf16 %v5703, %v5703
        %v5736 = vpack.c.bf16 %v5704, %v5704
        %v5737 = vpack.c.bf16 %v5705, %v5705
        %v5738 = vpack.c.bf16 %v5706, %v5706
        %v5739 = vpack.c.bf16 %v5707, %v5707
        %v5740 = vpack.c.bf16 %v5708, %v5708
        %v5741 = vpack.c.bf16 %v5709, %v5709
        %v5742 = vpack.c.bf16 %v5710, %v5710
        %v5743 = vpack.c.bf16 %v5711, %v5711
        %v5744 = vpack.c.bf16 %v5712, %v5712
        %v5745 = vpack.c.bf16 %v5713, %v5713
        %v5746 = vpack.c.bf16 %v5714, %v5714
        %v5747 = vpack.c.bf16 %v5715, %v5715
        %v5748 = vpack.c.bf16 %v5716, %v5716
        %v5749 = vpack.c.bf16 %v5717, %v5717
        %v5750 = vpack.c.bf16 %v5718, %v5718
        %v5751 = vpack.c.bf16 %v5719, %v5719
        %v5752 = vpack.c.bf16 %v5720, %v5720
        %v5753 = vpack.c.bf16 %v5721, %v5721
        %v5754 = vpack.c.bf16 %v5722, %v5722
        %5755 = vst [vmem:[%s212] sm:$0xf] %v5723
        %5756 = vst [vmem:[%s212 + $0x4] sm:$0xf] %v5724
        %5757 = vst [vmem:[%s212 + $0x8] sm:$0xf] %v5725
        %5758 = vst [vmem:[%s212 + $0xc] sm:$0xf] %v5726
        %5759 = vst [vmem:[%s212 + $0x10] sm:$0xf] %v5727
        %5760 = vst [vmem:[%s212 + $0x14] sm:$0xf] %v5728
        %5761 = vst [vmem:[%s212 + $0x18] sm:$0xf] %v5729
        %5762 = vst [vmem:[%s212 + $0x1c] sm:$0xf] %v5730
        %5763 = vst [vmem:[%s212 + $0x20] sm:$0xf] %v5731
        %5764 = vst [vmem:[%s212 + $0x24] sm:$0xf] %v5732
        %5765 = vst [vmem:[%s212 + $0x28] sm:$0xf] %v5733
        %5766 = vst [vmem:[%s212 + $0x2c] sm:$0xf] %v5734
        %5767 = vst [vmem:[%s212 + $0x30] sm:$0xf] %v5735
        %5768 = vst [vmem:[%s212 + $0x34] sm:$0xf] %v5736
        %5769 = vst [vmem:[%s212 + $0x38] sm:$0xf] %v5737
        %5770 = vst [vmem:[%s212 + $0x3c] sm:$0xf] %v5738
        %5771 = vst [vmem:[%s212 + $0x40] sm:$0xf] %v5739
        %5772 = vst [vmem:[%s212 + $0x44] sm:$0xf] %v5740
        %5773 = vst [vmem:[%s212 + $0x48] sm:$0xf] %v5741
        %5774 = vst [vmem:[%s212 + $0x4c] sm:$0xf] %v5742
        %5775 = vst [vmem:[%s212 + $0x50] sm:$0xf] %v5743
        %5776 = vst [vmem:[%s212 + $0x54] sm:$0xf] %v5744
        %5777 = vst [vmem:[%s212 + $0x58] sm:$0xf] %v5745
        %5778 = vst [vmem:[%s212 + $0x5c] sm:$0xf] %v5746
        %5779 = vst [vmem:[%s212 + $0x60] sm:$0xf] %v5747
        %5780 = vst [vmem:[%s212 + $0x64] sm:$0xf] %v5748
        %5781 = vst [vmem:[%s212 + $0x68] sm:$0xf] %v5749
        %5782 = vst [vmem:[%s212 + $0x6c] sm:$0xf] %v5750
        %5783 = vst [vmem:[%s212 + $0x70] sm:$0xf] %v5751
        %5784 = vst [vmem:[%s212 + $0x74] sm:$0xf] %v5752
        %5785 = vst [vmem:[%s212 + $0x78] sm:$0xf] %v5753
        %5786 = vst [vmem:[%s212 + $0x7c] sm:$0xf] %v5754
        %s5787 = sand.u32 %s118, 1
        %s5788 = scalar_lea.sflag [#allocation6], %s5787
        %s5789 = sand.u32 %s118, 1
        %s5790 = smul.addr %s5789, 128
        %s5791 = scalar_lea.vmem [#allocation7], %s5790
        // Predicated region
        $region37: #{tpu_custom_call.1} parent=31 // pred_check
          %p5792 = pneg %p128
        $region38: #{tpu_custom_call.1} parent=31 // pred_check_branch
          %5794 = sbr.rel (%p5792) target = $region40
        $region39: #{tpu_custom_call.1} parent=31 // pred_region
          %5796 = vsyncadd %s5788, 0
          %s5797 = smul.addr %s22, 32
          %s5798 = sadd.s32 %s23, %s5797
          %s5799 = smul.addr %s5798, 4
          %s5800 = scalar_lea.hbm %s3, %s5799
          %s5801 = sshll.u32 %s5791, 4
          %s5802 = int_to_ptr.vmem [resolvable:$true] %s5801
          %s5803 = sshll.u32 %s5800, 4
          %s5804 = int_to_ptr.hbm [resolvable:$true] %s5803
          %5809 = dma.vmem_to_hbm [thread:$0]  %s5802, 2048, %s5804, %s5788, 64, 64, 4
        $region40: #{tpu_custom_call.1} parent=31 // pred_fallthru
          _
      $region32: #{tpu_custom_call.1} parent=5 // pred_fallthru
        _
      %p5810 = scmp.le.s32.totalorder 2, %s13
      // Predicated region
      $region41: #{tpu_custom_call.1} parent=5 // pred_check
        %p5811 = pneg %p5810
      $region42: #{tpu_custom_call.1} parent=5 // pred_check_branch
        %5813 = sbr.rel (%p5811) target = $region44
      $region43: #{tpu_custom_call.1} parent=5 // pred_region
        %s5814 = ssub.s32 %s13, 2
        // Predicated region
        $region45: #{tpu_custom_call.1} parent=43 // pred_check
          %p5815 = pneg %p134
        $region46: #{tpu_custom_call.1} parent=43 // pred_check_branch
          %5817 = sbr.rel (%p5815) target = $region48
        $region47: #{tpu_custom_call.1} parent=43 // pred_region
          %s5818 = sand.u32 %s119, 1
          %s5819 = scalar_lea.sflag [#allocation6], %s5818
          %s5820 = sand.u32 %s119, 1
          %s5821 = smul.addr %s5820, 128
          %s5822 = scalar_lea.vmem [#allocation7], %s5821
          %5824 = dma.done %s5819, 2048
        $region48: #{tpu_custom_call.1} parent=43 // pred_fallthru
          _
      $region44: #{tpu_custom_call.1} parent=5 // pred_fallthru
        _
    $region6: #{tpu_custom_call.1} parent=1 // loop_footer
      %s17 = sadd.s32 1, %s13
    $region7: #{tpu_custom_call.1} parent=1 // loop_footer_branch
      %12 = sbr.rel target = $region3
    $region8: #{tpu_custom_call.1} parent=1 // loop_exit
      _
    %5825 = vsyncpa [#allocation5], 1
    %s5826 = scalar_lea.sflag [#allocation5], 1
    %5827 = vsyncpa %s5826, 1
    %5828 = vsyncpa [#allocation6], 1
    %s5829 = scalar_lea.sflag [#allocation6], 1
    %5830 = vsyncpa %s5829, 1

</llo_original>
